<compile_context>
chip_gen: v6e
topology: v6e:2x2x1
jax: 0.10.0
libtpu: 0.0.40
codegen_flags: <defaults>
</compile_context>

<pallas_src>
import functools

import jax
import jax.numpy as jnp
import numpy as np
from jax.experimental import pallas as pl
from jax.experimental.pallas import tpu as pltpu

H = 10                      # hidden_size fixed to 10 in the PyTorch module
HP = 128                    # per-gate lane block (128-lane aligned)
GW = 4 * HP                 # packed gate width: lanes = [ i | f | o | g ]
GATE_ORDER = (0, 1, 3, 2)   # canonical gate storage order is (i, f, g, o)


def _row_pad(batch):
    """Rows per time block: 2*batch (fwd rows then bwd rows), padded up to a multiple of 8."""
    return max(8, ((2 * batch + 7) // 8) * 8)


# ----------------------------- Pallas kernel ---------------------------------
def lstm_kernel(x0_ref, w0_ref, b0_ref, whh0_ref,
                w1_ref, b1_ref, whh1_ref,
                fcw_ref, fcb_ref, fc2w_ref, fc2b_ref,
                out_ref, pre_ref, h0_ref, h0c_ref,
                *, seq_len, bp, batch):
    T, BP, B = seq_len, bp, batch

    def dot(a, b):
        # bf16 x bf16 MXU matmul with f32 accumulation
        return jnp.dot(a, b, preferred_element_type=jnp.float32)

    def fsigmoid(x):
        # EUP-only sigmoid (avoids the exact VPU divide of the default lowering)
        return 0.5 * jnp.tanh(0.5 * x) + 0.5

    # sublane (row) mask selecting the forward-direction rows of each time block
    row = jax.lax.broadcasted_iota(jnp.int32, (BP, HP), 0)
    is_fwd = row < B

    # ---- layer-0 input projection + bias: ONE MXU matmul over all (t, dir) rows ------
    # TODO(synk): at production embed dims, skip the block-diagonal zero padding of x0 and
    # do two direction-specific dots instead (halves projection FLOPs / input DMA).
    pre_ref[...] = dot(x0_ref[...], w0_ref[...]) + b0_ref[...]

    def run_layer(whh_ref, is_layer0):
        # Both directions stacked on sublanes.  h is kept block-diagonal along lanes
        # (fwd rows -> lanes 0:128, bwd rows -> lanes 128:256) so ONE matmul against the
        # block-diagonal recurrent weights serves both directions and all 4 gates.
        whh = whh_ref[...]                                  # loop-invariant bf16 RHS
        h_bd = jnp.zeros((BP, 2 * HP), jnp.float32)
        c = jnp.zeros((BP, HP), jnp.float32)
        pooled = None
        for s in range(T):
            pre = pre_ref[s * BP:(s + 1) * BP, :]           # aligned (8, GW) tile
            if s > 0:
                pre = pre + dot(h_bd.astype(jnp.bfloat16), whh)
            sact = fsigmoid(pre[:, 0:3 * HP])               # i | f | o  (one EUP pass)
            g = jnp.tanh(pre[:, 3 * HP:4 * HP])
            c = sact[:, HP:2 * HP] * c + sact[:, 0:HP] * g
            h = sact[:, 2 * HP:3 * HP] * jnp.tanh(c)        # (BP, 128); pad lanes/rows stay 0
            h_bd = jnp.concatenate(
                [jnp.where(is_fwd, h, 0.0), jnp.where(is_fwd, 0.0, h)], axis=-1)
            if is_layer0:
                # block s = [h_fwd[t=s] ; h_bwd[t=T-1-s]], full aligned (8, 256) store
                h0_ref[s * BP:(s + 1) * BP, :] = h_bd
            else:
                # AdaptiveMaxPool1d(1): running max over time (order-invariant)
                pooled = h if s == 0 else jnp.maximum(pooled, h)
        return pooled

    # ---- layer 0 (both directions at once) --------------------------------------------
    run_layer(whh0_ref, is_layer0=True)

    # ---- build the layer-1 "C" operand off the serial chain ---------------------------
    # C block s = time-mirrored layer-0 block with fwd/bwd row halves swapped, i.e.
    # [h_bwd[t=s] ; h_fwd[t=T-1-s]].  Done once after layer 0 (not per recurrence step).
    h0c_ref[...] = jnp.zeros_like(h0c_ref)
    for s in range(T):
        r = h0_ref[(T - 1 - s) * BP:(T - s) * BP, :]        # aligned (8, 256) load
        base = s * BP
        h0c_ref[base:base + B, :] = r[B:2 * B, :]
        h0c_ref[base + B:base + 2 * B, :] = r[0:B, :]

    # ---- layer-1 input projection: ONE matmul over all (t, dir) rows, bias folded -----
    lhs1 = jnp.concatenate([h0_ref[...], h0c_ref[...]], axis=-1)      # (T*BP, 4*HP)
    pre_ref[...] = dot(lhs1.astype(jnp.bfloat16), w1_ref[...]) + b1_ref[...]

    # ---- layer 1 + max-pool over time --------------------------------------------------
    pooled = run_layer(whh1_ref, is_layer0=False)

    # ---- fc -> ReLU -> fc2 --------------------------------------------------------------
    p_bd = jnp.concatenate([pooled[0:B, :], pooled[B:2 * B, :]], axis=-1)   # (B, 256)
    hidden = jnp.maximum(
        dot(p_bd.astype(jnp.bfloat16), fcw_ref[...]) + fcb_ref[...], 0.0)
    out_ref[...] = dot(hidden.astype(jnp.bfloat16), fc2w_ref[...]) + fc2b_ref[...]
    # TODO(synk): nn.Dropout(0.5) is declared in the PyTorch module but never applied in
    # forward(), so it is intentionally omitted.
    # TODO(synk): when B grows, split the batch (not the directions) across v7x's two
    # TensorCores via a leading parallel grid axis; zero cross-core traffic is needed.


# ----------------------------- packing helpers (one-time, model load) --------
def _pack_gates(w):
    """(4, In, H) canonical-gate weights -> (In, 4*HP), gates at 128-lane offsets."""
    return jnp.concatenate(
        [jnp.pad(w[g], ((0, 0), (0, HP - H))) for g in GATE_ORDER], axis=1)


def _dir_block_rows(fwd, bwd, row_block):
    """Stack direction-specific packed weights block-diagonally along rows."""
    pad_f = jnp.pad(fwd, ((0, row_block - fwd.shape[0]), (0, 0)))
    pad_b = jnp.pad(bwd, ((0, row_block - bwd.shape[0]), (0, 0)))
    return jnp.concatenate([pad_f, pad_b], axis=0)


def _tiled_bias(b, batch, seq_len):
    """(2, 4, 1, H) -> (T*BP, GW) f32, folded into the batched projection result."""
    bp = _row_pad(batch)
    bf = jnp.broadcast_to(_pack_gates(b[0]), (batch, GW))
    bb = jnp.broadcast_to(_pack_gates(b[1]), (batch, GW))
    zz = jnp.zeros((bp - 2 * batch, GW), jnp.float32)
    blk = jnp.concatenate([bf, bb, zz], axis=0)             # (BP, GW), pad rows zero
    return jnp.tile(blk, (seq_len, 1))


def pack_params(p, batch, seq_len):
    """One-time packing at model load: bf16 MXU weights, f32 biases (pre-tiled)."""
    assert 2 * batch <= _row_pad(batch)
    E = p["wih0"].shape[2]
    bf16 = jnp.bfloat16
    # layer-1 "A" weights act on [h_fwd[t] ; h_bwd[T-1-t]] rows,
    #         "C" weights act on [h_bwd[t] ; h_fwd[T-1-t]] rows (stacked into one RHS).
    w1a = _dir_block_rows(_pack_gates(p["wih1f"][0]), _pack_gates(p["wih1b"][1]), HP)
    w1c = _dir_block_rows(_pack_gates(p["wih1f"][1]), _pack_gates(p["wih1b"][0]), HP)
    return dict(
        w0=_dir_block_rows(_pack_gates(p["wih0"][0]),
                           _pack_gates(p["wih0"][1]), E).astype(bf16),
        b0=_tiled_bias(p["b0"], batch, seq_len),
        whh0=_dir_block_rows(_pack_gates(p["whh0"][0]),
                             _pack_gates(p["whh0"][1]), HP).astype(bf16),
        w1=jnp.concatenate([w1a, w1c], axis=0).astype(bf16),
        b1=_tiled_bias(p["b1"], batch, seq_len),
        whh1=_dir_block_rows(_pack_gates(p["whh1"][0]),
                             _pack_gates(p["whh1"][1]), HP).astype(bf16),
        fcw=_dir_block_rows(jnp.pad(p["fcw_f"], ((0, 0), (0, HP - H))),
                            jnp.pad(p["fcw_b"], ((0, 0), (0, HP - H))), HP).astype(bf16),
        fcb=jnp.pad(p["fc_b"], ((0, 0), (0, HP - H))),
        fc2w=jnp.pad(p["fc2_w"], ((0, HP - H), (0, 0))).astype(bf16),
        fc2b=p["fc2_b"],
    )


def build_layer0_input(emb, bp):
    """(B, T, E) -> (T*BP, 2E) block-diag LHS: per step s, rows 0:B hold emb[:, s] in
    cols 0:E (fwd dir), rows B:2B hold emb[:, T-1-s] in cols E:2E (bwd dir), rest zero."""
    B, T, E = emb.shape
    emb_f = jnp.transpose(emb, (1, 0, 2))                   # (T, B, E) time-major
    emb_b = emb_f[::-1]                                     # reversed time
    z = jnp.zeros_like(emb_f)
    fwd_rows = jnp.concatenate([emb_f, z], axis=-1)         # (T, B, 2E)
    bwd_rows = jnp.concatenate([z, emb_b], axis=-1)         # (T, B, 2E)
    pad_rows = jnp.zeros((T, bp - 2 * B, 2 * E), emb.dtype)
    x0 = jnp.concatenate([fwd_rows, bwd_rows, pad_rows], axis=1)    # (T, BP, 2E)
    return x0.reshape(T * bp, 2 * E)


# ----------------------------- wrapper ----------------------------------------
@jax.jit
def lstm_model_forward(tokens, embedding, packed):
    # Embedding gather (glue, plain JAX): (B, T) int32 -> (B, T, E) f32
    emb = jnp.take(embedding, tokens, axis=0).astype(jnp.float32)
    B, T, _ = emb.shape
    BP = _row_pad(B)
    C = packed["fc2b"].shape[1]

    x0 = build_layer0_input(emb, BP).astype(jnp.bfloat16)

    vmem = pl.BlockSpec(memory_space=pltpu.MemorySpace.VMEM)   # whole array in VMEM
    args = (x0, packed["w0"], packed["b0"], packed["whh0"],
            packed["w1"], packed["b1"], packed["whh1"],
            packed["fcw"], packed["fcb"], packed["fc2w"], packed["fc2b"])

    kern = functools.partial(lstm_kernel, seq_len=T, bp=BP, batch=B)
    return pl.pallas_call(
        kern,
        out_shape=jax.ShapeDtypeStruct((B, C), jnp.float32),
        in_specs=[vmem] * len(args),
        out_specs=vmem,
        scratch_shapes=[
            pltpu.VMEM((T * BP, GW), jnp.float32),        # per-(t,dir) gate pre-acts
            pltpu.VMEM((T * BP, 2 * HP), jnp.float32),    # layer-0 outputs ("A")
            pltpu.VMEM((T * BP, 2 * HP), jnp.float32),    # layer-1 "C" operand
        ],
        # ~1.7 MB resident; explicit limit is future-proofing for larger T/B (v7x: 64 MiB
        # physical / 32 MiB default scoped; v5e default scoped is only 16 MiB).
        compiler_params=pltpu.CompilerParams(vmem_limit_bytes=32 * 1024 * 1024),
    )(*args)


# ----------------------------- parameters --------------------------------------
def init_params(key, vocab_size, embed_dim, num_class):
    ks = jax.random.split(key, 13)

    def u(k, shape, bound):
        return jax.random.uniform(k, shape, jnp.float32, -bound, bound)

    s_lstm = 1.0 / np.sqrt(H)
    s_fc = 1.0 / np.sqrt(2 * H)
    s_fc2 = 1.0 / np.sqrt(H)
    return dict(
        embedding=jax.random.normal(ks[0], (vocab_size, embed_dim), jnp.float32),
        # LSTM weights stored as (direction, gate[i,f,g,o], in, H); biases combined.
        wih0=u(ks[1], (2, 4, embed_dim, H), s_lstm),
        whh0=u(ks[2], (2, 4, H, H), s_lstm),
        b0=u(ks[3], (2, 4, 1, H), s_lstm),
        wih1f=u(ks[4], (2, 4, H, H), s_lstm),   # layer-1 weights on fwd-half input
        wih1b=u(ks[5], (2, 4, H, H), s_lstm),   # layer-1 weights on bwd-half input
        whh1=u(ks[6], (2, 4, H, H), s_lstm),
        b1=u(ks[7], (2, 4, 1, H), s_lstm),
        fcw_f=u(ks[8], (H, H), s_fc),           # fc weight rows for fwd-half features
        fcw_b=u(ks[9], (H, H), s_fc),           # fc weight rows for bwd-half features
        fc_b=u(ks[10], (1, H), s_fc),
        fc2_w=u(ks[11], (H, num_class), s_fc2),
        fc2_b=u(ks[12], (1, num_class), s_fc2),
    )


# ----------------------------- pure-JAX reference -------------------------------
def reference_forward(tokens, p, matmul_dtype=jnp.float32):
    """Straightforward bidirectional 2-layer LSTM reference.  matmul_dtype=bfloat16
    emulates the kernel's bf16 MXU operands (f32 accumulation, f32 gate math)."""
    f32 = jnp.float32

    def mm(a, b):
        return jnp.dot(a.astype(matmul_dtype), b.astype(matmul_dtype),
                       preferred_element_type=f32)

    emb = jnp.take(p["embedding"], tokens, axis=0).astype(f32)
    B, T, _ = emb.shape

    def run_layer(xs, wih, whh, b, reverse):
        h = jnp.zeros((B, H), f32)
        c = jnp.zeros((B, H), f32)
        outs = [None] * T
        order = range(T - 1, -1, -1) if reverse else range(T)
        for t in order:
            x = xs[:, t, :]
            i = jax.nn.sigmoid(mm(x, wih[0]) + mm(h, whh[0]) + b[0])
            f = jax.nn.sigmoid(mm(x, wih[1]) + mm(h, whh[1]) + b[1])
            g = jnp.tanh(mm(x, wih[2]) + mm(h, whh[2]) + b[2])
            o = jax.nn.sigmoid(mm(x, wih[3]) + mm(h, whh[3]) + b[3])
            c = f * c + i * g
            h = o * jnp.tanh(c)
            outs[t] = h
        return jnp.stack(outs, axis=1)  # (B, T, H)

    hf0 = run_layer(emb, p["wih0"][0], p["whh0"][0], p["b0"][0], False)
    hb0 = run_layer(emb, p["wih0"][1], p["whh0"][1], p["b0"][1], True)
    x1 = jnp.concatenate([hf0, hb0], axis=-1)                       # (B, T, 2H)
    wih1 = jnp.concatenate([p["wih1f"], p["wih1b"]], axis=2)        # (2, 4, 2H, H)
    hf1 = run_layer(x1, wih1[0], p["whh1"][0], p["b1"][0], False)
    hb1 = run_layer(x1, wih1[1], p["whh1"][1], p["b1"][1], True)
    out = jnp.concatenate([hf1, hb1], axis=-1)                      # (B, T, 2H)
    pooled = jnp.max(out, axis=1)                                   # (B, 2H)
    fcw = jnp.concatenate([p["fcw_f"], p["fcw_b"]], axis=0)         # (2H, H)
    x = jax.nn.relu(mm(pooled, fcw) + p["fc_b"])
    return mm(x, p["fc2_w"]) + p["fc2_b"]


# ----------------------------- main ---------------------------------------------
if __name__ == "__main__":
    vocab_size, embed_dim, num_class = 50, 16, 4
    B, T = 2, 8

    key = jax.random.PRNGKey(0)
    kp, kt = jax.random.split(key)
    params = init_params(kp, vocab_size, embed_dim, num_class)
    tokens = jax.random.randint(kt, (B, T), 0, vocab_size, dtype=jnp.int32)

    # One-time weight packing ("model load"), hoisted out of the per-call path.
    packed = pack_params(params, B, T)

    out = lstm_model_forward(tokens, params["embedding"], packed)
    out = jax.block_until_ready(out)
    assert out.shape == (B, num_class)

    # Implementation check: reference with bf16 matmul operands (matches kernel precision).
    ref_bf16 = reference_forward(tokens, params, matmul_dtype=jnp.bfloat16)
    np.testing.assert_allclose(np.asarray(out), np.asarray(ref_bf16), rtol=5e-3, atol=5e-3)

    # Semantic sanity check vs the full-f32 reference (tolerance accounts for bf16 MXU ops).
    ref_f32 = reference_forward(tokens, params, matmul_dtype=jnp.float32)
    np.testing.assert_allclose(np.asarray(out), np.asarray(ref_f32), rtol=3e-2, atol=3e-2)

    print("KERNEL_OK")
</pallas_src>

<mosaic_0001>
module attributes {stable_mosaic.version = 11 : i64} {
  func.func @lstm_kernel(%arg0: memref<64x32xbf16, #tpu.memory_space<vmem>>, %arg1: memref<32x512xbf16, #tpu.memory_space<vmem>>, %arg2: memref<64x512xf32, #tpu.memory_space<vmem>>, %arg3: memref<256x512xbf16, #tpu.memory_space<vmem>>, %arg4: memref<512x512xbf16, #tpu.memory_space<vmem>>, %arg5: memref<64x512xf32, #tpu.memory_space<vmem>>, %arg6: memref<256x512xbf16, #tpu.memory_space<vmem>>, %arg7: memref<256x128xbf16, #tpu.memory_space<vmem>>, %arg8: memref<1x128xf32, #tpu.memory_space<vmem>>, %arg9: memref<128x4xbf16, #tpu.memory_space<vmem>>, %arg10: memref<1x4xf32, #tpu.memory_space<vmem>>, %arg11: memref<2x4xf32, #tpu.memory_space<vmem>>, %arg12: memref<64x512xf32, #tpu.memory_space<vmem>>, %arg13: memref<64x256xf32, #tpu.memory_space<vmem>>, %arg14: memref<64x256xf32, #tpu.memory_space<vmem>>) attributes {dimension_semantics = [], scalar_prefetch = 0 : i64, scratch_operands = 3 : i64, tpu.core_type = #tpu.core_type<tc>} {
    %0 = tpu.iota {dimensions = array<i32: 0>} : vector<8x128xi32>
    %c2_i32 = arith.constant 2 : i32
    %1 = vector.broadcast %c2_i32 : i32 to vector<8x128xi32>
    %2 = arith.cmpi slt, %0, %1 : vector<8x128xi32>
    %c0 = arith.constant 0 : index
    %c0_0 = arith.constant 0 : index
    %3 = vector.load %arg0[%c0, %c0_0] : memref<64x32xbf16, #tpu.memory_space<vmem>>, vector<64x32xbf16>
    %c0_1 = arith.constant 0 : index
    %c0_2 = arith.constant 0 : index
    %4 = vector.load %arg1[%c0_1, %c0_2] : memref<32x512xbf16, #tpu.memory_space<vmem>>, vector<32x512xbf16>
    %cst = arith.constant dense<0.000000e+00> : vector<64x512xf32>
    %5 = tpu.matmul %3, %4, %cst {dimension_numbers = #tpu.dot_dimension_numbers<[1], [0], [0], [1], [0, 0, 1, 1], [], []>} : vector<64x32xbf16>, vector<32x512xbf16>, vector<64x512xf32> -> vector<64x512xf32>
    %c0_3 = arith.constant 0 : index
    %c0_4 = arith.constant 0 : index
    %6 = vector.load %arg2[%c0_3, %c0_4] : memref<64x512xf32, #tpu.memory_space<vmem>>, vector<64x512xf32>
    %7 = arith.addf %5, %6 : vector<64x512xf32>
    %c0_5 = arith.constant 0 : index
    %c0_6 = arith.constant 0 : index
    %8 = vector.load %arg12[%c0_5, %c0_6] : memref<64x512xf32, #tpu.memory_space<vmem>>, vector<64x512xf32>
    tpu.vector_store %arg12[%c0_5, %c0_6], %7 {strides = array<i32>} : memref<64x512xf32, #tpu.memory_space<vmem>>, vector<64x512xf32>,
    %c0_7 = arith.constant 0 : index
    %c0_8 = arith.constant 0 : index
    %9 = vector.load %arg3[%c0_7, %c0_8] : memref<256x512xbf16, #tpu.memory_space<vmem>>, vector<256x512xbf16>
    %cst_9 = arith.constant 0.000000e+00 : f32
    %10 = vector.broadcast %cst_9 : f32 to vector<8x128xf32>
    %c0_10 = arith.constant 0 : index
    %c0_11 = arith.constant 0 : index
    %11 = vector.load %arg12[%c0_10, %c0_11] : memref<64x512xf32, #tpu.memory_space<vmem>>, vector<8x512xf32>
    %12 = vector.extract_strided_slice %11 {offsets = [0, 0], sizes = [8, 384], strides = [1, 1]} : vector<8x512xf32> to vector<8x384xf32>
    %cst_12 = arith.constant 5.000000e-01 : f32
    %13 = vector.broadcast %cst_12 : f32 to vector<8x384xf32>
    %14 = arith.mulf %13, %12 : vector<8x384xf32>
    %15 = math.tanh %14 : vector<8x384xf32>
    %cst_13 = arith.constant 5.000000e-01 : f32
    %16 = vector.broadcast %cst_13 : f32 to vector<8x384xf32>
    %17 = arith.mulf %16, %15 : vector<8x384xf32>
    %cst_14 = arith.constant 5.000000e-01 : f32
    %18 = vector.broadcast %cst_14 : f32 to vector<8x384xf32>
    %19 = arith.addf %17, %18 : vector<8x384xf32>
    %20 = vector.extract_strided_slice %11 {offsets = [0, 384], sizes = [8, 128], strides = [1, 1]} : vector<8x512xf32> to vector<8x128xf32>
    %21 = math.tanh %20 : vector<8x128xf32>
    %22 = vector.extract_strided_slice %19 {offsets = [0, 128], sizes = [8, 128], strides = [1, 1]} : vector<8x384xf32> to vector<8x128xf32>
    %23 = arith.mulf %22, %10 : vector<8x128xf32>
    %24 = vector.extract_strided_slice %19 {offsets = [0, 0], sizes = [8, 128], strides = [1, 1]} : vector<8x384xf32> to vector<8x128xf32>
    %25 = arith.mulf %24, %21 : vector<8x128xf32>
    %26 = arith.addf %23, %25 : vector<8x128xf32>
    %27 = vector.extract_strided_slice %19 {offsets = [0, 256], sizes = [8, 128], strides = [1, 1]} : vector<8x384xf32> to vector<8x128xf32>
    %28 = math.tanh %26 : vector<8x128xf32>
    %29 = arith.mulf %27, %28 : vector<8x128xf32>
    %cst_15 = arith.constant 0.000000e+00 : f32
    %30 = vector.broadcast %cst_15 : f32 to vector<8x128xf32>
    %31 = arith.select %2, %29, %30 : vector<8x128xi1>, vector<8x128xf32>
    %cst_16 = arith.constant 0.000000e+00 : f32
    %32 = vector.broadcast %cst_16 : f32 to vector<8x128xf32>
    %33 = arith.select %2, %32, %29 : vector<8x128xi1>, vector<8x128xf32>
    %34 = tpu.concatenate %31, %33 in 1 : vector<8x128xf32>, vector<8x128xf32> -> vector<8x256xf32>
    %c0_17 = arith.constant 0 : index
    %c0_18 = arith.constant 0 : index
    %35 = vector.load %arg13[%c0_17, %c0_18] : memref<64x256xf32, #tpu.memory_space<vmem>>, vector<8x256xf32>
    tpu.vector_store %arg13[%c0_17, %c0_18], %34 {strides = array<i32>} : memref<64x256xf32, #tpu.memory_space<vmem>>, vector<8x256xf32>,
    %c8 = arith.constant 8 : index
    %c0_19 = arith.constant 0 : index
    %36 = vector.load %arg12[%c8, %c0_19] : memref<64x512xf32, #tpu.memory_space<vmem>>, vector<8x512xf32>
    %37 = arith.truncf %34 : vector<8x256xf32> to vector<8x256xbf16>
    %cst_20 = arith.constant dense<0.000000e+00> : vector<8x512xf32>
    %38 = tpu.matmul %37, %9, %cst_20 {dimension_numbers = #tpu.dot_dimension_numbers<[1], [0], [0], [1], [0, 0, 1, 1], [], []>} : vector<8x256xbf16>, vector<256x512xbf16>, vector<8x512xf32> -> vector<8x512xf32>
    %39 = arith.addf %36, %38 : vector<8x512xf32>
    %40 = vector.extract_strided_slice %39 {offsets = [0, 0], sizes = [8, 384], strides = [1, 1]} : vector<8x512xf32> to vector<8x384xf32>
    %cst_21 = arith.constant 5.000000e-01 : f32
    %41 = vector.broadcast %cst_21 : f32 to vector<8x384xf32>
    %42 = arith.mulf %41, %40 : vector<8x384xf32>
    %43 = math.tanh %42 : vector<8x384xf32>
    %cst_22 = arith.constant 5.000000e-01 : f32
    %44 = vector.broadcast %cst_22 : f32 to vector<8x384xf32>
    %45 = arith.mulf %44, %43 : vector<8x384xf32>
    %cst_23 = arith.constant 5.000000e-01 : f32
    %46 = vector.broadcast %cst_23 : f32 to vector<8x384xf32>
    %47 = arith.addf %45, %46 : vector<8x384xf32>
    %48 = vector.extract_strided_slice %39 {offsets = [0, 384], sizes = [8, 128], strides = [1, 1]} : vector<8x512xf32> to vector<8x128xf32>
    %49 = math.tanh %48 : vector<8x128xf32>
    %50 = vector.extract_strided_slice %47 {offsets = [0, 128], sizes = [8, 128], strides = [1, 1]} : vector<8x384xf32> to vector<8x128xf32>
    %51 = arith.mulf %50, %26 : vector<8x128xf32>
    %52 = vector.extract_strided_slice %47 {offsets = [0, 0], sizes = [8, 128], strides = [1, 1]} : vector<8x384xf32> to vector<8x128xf32>
    %53 = arith.mulf %52, %49 : vector<8x128xf32>
    %54 = arith.addf %51, %53 : vector<8x128xf32>
    %55 = vector.extract_strided_slice %47 {offsets = [0, 256], sizes = [8, 128], strides = [1, 1]} : vector<8x384xf32> to vector<8x128xf32>
    %56 = math.tanh %54 : vector<8x128xf32>
    %57 = arith.mulf %55, %56 : vector<8x128xf32>
    %cst_24 = arith.constant 0.000000e+00 : f32
    %58 = vector.broadcast %cst_24 : f32 to vector<8x128xf32>
    %59 = arith.select %2, %57, %58 : vector<8x128xi1>, vector<8x128xf32>
    %cst_25 = arith.constant 0.000000e+00 : f32
    %60 = vector.broadcast %cst_25 : f32 to vector<8x128xf32>
    %61 = arith.select %2, %60, %57 : vector<8x128xi1>, vector<8x128xf32>
    %62 = tpu.concatenate %59, %61 in 1 : vector<8x128xf32>, vector<8x128xf32> -> vector<8x256xf32>
    %c8_26 = arith.constant 8 : index
    %c0_27 = arith.constant 0 : index
    %63 = vector.load %arg13[%c8_26, %c0_27] : memref<64x256xf32, #tpu.memory_space<vmem>>, vector<8x256xf32>
    tpu.vector_store %arg13[%c8_26, %c0_27], %62 {strides = array<i32>} : memref<64x256xf32, #tpu.memory_space<vmem>>, vector<8x256xf32>,
    %c16 = arith.constant 16 : index
    %c0_28 = arith.constant 0 : index
    %64 = vector.load %arg12[%c16, %c0_28] : memref<64x512xf32, #tpu.memory_space<vmem>>, vector<8x512xf32>
    %65 = arith.truncf %62 : vector<8x256xf32> to vector<8x256xbf16>
    %cst_29 = arith.constant dense<0.000000e+00> : vector<8x512xf32>
    %66 = tpu.matmul %65, %9, %cst_29 {dimension_numbers = #tpu.dot_dimension_numbers<[1], [0], [0], [1], [0, 0, 1, 1], [], []>} : vector<8x256xbf16>, vector<256x512xbf16>, vector<8x512xf32> -> vector<8x512xf32>
    %67 = arith.addf %64, %66 : vector<8x512xf32>
    %68 = vector.extract_strided_slice %67 {offsets = [0, 0], sizes = [8, 384], strides = [1, 1]} : vector<8x512xf32> to vector<8x384xf32>
    %cst_30 = arith.constant 5.000000e-01 : f32
    %69 = vector.broadcast %cst_30 : f32 to vector<8x384xf32>
    %70 = arith.mulf %69, %68 : vector<8x384xf32>
    %71 = math.tanh %70 : vector<8x384xf32>
    %cst_31 = arith.constant 5.000000e-01 : f32
    %72 = vector.broadcast %cst_31 : f32 to vector<8x384xf32>
    %73 = arith.mulf %72, %71 : vector<8x384xf32>
    %cst_32 = arith.constant 5.000000e-01 : f32
    %74 = vector.broadcast %cst_32 : f32 to vector<8x384xf32>
    %75 = arith.addf %73, %74 : vector<8x384xf32>
    %76 = vector.extract_strided_slice %67 {offsets = [0, 384], sizes = [8, 128], strides = [1, 1]} : vector<8x512xf32> to vector<8x128xf32>
    %77 = math.tanh %76 : vector<8x128xf32>
    %78 = vector.extract_strided_slice %75 {offsets = [0, 128], sizes = [8, 128], strides = [1, 1]} : vector<8x384xf32> to vector<8x128xf32>
    %79 = arith.mulf %78, %54 : vector<8x128xf32>
    %80 = vector.extract_strided_slice %75 {offsets = [0, 0], sizes = [8, 128], strides = [1, 1]} : vector<8x384xf32> to vector<8x128xf32>
    %81 = arith.mulf %80, %77 : vector<8x128xf32>
    %82 = arith.addf %79, %81 : vector<8x128xf32>
    %83 = vector.extract_strided_slice %75 {offsets = [0, 256], sizes = [8, 128], strides = [1, 1]} : vector<8x384xf32> to vector<8x128xf32>
    %84 = math.tanh %82 : vector<8x128xf32>
    %85 = arith.mulf %83, %84 : vector<8x128xf32>
    %cst_33 = arith.constant 0.000000e+00 : f32
    %86 = vector.broadcast %cst_33 : f32 to vector<8x128xf32>
    %87 = arith.select %2, %85, %86 : vector<8x128xi1>, vector<8x128xf32>
    %cst_34 = arith.constant 0.000000e+00 : f32
    %88 = vector.broadcast %cst_34 : f32 to vector<8x128xf32>
    %89 = arith.select %2, %88, %85 : vector<8x128xi1>, vector<8x128xf32>
    %90 = tpu.concatenate %87, %89 in 1 : vector<8x128xf32>, vector<8x128xf32> -> vector<8x256xf32>
    %c16_35 = arith.constant 16 : index
    %c0_36 = arith.constant 0 : index
    %91 = vector.load %arg13[%c16_35, %c0_36] : memref<64x256xf32, #tpu.memory_space<vmem>>, vector<8x256xf32>
    tpu.vector_store %arg13[%c16_35, %c0_36], %90 {strides = array<i32>} : memref<64x256xf32, #tpu.memory_space<vmem>>, vector<8x256xf32>,
    %c24 = arith.constant 24 : index
    %c0_37 = arith.constant 0 : index
    %92 = vector.load %arg12[%c24, %c0_37] : memref<64x512xf32, #tpu.memory_space<vmem>>, vector<8x512xf32>
    %93 = arith.truncf %90 : vector<8x256xf32> to vector<8x256xbf16>
    %cst_38 = arith.constant dense<0.000000e+00> : vector<8x512xf32>
    %94 = tpu.matmul %93, %9, %cst_38 {dimension_numbers = #tpu.dot_dimension_numbers<[1], [0], [0], [1], [0, 0, 1, 1], [], []>} : vector<8x256xbf16>, vector<256x512xbf16>, vector<8x512xf32> -> vector<8x512xf32>
    %95 = arith.addf %92, %94 : vector<8x512xf32>
    %96 = vector.extract_strided_slice %95 {offsets = [0, 0], sizes = [8, 384], strides = [1, 1]} : vector<8x512xf32> to vector<8x384xf32>
    %cst_39 = arith.constant 5.000000e-01 : f32
    %97 = vector.broadcast %cst_39 : f32 to vector<8x384xf32>
    %98 = arith.mulf %97, %96 : vector<8x384xf32>
    %99 = math.tanh %98 : vector<8x384xf32>
    %cst_40 = arith.constant 5.000000e-01 : f32
    %100 = vector.broadcast %cst_40 : f32 to vector<8x384xf32>
    %101 = arith.mulf %100, %99 : vector<8x384xf32>
    %cst_41 = arith.constant 5.000000e-01 : f32
    %102 = vector.broadcast %cst_41 : f32 to vector<8x384xf32>
    %103 = arith.addf %101, %102 : vector<8x384xf32>
    %104 = vector.extract_strided_slice %95 {offsets = [0, 384], sizes = [8, 128], strides = [1, 1]} : vector<8x512xf32> to vector<8x128xf32>
    %105 = math.tanh %104 : vector<8x128xf32>
    %106 = vector.extract_strided_slice %103 {offsets = [0, 128], sizes = [8, 128], strides = [1, 1]} : vector<8x384xf32> to vector<8x128xf32>
    %107 = arith.mulf %106, %82 : vector<8x128xf32>
    %108 = vector.extract_strided_slice %103 {offsets = [0, 0], sizes = [8, 128], strides = [1, 1]} : vector<8x384xf32> to vector<8x128xf32>
    %109 = arith.mulf %108, %105 : vector<8x128xf32>
    %110 = arith.addf %107, %109 : vector<8x128xf32>
    %111 = vector.extract_strided_slice %103 {offsets = [0, 256], sizes = [8, 128], strides = [1, 1]} : vector<8x384xf32> to vector<8x128xf32>
    %112 = math.tanh %110 : vector<8x128xf32>
    %113 = arith.mulf %111, %112 : vector<8x128xf32>
    %cst_42 = arith.constant 0.000000e+00 : f32
    %114 = vector.broadcast %cst_42 : f32 to vector<8x128xf32>
    %115 = arith.select %2, %113, %114 : vector<8x128xi1>, vector<8x128xf32>
    %cst_43 = arith.constant 0.000000e+00 : f32
    %116 = vector.broadcast %cst_43 : f32 to vector<8x128xf32>
    %117 = arith.select %2, %116, %113 : vector<8x128xi1>, vector<8x128xf32>
    %118 = tpu.concatenate %115, %117 in 1 : vector<8x128xf32>, vector<8x128xf32> -> vector<8x256xf32>
    %c24_44 = arith.constant 24 : index
    %c0_45 = arith.constant 0 : index
    %119 = vector.load %arg13[%c24_44, %c0_45] : memref<64x256xf32, #tpu.memory_space<vmem>>, vector<8x256xf32>
    tpu.vector_store %arg13[%c24_44, %c0_45], %118 {strides = array<i32>} : memref<64x256xf32, #tpu.memory_space<vmem>>, vector<8x256xf32>,
    %c32 = arith.constant 32 : index
    %c0_46 = arith.constant 0 : index
    %120 = vector.load %arg12[%c32, %c0_46] : memref<64x512xf32, #tpu.memory_space<vmem>>, vector<8x512xf32>
    %121 = arith.truncf %118 : vector<8x256xf32> to vector<8x256xbf16>
    %cst_47 = arith.constant dense<0.000000e+00> : vector<8x512xf32>
    %122 = tpu.matmul %121, %9, %cst_47 {dimension_numbers = #tpu.dot_dimension_numbers<[1], [0], [0], [1], [0, 0, 1, 1], [], []>} : vector<8x256xbf16>, vector<256x512xbf16>, vector<8x512xf32> -> vector<8x512xf32>
    %123 = arith.addf %120, %122 : vector<8x512xf32>
    %124 = vector.extract_strided_slice %123 {offsets = [0, 0], sizes = [8, 384], strides = [1, 1]} : vector<8x512xf32> to vector<8x384xf32>
    %cst_48 = arith.constant 5.000000e-01 : f32
    %125 = vector.broadcast %cst_48 : f32 to vector<8x384xf32>
    %126 = arith.mulf %125, %124 : vector<8x384xf32>
    %127 = math.tanh %126 : vector<8x384xf32>
    %cst_49 = arith.constant 5.000000e-01 : f32
    %128 = vector.broadcast %cst_49 : f32 to vector<8x384xf32>
    %129 = arith.mulf %128, %127 : vector<8x384xf32>
    %cst_50 = arith.constant 5.000000e-01 : f32
    %130 = vector.broadcast %cst_50 : f32 to vector<8x384xf32>
    %131 = arith.addf %129, %130 : vector<8x384xf32>
    %132 = vector.extract_strided_slice %123 {offsets = [0, 384], sizes = [8, 128], strides = [1, 1]} : vector<8x512xf32> to vector<8x128xf32>
    %133 = math.tanh %132 : vector<8x128xf32>
    %134 = vector.extract_strided_slice %131 {offsets = [0, 128], sizes = [8, 128], strides = [1, 1]} : vector<8x384xf32> to vector<8x128xf32>
    %135 = arith.mulf %134, %110 : vector<8x128xf32>
    %136 = vector.extract_strided_slice %131 {offsets = [0, 0], sizes = [8, 128], strides = [1, 1]} : vector<8x384xf32> to vector<8x128xf32>
    %137 = arith.mulf %136, %133 : vector<8x128xf32>
    %138 = arith.addf %135, %137 : vector<8x128xf32>
    %139 = vector.extract_strided_slice %131 {offsets = [0, 256], sizes = [8, 128], strides = [1, 1]} : vector<8x384xf32> to vector<8x128xf32>
    %140 = math.tanh %138 : vector<8x128xf32>
    %141 = arith.mulf %139, %140 : vector<8x128xf32>
    %cst_51 = arith.constant 0.000000e+00 : f32
    %142 = vector.broadcast %cst_51 : f32 to vector<8x128xf32>
    %143 = arith.select %2, %141, %142 : vector<8x128xi1>, vector<8x128xf32>
    %cst_52 = arith.constant 0.000000e+00 : f32
    %144 = vector.broadcast %cst_52 : f32 to vector<8x128xf32>
    %145 = arith.select %2, %144, %141 : vector<8x128xi1>, vector<8x128xf32>
    %146 = tpu.concatenate %143, %145 in 1 : vector<8x128xf32>, vector<8x128xf32> -> vector<8x256xf32>
    %c32_53 = arith.constant 32 : index
    %c0_54 = arith.constant 0 : index
    %147 = vector.load %arg13[%c32_53, %c0_54] : memref<64x256xf32, #tpu.memory_space<vmem>>, vector<8x256xf32>
    tpu.vector_store %arg13[%c32_53, %c0_54], %146 {strides = array<i32>} : memref<64x256xf32, #tpu.memory_space<vmem>>, vector<8x256xf32>,
    %c40 = arith.constant 40 : index
    %c0_55 = arith.constant 0 : index
    %148 = vector.load %arg12[%c40, %c0_55] : memref<64x512xf32, #tpu.memory_space<vmem>>, vector<8x512xf32>
    %149 = arith.truncf %146 : vector<8x256xf32> to vector<8x256xbf16>
    %cst_56 = arith.constant dense<0.000000e+00> : vector<8x512xf32>
    %150 = tpu.matmul %149, %9, %cst_56 {dimension_numbers = #tpu.dot_dimension_numbers<[1], [0], [0], [1], [0, 0, 1, 1], [], []>} : vector<8x256xbf16>, vector<256x512xbf16>, vector<8x512xf32> -> vector<8x512xf32>
    %151 = arith.addf %148, %150 : vector<8x512xf32>
    %152 = vector.extract_strided_slice %151 {offsets = [0, 0], sizes = [8, 384], strides = [1, 1]} : vector<8x512xf32> to vector<8x384xf32>
    %cst_57 = arith.constant 5.000000e-01 : f32
    %153 = vector.broadcast %cst_57 : f32 to vector<8x384xf32>
    %154 = arith.mulf %153, %152 : vector<8x384xf32>
    %155 = math.tanh %154 : vector<8x384xf32>
    %cst_58 = arith.constant 5.000000e-01 : f32
    %156 = vector.broadcast %cst_58 : f32 to vector<8x384xf32>
    %157 = arith.mulf %156, %155 : vector<8x384xf32>
    %cst_59 = arith.constant 5.000000e-01 : f32
    %158 = vector.broadcast %cst_59 : f32 to vector<8x384xf32>
    %159 = arith.addf %157, %158 : vector<8x384xf32>
    %160 = vector.extract_strided_slice %151 {offsets = [0, 384], sizes = [8, 128], strides = [1, 1]} : vector<8x512xf32> to vector<8x128xf32>
    %161 = math.tanh %160 : vector<8x128xf32>
    %162 = vector.extract_strided_slice %159 {offsets = [0, 128], sizes = [8, 128], strides = [1, 1]} : vector<8x384xf32> to vector<8x128xf32>
    %163 = arith.mulf %162, %138 : vector<8x128xf32>
    %164 = vector.extract_strided_slice %159 {offsets = [0, 0], sizes = [8, 128], strides = [1, 1]} : vector<8x384xf32> to vector<8x128xf32>
    %165 = arith.mulf %164, %161 : vector<8x128xf32>
    %166 = arith.addf %163, %165 : vector<8x128xf32>
    %167 = vector.extract_strided_slice %159 {offsets = [0, 256], sizes = [8, 128], strides = [1, 1]} : vector<8x384xf32> to vector<8x128xf32>
    %168 = math.tanh %166 : vector<8x128xf32>
    %169 = arith.mulf %167, %168 : vector<8x128xf32>
    %cst_60 = arith.constant 0.000000e+00 : f32
    %170 = vector.broadcast %cst_60 : f32 to vector<8x128xf32>
    %171 = arith.select %2, %169, %170 : vector<8x128xi1>, vector<8x128xf32>
    %cst_61 = arith.constant 0.000000e+00 : f32
    %172 = vector.broadcast %cst_61 : f32 to vector<8x128xf32>
    %173 = arith.select %2, %172, %169 : vector<8x128xi1>, vector<8x128xf32>
    %174 = tpu.concatenate %171, %173 in 1 : vector<8x128xf32>, vector<8x128xf32> -> vector<8x256xf32>
    %c40_62 = arith.constant 40 : index
    %c0_63 = arith.constant 0 : index
    %175 = vector.load %arg13[%c40_62, %c0_63] : memref<64x256xf32, #tpu.memory_space<vmem>>, vector<8x256xf32>
    tpu.vector_store %arg13[%c40_62, %c0_63], %174 {strides = array<i32>} : memref<64x256xf32, #tpu.memory_space<vmem>>, vector<8x256xf32>,
    %c48 = arith.constant 48 : index
    %c0_64 = arith.constant 0 : index
    %176 = vector.load %arg12[%c48, %c0_64] : memref<64x512xf32, #tpu.memory_space<vmem>>, vector<8x512xf32>
    %177 = arith.truncf %174 : vector<8x256xf32> to vector<8x256xbf16>
    %cst_65 = arith.constant dense<0.000000e+00> : vector<8x512xf32>
    %178 = tpu.matmul %177, %9, %cst_65 {dimension_numbers = #tpu.dot_dimension_numbers<[1], [0], [0], [1], [0, 0, 1, 1], [], []>} : vector<8x256xbf16>, vector<256x512xbf16>, vector<8x512xf32> -> vector<8x512xf32>
    %179 = arith.addf %176, %178 : vector<8x512xf32>
    %180 = vector.extract_strided_slice %179 {offsets = [0, 0], sizes = [8, 384], strides = [1, 1]} : vector<8x512xf32> to vector<8x384xf32>
    %cst_66 = arith.constant 5.000000e-01 : f32
    %181 = vector.broadcast %cst_66 : f32 to vector<8x384xf32>
    %182 = arith.mulf %181, %180 : vector<8x384xf32>
    %183 = math.tanh %182 : vector<8x384xf32>
    %cst_67 = arith.constant 5.000000e-01 : f32
    %184 = vector.broadcast %cst_67 : f32 to vector<8x384xf32>
    %185 = arith.mulf %184, %183 : vector<8x384xf32>
    %cst_68 = arith.constant 5.000000e-01 : f32
    %186 = vector.broadcast %cst_68 : f32 to vector<8x384xf32>
    %187 = arith.addf %185, %186 : vector<8x384xf32>
    %188 = vector.extract_strided_slice %179 {offsets = [0, 384], sizes = [8, 128], strides = [1, 1]} : vector<8x512xf32> to vector<8x128xf32>
    %189 = math.tanh %188 : vector<8x128xf32>
    %190 = vector.extract_strided_slice %187 {offsets = [0, 128], sizes = [8, 128], strides = [1, 1]} : vector<8x384xf32> to vector<8x128xf32>
    %191 = arith.mulf %190, %166 : vector<8x128xf32>
    %192 = vector.extract_strided_slice %187 {offsets = [0, 0], sizes = [8, 128], strides = [1, 1]} : vector<8x384xf32> to vector<8x128xf32>
    %193 = arith.mulf %192, %189 : vector<8x128xf32>
    %194 = arith.addf %191, %193 : vector<8x128xf32>
    %195 = vector.extract_strided_slice %187 {offsets = [0, 256], sizes = [8, 128], strides = [1, 1]} : vector<8x384xf32> to vector<8x128xf32>
    %196 = math.tanh %194 : vector<8x128xf32>
    %197 = arith.mulf %195, %196 : vector<8x128xf32>
    %cst_69 = arith.constant 0.000000e+00 : f32
    %198 = vector.broadcast %cst_69 : f32 to vector<8x128xf32>
    %199 = arith.select %2, %197, %198 : vector<8x128xi1>, vector<8x128xf32>
    %cst_70 = arith.constant 0.000000e+00 : f32
    %200 = vector.broadcast %cst_70 : f32 to vector<8x128xf32>
    %201 = arith.select %2, %200, %197 : vector<8x128xi1>, vector<8x128xf32>
    %202 = tpu.concatenate %199, %201 in 1 : vector<8x128xf32>, vector<8x128xf32> -> vector<8x256xf32>
    %c48_71 = arith.constant 48 : index
    %c0_72 = arith.constant 0 : index
    %203 = vector.load %arg13[%c48_71, %c0_72] : memref<64x256xf32, #tpu.memory_space<vmem>>, vector<8x256xf32>
    tpu.vector_store %arg13[%c48_71, %c0_72], %202 {strides = array<i32>} : memref<64x256xf32, #tpu.memory_space<vmem>>, vector<8x256xf32>,
    %c56 = arith.constant 56 : index
    %c0_73 = arith.constant 0 : index
    %204 = vector.load %arg12[%c56, %c0_73] : memref<64x512xf32, #tpu.memory_space<vmem>>, vector<8x512xf32>
    %205 = arith.truncf %202 : vector<8x256xf32> to vector<8x256xbf16>
    %cst_74 = arith.constant dense<0.000000e+00> : vector<8x512xf32>
    %206 = tpu.matmul %205, %9, %cst_74 {dimension_numbers = #tpu.dot_dimension_numbers<[1], [0], [0], [1], [0, 0, 1, 1], [], []>} : vector<8x256xbf16>, vector<256x512xbf16>, vector<8x512xf32> -> vector<8x512xf32>
    %207 = arith.addf %204, %206 : vector<8x512xf32>
    %208 = vector.extract_strided_slice %207 {offsets = [0, 0], sizes = [8, 384], strides = [1, 1]} : vector<8x512xf32> to vector<8x384xf32>
    %cst_75 = arith.constant 5.000000e-01 : f32
    %209 = vector.broadcast %cst_75 : f32 to vector<8x384xf32>
    %210 = arith.mulf %209, %208 : vector<8x384xf32>
    %211 = math.tanh %210 : vector<8x384xf32>
    %cst_76 = arith.constant 5.000000e-01 : f32
    %212 = vector.broadcast %cst_76 : f32 to vector<8x384xf32>
    %213 = arith.mulf %212, %211 : vector<8x384xf32>
    %cst_77 = arith.constant 5.000000e-01 : f32
    %214 = vector.broadcast %cst_77 : f32 to vector<8x384xf32>
    %215 = arith.addf %213, %214 : vector<8x384xf32>
    %216 = vector.extract_strided_slice %207 {offsets = [0, 384], sizes = [8, 128], strides = [1, 1]} : vector<8x512xf32> to vector<8x128xf32>
    %217 = math.tanh %216 : vector<8x128xf32>
    %218 = vector.extract_strided_slice %215 {offsets = [0, 128], sizes = [8, 128], strides = [1, 1]} : vector<8x384xf32> to vector<8x128xf32>
    %219 = arith.mulf %218, %194 : vector<8x128xf32>
    %220 = vector.extract_strided_slice %215 {offsets = [0, 0], sizes = [8, 128], strides = [1, 1]} : vector<8x384xf32> to vector<8x128xf32>
    %221 = arith.mulf %220, %217 : vector<8x128xf32>
    %222 = arith.addf %219, %221 : vector<8x128xf32>
    %223 = vector.extract_strided_slice %215 {offsets = [0, 256], sizes = [8, 128], strides = [1, 1]} : vector<8x384xf32> to vector<8x128xf32>
    %224 = math.tanh %222 : vector<8x128xf32>
    %225 = arith.mulf %223, %224 : vector<8x128xf32>
    %cst_78 = arith.constant 0.000000e+00 : f32
    %226 = vector.broadcast %cst_78 : f32 to vector<8x128xf32>
    %227 = arith.select %2, %225, %226 : vector<8x128xi1>, vector<8x128xf32>
    %cst_79 = arith.constant 0.000000e+00 : f32
    %228 = vector.broadcast %cst_79 : f32 to vector<8x128xf32>
    %229 = arith.select %2, %228, %225 : vector<8x128xi1>, vector<8x128xf32>
    %230 = tpu.concatenate %227, %229 in 1 : vector<8x128xf32>, vector<8x128xf32> -> vector<8x256xf32>
    %c56_80 = arith.constant 56 : index
    %c0_81 = arith.constant 0 : index
    %231 = vector.load %arg13[%c56_80, %c0_81] : memref<64x256xf32, #tpu.memory_space<vmem>>, vector<8x256xf32>
    tpu.vector_store %arg13[%c56_80, %c0_81], %230 {strides = array<i32>} : memref<64x256xf32, #tpu.memory_space<vmem>>, vector<8x256xf32>,
    %cst_82 = arith.constant 0.000000e+00 : f32
    %232 = vector.broadcast %cst_82 : f32 to vector<64x256xf32>
    %c0_83 = arith.constant 0 : index
    %c0_84 = arith.constant 0 : index
    %233 = vector.load %arg14[%c0_83, %c0_84] : memref<64x256xf32, #tpu.memory_space<vmem>>, vector<64x256xf32>
    tpu.vector_store %arg14[%c0_83, %c0_84], %232 {strides = array<i32>} : memref<64x256xf32, #tpu.memory_space<vmem>>, vector<64x256xf32>,
    %c56_85 = arith.constant 56 : index
    %c0_86 = arith.constant 0 : index
    %234 = vector.load %arg13[%c56_85, %c0_86] : memref<64x256xf32, #tpu.memory_space<vmem>>, vector<8x256xf32>
    %235 = vector.extract_strided_slice %234 {offsets = [2, 0], sizes = [2, 256], strides = [1, 1]} : vector<8x256xf32> to vector<2x256xf32>
    %c0_87 = arith.constant 0 : index
    %c0_88 = arith.constant 0 : index
    %236 = vector.load %arg14[%c0_87, %c0_88] : memref<64x256xf32, #tpu.memory_space<vmem>>, vector<2x256xf32>
    tpu.vector_store %arg14[%c0_87, %c0_88], %235 {strides = array<i32>} : memref<64x256xf32, #tpu.memory_space<vmem>>, vector<2x256xf32>,
    %237 = vector.extract_strided_slice %234 {offsets = [0, 0], sizes = [2, 256], strides = [1, 1]} : vector<8x256xf32> to vector<2x256xf32>
    %c2 = arith.constant 2 : index
    %c0_89 = arith.constant 0 : index
    %238 = vector.load %arg14[%c2, %c0_89] : memref<64x256xf32, #tpu.memory_space<vmem>>, vector<2x256xf32>
    tpu.vector_store %arg14[%c2, %c0_89], %237 {strides = array<i32>} : memref<64x256xf32, #tpu.memory_space<vmem>>, vector<2x256xf32>,
    %c48_90 = arith.constant 48 : index
    %c0_91 = arith.constant 0 : index
    %239 = vector.load %arg13[%c48_90, %c0_91] : memref<64x256xf32, #tpu.memory_space<vmem>>, vector<8x256xf32>
    %240 = vector.extract_strided_slice %239 {offsets = [2, 0], sizes = [2, 256], strides = [1, 1]} : vector<8x256xf32> to vector<2x256xf32>
    %c8_92 = arith.constant 8 : index
    %c0_93 = arith.constant 0 : index
    %241 = vector.load %arg14[%c8_92, %c0_93] : memref<64x256xf32, #tpu.memory_space<vmem>>, vector<2x256xf32>
    tpu.vector_store %arg14[%c8_92, %c0_93], %240 {strides = array<i32>} : memref<64x256xf32, #tpu.memory_space<vmem>>, vector<2x256xf32>,
    %242 = vector.extract_strided_slice %239 {offsets = [0, 0], sizes = [2, 256], strides = [1, 1]} : vector<8x256xf32> to vector<2x256xf32>
    %c10 = arith.constant 10 : index
    %c0_94 = arith.constant 0 : index
    %243 = vector.load %arg14[%c10, %c0_94] : memref<64x256xf32, #tpu.memory_space<vmem>>, vector<2x256xf32>
    tpu.vector_store %arg14[%c10, %c0_94], %242 {strides = array<i32>} : memref<64x256xf32, #tpu.memory_space<vmem>>, vector<2x256xf32>,
    %c40_95 = arith.constant 40 : index
    %c0_96 = arith.constant 0 : index
    %244 = vector.load %arg13[%c40_95, %c0_96] : memref<64x256xf32, #tpu.memory_space<vmem>>, vector<8x256xf32>
    %245 = vector.extract_strided_slice %244 {offsets = [2, 0], sizes = [2, 256], strides = [1, 1]} : vector<8x256xf32> to vector<2x256xf32>
    %c16_97 = arith.constant 16 : index
    %c0_98 = arith.constant 0 : index
    %246 = vector.load %arg14[%c16_97, %c0_98] : memref<64x256xf32, #tpu.memory_space<vmem>>, vector<2x256xf32>
    tpu.vector_store %arg14[%c16_97, %c0_98], %245 {strides = array<i32>} : memref<64x256xf32, #tpu.memory_space<vmem>>, vector<2x256xf32>,
    %247 = vector.extract_strided_slice %244 {offsets = [0, 0], sizes = [2, 256], strides = [1, 1]} : vector<8x256xf32> to vector<2x256xf32>
    %c18 = arith.constant 18 : index
    %c0_99 = arith.constant 0 : index
    %248 = vector.load %arg14[%c18, %c0_99] : memref<64x256xf32, #tpu.memory_space<vmem>>, vector<2x256xf32>
    tpu.vector_store %arg14[%c18, %c0_99], %247 {strides = array<i32>} : memref<64x256xf32, #tpu.memory_space<vmem>>, vector<2x256xf32>,
    %c32_100 = arith.constant 32 : index
    %c0_101 = arith.constant 0 : index
    %249 = vector.load %arg13[%c32_100, %c0_101] : memref<64x256xf32, #tpu.memory_space<vmem>>, vector<8x256xf32>
    %250 = vector.extract_strided_slice %249 {offsets = [2, 0], sizes = [2, 256], strides = [1, 1]} : vector<8x256xf32> to vector<2x256xf32>
    %c24_102 = arith.constant 24 : index
    %c0_103 = arith.constant 0 : index
    %251 = vector.load %arg14[%c24_102, %c0_103] : memref<64x256xf32, #tpu.memory_space<vmem>>, vector<2x256xf32>
    tpu.vector_store %arg14[%c24_102, %c0_103], %250 {strides = array<i32>} : memref<64x256xf32, #tpu.memory_space<vmem>>, vector<2x256xf32>,
    %252 = vector.extract_strided_slice %249 {offsets = [0, 0], sizes = [2, 256], strides = [1, 1]} : vector<8x256xf32> to vector<2x256xf32>
    %c26 = arith.constant 26 : index
    %c0_104 = arith.constant 0 : index
    %253 = vector.load %arg14[%c26, %c0_104] : memref<64x256xf32, #tpu.memory_space<vmem>>, vector<2x256xf32>
    tpu.vector_store %arg14[%c26, %c0_104], %252 {strides = array<i32>} : memref<64x256xf32, #tpu.memory_space<vmem>>, vector<2x256xf32>,
    %c24_105 = arith.constant 24 : index
    %c0_106 = arith.constant 0 : index
    %254 = vector.load %arg13[%c24_105, %c0_106] : memref<64x256xf32, #tpu.memory_space<vmem>>, vector<8x256xf32>
    %255 = vector.extract_strided_slice %254 {offsets = [2, 0], sizes = [2, 256], strides = [1, 1]} : vector<8x256xf32> to vector<2x256xf32>
    %c32_107 = arith.constant 32 : index
    %c0_108 = arith.constant 0 : index
    %256 = vector.load %arg14[%c32_107, %c0_108] : memref<64x256xf32, #tpu.memory_space<vmem>>, vector<2x256xf32>
    tpu.vector_store %arg14[%c32_107, %c0_108], %255 {strides = array<i32>} : memref<64x256xf32, #tpu.memory_space<vmem>>, vector<2x256xf32>,
    %257 = vector.extract_strided_slice %254 {offsets = [0, 0], sizes = [2, 256], strides = [1, 1]} : vector<8x256xf32> to vector<2x256xf32>
    %c34 = arith.constant 34 : index
    %c0_109 = arith.constant 0 : index
    %258 = vector.load %arg14[%c34, %c0_109] : memref<64x256xf32, #tpu.memory_space<vmem>>, vector<2x256xf32>
    tpu.vector_store %arg14[%c34, %c0_109], %257 {strides = array<i32>} : memref<64x256xf32, #tpu.memory_space<vmem>>, vector<2x256xf32>,
    %c16_110 = arith.constant 16 : index
    %c0_111 = arith.constant 0 : index
    %259 = vector.load %arg13[%c16_110, %c0_111] : memref<64x256xf32, #tpu.memory_space<vmem>>, vector<8x256xf32>
    %260 = vector.extract_strided_slice %259 {offsets = [2, 0], sizes = [2, 256], strides = [1, 1]} : vector<8x256xf32> to vector<2x256xf32>
    %c40_112 = arith.constant 40 : index
    %c0_113 = arith.constant 0 : index
    %261 = vector.load %arg14[%c40_112, %c0_113] : memref<64x256xf32, #tpu.memory_space<vmem>>, vector<2x256xf32>
    tpu.vector_store %arg14[%c40_112, %c0_113], %260 {strides = array<i32>} : memref<64x256xf32, #tpu.memory_space<vmem>>, vector<2x256xf32>,
    %262 = vector.extract_strided_slice %259 {offsets = [0, 0], sizes = [2, 256], strides = [1, 1]} : vector<8x256xf32> to vector<2x256xf32>
    %c42 = arith.constant 42 : index
    %c0_114 = arith.constant 0 : index
    %263 = vector.load %arg14[%c42, %c0_114] : memref<64x256xf32, #tpu.memory_space<vmem>>, vector<2x256xf32>
    tpu.vector_store %arg14[%c42, %c0_114], %262 {strides = array<i32>} : memref<64x256xf32, #tpu.memory_space<vmem>>, vector<2x256xf32>,
    %c8_115 = arith.constant 8 : index
    %c0_116 = arith.constant 0 : index
    %264 = vector.load %arg13[%c8_115, %c0_116] : memref<64x256xf32, #tpu.memory_space<vmem>>, vector<8x256xf32>
    %265 = vector.extract_strided_slice %264 {offsets = [2, 0], sizes = [2, 256], strides = [1, 1]} : vector<8x256xf32> to vector<2x256xf32>
    %c48_117 = arith.constant 48 : index
    %c0_118 = arith.constant 0 : index
    %266 = vector.load %arg14[%c48_117, %c0_118] : memref<64x256xf32, #tpu.memory_space<vmem>>, vector<2x256xf32>
    tpu.vector_store %arg14[%c48_117, %c0_118], %265 {strides = array<i32>} : memref<64x256xf32, #tpu.memory_space<vmem>>, vector<2x256xf32>,
    %267 = vector.extract_strided_slice %264 {offsets = [0, 0], sizes = [2, 256], strides = [1, 1]} : vector<8x256xf32> to vector<2x256xf32>
    %c50 = arith.constant 50 : index
    %c0_119 = arith.constant 0 : index
    %268 = vector.load %arg14[%c50, %c0_119] : memref<64x256xf32, #tpu.memory_space<vmem>>, vector<2x256xf32>
    tpu.vector_store %arg14[%c50, %c0_119], %267 {strides = array<i32>} : memref<64x256xf32, #tpu.memory_space<vmem>>, vector<2x256xf32>,
    %c0_120 = arith.constant 0 : index
    %c0_121 = arith.constant 0 : index
    %269 = vector.load %arg13[%c0_120, %c0_121] : memref<64x256xf32, #tpu.memory_space<vmem>>, vector<8x256xf32>
    %270 = vector.extract_strided_slice %269 {offsets = [2, 0], sizes = [2, 256], strides = [1, 1]} : vector<8x256xf32> to vector<2x256xf32>
    %c56_122 = arith.constant 56 : index
    %c0_123 = arith.constant 0 : index
    %271 = vector.load %arg14[%c56_122, %c0_123] : memref<64x256xf32, #tpu.memory_space<vmem>>, vector<2x256xf32>
    tpu.vector_store %arg14[%c56_122, %c0_123], %270 {strides = array<i32>} : memref<64x256xf32, #tpu.memory_space<vmem>>, vector<2x256xf32>,
    %272 = vector.extract_strided_slice %269 {offsets = [0, 0], sizes = [2, 256], strides = [1, 1]} : vector<8x256xf32> to vector<2x256xf32>
    %c58 = arith.constant 58 : index
    %c0_124 = arith.constant 0 : index
    %273 = vector.load %arg14[%c58, %c0_124] : memref<64x256xf32, #tpu.memory_space<vmem>>, vector<2x256xf32>
    tpu.vector_store %arg14[%c58, %c0_124], %272 {strides = array<i32>} : memref<64x256xf32, #tpu.memory_space<vmem>>, vector<2x256xf32>,
    %c0_125 = arith.constant 0 : index
    %c0_126 = arith.constant 0 : index
    %274 = vector.load %arg13[%c0_125, %c0_126] : memref<64x256xf32, #tpu.memory_space<vmem>>, vector<64x256xf32>
    %c0_127 = arith.constant 0 : index
    %c0_128 = arith.constant 0 : index
    %275 = vector.load %arg14[%c0_127, %c0_128] : memref<64x256xf32, #tpu.memory_space<vmem>>, vector<64x256xf32>
    %276 = tpu.concatenate %274, %275 in 1 : vector<64x256xf32>, vector<64x256xf32> -> vector<64x512xf32>
    %277 = arith.truncf %276 : vector<64x512xf32> to vector<64x512xbf16>
    %c0_129 = arith.constant 0 : index
    %c0_130 = arith.constant 0 : index
    %278 = vector.load %arg4[%c0_129, %c0_130] : memref<512x512xbf16, #tpu.memory_space<vmem>>, vector<512x512xbf16>
    %cst_131 = arith.constant dense<0.000000e+00> : vector<64x512xf32>
    %279 = tpu.matmul %277, %278, %cst_131 {dimension_numbers = #tpu.dot_dimension_numbers<[1], [0], [0], [1], [0, 0, 1, 1], [], []>} : vector<64x512xbf16>, vector<512x512xbf16>, vector<64x512xf32> -> vector<64x512xf32>
    %c0_132 = arith.constant 0 : index
    %c0_133 = arith.constant 0 : index
    %280 = vector.load %arg5[%c0_132, %c0_133] : memref<64x512xf32, #tpu.memory_space<vmem>>, vector<64x512xf32>
    %281 = arith.addf %279, %280 : vector<64x512xf32>
    %c0_134 = arith.constant 0 : index
    %c0_135 = arith.constant 0 : index
    %282 = vector.load %arg12[%c0_134, %c0_135] : memref<64x512xf32, #tpu.memory_space<vmem>>, vector<64x512xf32>
    tpu.vector_store %arg12[%c0_134, %c0_135], %281 {strides = array<i32>} : memref<64x512xf32, #tpu.memory_space<vmem>>, vector<64x512xf32>,
    %c0_136 = arith.constant 0 : index
    %c0_137 = arith.constant 0 : index
    %283 = vector.load %arg6[%c0_136, %c0_137] : memref<256x512xbf16, #tpu.memory_space<vmem>>, vector<256x512xbf16>
    %cst_138 = arith.constant 0.000000e+00 : f32
    %284 = vector.broadcast %cst_138 : f32 to vector<8x128xf32>
    %c0_139 = arith.constant 0 : index
    %c0_140 = arith.constant 0 : index
    %285 = vector.load %arg12[%c0_139, %c0_140] : memref<64x512xf32, #tpu.memory_space<vmem>>, vector<8x512xf32>
    %286 = vector.extract_strided_slice %285 {offsets = [0, 0], sizes = [8, 384], strides = [1, 1]} : vector<8x512xf32> to vector<8x384xf32>
    %cst_141 = arith.constant 5.000000e-01 : f32
    %287 = vector.broadcast %cst_141 : f32 to vector<8x384xf32>
    %288 = arith.mulf %287, %286 : vector<8x384xf32>
    %289 = math.tanh %288 : vector<8x384xf32>
    %cst_142 = arith.constant 5.000000e-01 : f32
    %290 = vector.broadcast %cst_142 : f32 to vector<8x384xf32>
    %291 = arith.mulf %290, %289 : vector<8x384xf32>
    %cst_143 = arith.constant 5.000000e-01 : f32
    %292 = vector.broadcast %cst_143 : f32 to vector<8x384xf32>
    %293 = arith.addf %291, %292 : vector<8x384xf32>
    %294 = vector.extract_strided_slice %285 {offsets = [0, 384], sizes = [8, 128], strides = [1, 1]} : vector<8x512xf32> to vector<8x128xf32>
    %295 = math.tanh %294 : vector<8x128xf32>
    %296 = vector.extract_strided_slice %293 {offsets = [0, 128], sizes = [8, 128], strides = [1, 1]} : vector<8x384xf32> to vector<8x128xf32>
    %297 = arith.mulf %296, %284 : vector<8x128xf32>
    %298 = vector.extract_strided_slice %293 {offsets = [0, 0], sizes = [8, 128], strides = [1, 1]} : vector<8x384xf32> to vector<8x128xf32>
    %299 = arith.mulf %298, %295 : vector<8x128xf32>
    %300 = arith.addf %297, %299 : vector<8x128xf32>
    %301 = vector.extract_strided_slice %293 {offsets = [0, 256], sizes = [8, 128], strides = [1, 1]} : vector<8x384xf32> to vector<8x128xf32>
    %302 = math.tanh %300 : vector<8x128xf32>
    %303 = arith.mulf %301, %302 : vector<8x128xf32>
    %cst_144 = arith.constant 0.000000e+00 : f32
    %304 = vector.broadcast %cst_144 : f32 to vector<8x128xf32>
    %305 = arith.select %2, %303, %304 : vector<8x128xi1>, vector<8x128xf32>
    %cst_145 = arith.constant 0.000000e+00 : f32
    %306 = vector.broadcast %cst_145 : f32 to vector<8x128xf32>
    %307 = arith.select %2, %306, %303 : vector<8x128xi1>, vector<8x128xf32>
    %308 = tpu.concatenate %305, %307 in 1 : vector<8x128xf32>, vector<8x128xf32> -> vector<8x256xf32>
    %c8_146 = arith.constant 8 : index
    %c0_147 = arith.constant 0 : index
    %309 = vector.load %arg12[%c8_146, %c0_147] : memref<64x512xf32, #tpu.memory_space<vmem>>, vector<8x512xf32>
    %310 = arith.truncf %308 : vector<8x256xf32> to vector<8x256xbf16>
    %cst_148 = arith.constant dense<0.000000e+00> : vector<8x512xf32>
    %311 = tpu.matmul %310, %283, %cst_148 {dimension_numbers = #tpu.dot_dimension_numbers<[1], [0], [0], [1], [0, 0, 1, 1], [], []>} : vector<8x256xbf16>, vector<256x512xbf16>, vector<8x512xf32> -> vector<8x512xf32>
    %312 = arith.addf %309, %311 : vector<8x512xf32>
    %313 = vector.extract_strided_slice %312 {offsets = [0, 0], sizes = [8, 384], strides = [1, 1]} : vector<8x512xf32> to vector<8x384xf32>
    %cst_149 = arith.constant 5.000000e-01 : f32
    %314 = vector.broadcast %cst_149 : f32 to vector<8x384xf32>
    %315 = arith.mulf %314, %313 : vector<8x384xf32>
    %316 = math.tanh %315 : vector<8x384xf32>
    %cst_150 = arith.constant 5.000000e-01 : f32
    %317 = vector.broadcast %cst_150 : f32 to vector<8x384xf32>
    %318 = arith.mulf %317, %316 : vector<8x384xf32>
    %cst_151 = arith.constant 5.000000e-01 : f32
    %319 = vector.broadcast %cst_151 : f32 to vector<8x384xf32>
    %320 = arith.addf %318, %319 : vector<8x384xf32>
    %321 = vector.extract_strided_slice %312 {offsets = [0, 384], sizes = [8, 128], strides = [1, 1]} : vector<8x512xf32> to vector<8x128xf32>
    %322 = math.tanh %321 : vector<8x128xf32>
    %323 = vector.extract_strided_slice %320 {offsets = [0, 128], sizes = [8, 128], strides = [1, 1]} : vector<8x384xf32> to vector<8x128xf32>
    %324 = arith.mulf %323, %300 : vector<8x128xf32>
    %325 = vector.extract_strided_slice %320 {offsets = [0, 0], sizes = [8, 128], strides = [1, 1]} : vector<8x384xf32> to vector<8x128xf32>
    %326 = arith.mulf %325, %322 : vector<8x128xf32>
    %327 = arith.addf %324, %326 : vector<8x128xf32>
    %328 = vector.extract_strided_slice %320 {offsets = [0, 256], sizes = [8, 128], strides = [1, 1]} : vector<8x384xf32> to vector<8x128xf32>
    %329 = math.tanh %327 : vector<8x128xf32>
    %330 = arith.mulf %328, %329 : vector<8x128xf32>
    %cst_152 = arith.constant 0.000000e+00 : f32
    %331 = vector.broadcast %cst_152 : f32 to vector<8x128xf32>
    %332 = arith.select %2, %330, %331 : vector<8x128xi1>, vector<8x128xf32>
    %cst_153 = arith.constant 0.000000e+00 : f32
    %333 = vector.broadcast %cst_153 : f32 to vector<8x128xf32>
    %334 = arith.select %2, %333, %330 : vector<8x128xi1>, vector<8x128xf32>
    %335 = tpu.concatenate %332, %334 in 1 : vector<8x128xf32>, vector<8x128xf32> -> vector<8x256xf32>
    %336 = arith.maximumf %303, %330 : vector<8x128xf32>
    %c16_154 = arith.constant 16 : index
    %c0_155 = arith.constant 0 : index
    %337 = vector.load %arg12[%c16_154, %c0_155] : memref<64x512xf32, #tpu.memory_space<vmem>>, vector<8x512xf32>
    %338 = arith.truncf %335 : vector<8x256xf32> to vector<8x256xbf16>
    %cst_156 = arith.constant dense<0.000000e+00> : vector<8x512xf32>
    %339 = tpu.matmul %338, %283, %cst_156 {dimension_numbers = #tpu.dot_dimension_numbers<[1], [0], [0], [1], [0, 0, 1, 1], [], []>} : vector<8x256xbf16>, vector<256x512xbf16>, vector<8x512xf32> -> vector<8x512xf32>
    %340 = arith.addf %337, %339 : vector<8x512xf32>
    %341 = vector.extract_strided_slice %340 {offsets = [0, 0], sizes = [8, 384], strides = [1, 1]} : vector<8x512xf32> to vector<8x384xf32>
    %cst_157 = arith.constant 5.000000e-01 : f32
    %342 = vector.broadcast %cst_157 : f32 to vector<8x384xf32>
    %343 = arith.mulf %342, %341 : vector<8x384xf32>
    %344 = math.tanh %343 : vector<8x384xf32>
    %cst_158 = arith.constant 5.000000e-01 : f32
    %345 = vector.broadcast %cst_158 : f32 to vector<8x384xf32>
    %346 = arith.mulf %345, %344 : vector<8x384xf32>
    %cst_159 = arith.constant 5.000000e-01 : f32
    %347 = vector.broadcast %cst_159 : f32 to vector<8x384xf32>
    %348 = arith.addf %346, %347 : vector<8x384xf32>
    %349 = vector.extract_strided_slice %340 {offsets = [0, 384], sizes = [8, 128], strides = [1, 1]} : vector<8x512xf32> to vector<8x128xf32>
    %350 = math.tanh %349 : vector<8x128xf32>
    %351 = vector.extract_strided_slice %348 {offsets = [0, 128], sizes = [8, 128], strides = [1, 1]} : vector<8x384xf32> to vector<8x128xf32>
    %352 = arith.mulf %351, %327 : vector<8x128xf32>
    %353 = vector.extract_strided_slice %348 {offsets = [0, 0], sizes = [8, 128], strides = [1, 1]} : vector<8x384xf32> to vector<8x128xf32>
    %354 = arith.mulf %353, %350 : vector<8x128xf32>
    %355 = arith.addf %352, %354 : vector<8x128xf32>
    %356 = vector.extract_strided_slice %348 {offsets = [0, 256], sizes = [8, 128], strides = [1, 1]} : vector<8x384xf32> to vector<8x128xf32>
    %357 = math.tanh %355 : vector<8x128xf32>
    %358 = arith.mulf %356, %357 : vector<8x128xf32>
    %cst_160 = arith.constant 0.000000e+00 : f32
    %359 = vector.broadcast %cst_160 : f32 to vector<8x128xf32>
    %360 = arith.select %2, %358, %359 : vector<8x128xi1>, vector<8x128xf32>
    %cst_161 = arith.constant 0.000000e+00 : f32
    %361 = vector.broadcast %cst_161 : f32 to vector<8x128xf32>
    %362 = arith.select %2, %361, %358 : vector<8x128xi1>, vector<8x128xf32>
    %363 = tpu.concatenate %360, %362 in 1 : vector<8x128xf32>, vector<8x128xf32> -> vector<8x256xf32>
    %364 = arith.maximumf %336, %358 : vector<8x128xf32>
    %c24_162 = arith.constant 24 : index
    %c0_163 = arith.constant 0 : index
    %365 = vector.load %arg12[%c24_162, %c0_163] : memref<64x512xf32, #tpu.memory_space<vmem>>, vector<8x512xf32>
    %366 = arith.truncf %363 : vector<8x256xf32> to vector<8x256xbf16>
    %cst_164 = arith.constant dense<0.000000e+00> : vector<8x512xf32>
    %367 = tpu.matmul %366, %283, %cst_164 {dimension_numbers = #tpu.dot_dimension_numbers<[1], [0], [0], [1], [0, 0, 1, 1], [], []>} : vector<8x256xbf16>, vector<256x512xbf16>, vector<8x512xf32> -> vector<8x512xf32>
    %368 = arith.addf %365, %367 : vector<8x512xf32>
    %369 = vector.extract_strided_slice %368 {offsets = [0, 0], sizes = [8, 384], strides = [1, 1]} : vector<8x512xf32> to vector<8x384xf32>
    %cst_165 = arith.constant 5.000000e-01 : f32
    %370 = vector.broadcast %cst_165 : f32 to vector<8x384xf32>
    %371 = arith.mulf %370, %369 : vector<8x384xf32>
    %372 = math.tanh %371 : vector<8x384xf32>
    %cst_166 = arith.constant 5.000000e-01 : f32
    %373 = vector.broadcast %cst_166 : f32 to vector<8x384xf32>
    %374 = arith.mulf %373, %372 : vector<8x384xf32>
    %cst_167 = arith.constant 5.000000e-01 : f32
    %375 = vector.broadcast %cst_167 : f32 to vector<8x384xf32>
    %376 = arith.addf %374, %375 : vector<8x384xf32>
    %377 = vector.extract_strided_slice %368 {offsets = [0, 384], sizes = [8, 128], strides = [1, 1]} : vector<8x512xf32> to vector<8x128xf32>
    %378 = math.tanh %377 : vector<8x128xf32>
    %379 = vector.extract_strided_slice %376 {offsets = [0, 128], sizes = [8, 128], strides = [1, 1]} : vector<8x384xf32> to vector<8x128xf32>
    %380 = arith.mulf %379, %355 : vector<8x128xf32>
    %381 = vector.extract_strided_slice %376 {offsets = [0, 0], sizes = [8, 128], strides = [1, 1]} : vector<8x384xf32> to vector<8x128xf32>
    %382 = arith.mulf %381, %378 : vector<8x128xf32>
    %383 = arith.addf %380, %382 : vector<8x128xf32>
    %384 = vector.extract_strided_slice %376 {offsets = [0, 256], sizes = [8, 128], strides = [1, 1]} : vector<8x384xf32> to vector<8x128xf32>
    %385 = math.tanh %383 : vector<8x128xf32>
    %386 = arith.mulf %384, %385 : vector<8x128xf32>
    %cst_168 = arith.constant 0.000000e+00 : f32
    %387 = vector.broadcast %cst_168 : f32 to vector<8x128xf32>
    %388 = arith.select %2, %386, %387 : vector<8x128xi1>, vector<8x128xf32>
    %cst_169 = arith.constant 0.000000e+00 : f32
    %389 = vector.broadcast %cst_169 : f32 to vector<8x128xf32>
    %390 = arith.select %2, %389, %386 : vector<8x128xi1>, vector<8x128xf32>
    %391 = tpu.concatenate %388, %390 in 1 : vector<8x128xf32>, vector<8x128xf32> -> vector<8x256xf32>
    %392 = arith.maximumf %364, %386 : vector<8x128xf32>
    %c32_170 = arith.constant 32 : index
    %c0_171 = arith.constant 0 : index
    %393 = vector.load %arg12[%c32_170, %c0_171] : memref<64x512xf32, #tpu.memory_space<vmem>>, vector<8x512xf32>
    %394 = arith.truncf %391 : vector<8x256xf32> to vector<8x256xbf16>
    %cst_172 = arith.constant dense<0.000000e+00> : vector<8x512xf32>
    %395 = tpu.matmul %394, %283, %cst_172 {dimension_numbers = #tpu.dot_dimension_numbers<[1], [0], [0], [1], [0, 0, 1, 1], [], []>} : vector<8x256xbf16>, vector<256x512xbf16>, vector<8x512xf32> -> vector<8x512xf32>
    %396 = arith.addf %393, %395 : vector<8x512xf32>
    %397 = vector.extract_strided_slice %396 {offsets = [0, 0], sizes = [8, 384], strides = [1, 1]} : vector<8x512xf32> to vector<8x384xf32>
    %cst_173 = arith.constant 5.000000e-01 : f32
    %398 = vector.broadcast %cst_173 : f32 to vector<8x384xf32>
    %399 = arith.mulf %398, %397 : vector<8x384xf32>
    %400 = math.tanh %399 : vector<8x384xf32>
    %cst_174 = arith.constant 5.000000e-01 : f32
    %401 = vector.broadcast %cst_174 : f32 to vector<8x384xf32>
    %402 = arith.mulf %401, %400 : vector<8x384xf32>
    %cst_175 = arith.constant 5.000000e-01 : f32
    %403 = vector.broadcast %cst_175 : f32 to vector<8x384xf32>
    %404 = arith.addf %402, %403 : vector<8x384xf32>
    %405 = vector.extract_strided_slice %396 {offsets = [0, 384], sizes = [8, 128], strides = [1, 1]} : vector<8x512xf32> to vector<8x128xf32>
    %406 = math.tanh %405 : vector<8x128xf32>
    %407 = vector.extract_strided_slice %404 {offsets = [0, 128], sizes = [8, 128], strides = [1, 1]} : vector<8x384xf32> to vector<8x128xf32>
    %408 = arith.mulf %407, %383 : vector<8x128xf32>
    %409 = vector.extract_strided_slice %404 {offsets = [0, 0], sizes = [8, 128], strides = [1, 1]} : vector<8x384xf32> to vector<8x128xf32>
    %410 = arith.mulf %409, %406 : vector<8x128xf32>
    %411 = arith.addf %408, %410 : vector<8x128xf32>
    %412 = vector.extract_strided_slice %404 {offsets = [0, 256], sizes = [8, 128], strides = [1, 1]} : vector<8x384xf32> to vector<8x128xf32>
    %413 = math.tanh %411 : vector<8x128xf32>
    %414 = arith.mulf %412, %413 : vector<8x128xf32>
    %cst_176 = arith.constant 0.000000e+00 : f32
    %415 = vector.broadcast %cst_176 : f32 to vector<8x128xf32>
    %416 = arith.select %2, %414, %415 : vector<8x128xi1>, vector<8x128xf32>
    %cst_177 = arith.constant 0.000000e+00 : f32
    %417 = vector.broadcast %cst_177 : f32 to vector<8x128xf32>
    %418 = arith.select %2, %417, %414 : vector<8x128xi1>, vector<8x128xf32>
    %419 = tpu.concatenate %416, %418 in 1 : vector<8x128xf32>, vector<8x128xf32> -> vector<8x256xf32>
    %420 = arith.maximumf %392, %414 : vector<8x128xf32>
    %c40_178 = arith.constant 40 : index
    %c0_179 = arith.constant 0 : index
    %421 = vector.load %arg12[%c40_178, %c0_179] : memref<64x512xf32, #tpu.memory_space<vmem>>, vector<8x512xf32>
    %422 = arith.truncf %419 : vector<8x256xf32> to vector<8x256xbf16>
    %cst_180 = arith.constant dense<0.000000e+00> : vector<8x512xf32>
    %423 = tpu.matmul %422, %283, %cst_180 {dimension_numbers = #tpu.dot_dimension_numbers<[1], [0], [0], [1], [0, 0, 1, 1], [], []>} : vector<8x256xbf16>, vector<256x512xbf16>, vector<8x512xf32> -> vector<8x512xf32>
    %424 = arith.addf %421, %423 : vector<8x512xf32>
    %425 = vector.extract_strided_slice %424 {offsets = [0, 0], sizes = [8, 384], strides = [1, 1]} : vector<8x512xf32> to vector<8x384xf32>
    %cst_181 = arith.constant 5.000000e-01 : f32
    %426 = vector.broadcast %cst_181 : f32 to vector<8x384xf32>
    %427 = arith.mulf %426, %425 : vector<8x384xf32>
    %428 = math.tanh %427 : vector<8x384xf32>
    %cst_182 = arith.constant 5.000000e-01 : f32
    %429 = vector.broadcast %cst_182 : f32 to vector<8x384xf32>
    %430 = arith.mulf %429, %428 : vector<8x384xf32>
    %cst_183 = arith.constant 5.000000e-01 : f32
    %431 = vector.broadcast %cst_183 : f32 to vector<8x384xf32>
    %432 = arith.addf %430, %431 : vector<8x384xf32>
    %433 = vector.extract_strided_slice %424 {offsets = [0, 384], sizes = [8, 128], strides = [1, 1]} : vector<8x512xf32> to vector<8x128xf32>
    %434 = math.tanh %433 : vector<8x128xf32>
    %435 = vector.extract_strided_slice %432 {offsets = [0, 128], sizes = [8, 128], strides = [1, 1]} : vector<8x384xf32> to vector<8x128xf32>
    %436 = arith.mulf %435, %411 : vector<8x128xf32>
    %437 = vector.extract_strided_slice %432 {offsets = [0, 0], sizes = [8, 128], strides = [1, 1]} : vector<8x384xf32> to vector<8x128xf32>
    %438 = arith.mulf %437, %434 : vector<8x128xf32>
    %439 = arith.addf %436, %438 : vector<8x128xf32>
    %440 = vector.extract_strided_slice %432 {offsets = [0, 256], sizes = [8, 128], strides = [1, 1]} : vector<8x384xf32> to vector<8x128xf32>
    %441 = math.tanh %439 : vector<8x128xf32>
    %442 = arith.mulf %440, %441 : vector<8x128xf32>
    %cst_184 = arith.constant 0.000000e+00 : f32
    %443 = vector.broadcast %cst_184 : f32 to vector<8x128xf32>
    %444 = arith.select %2, %442, %443 : vector<8x128xi1>, vector<8x128xf32>
    %cst_185 = arith.constant 0.000000e+00 : f32
    %445 = vector.broadcast %cst_185 : f32 to vector<8x128xf32>
    %446 = arith.select %2, %445, %442 : vector<8x128xi1>, vector<8x128xf32>
    %447 = tpu.concatenate %444, %446 in 1 : vector<8x128xf32>, vector<8x128xf32> -> vector<8x256xf32>
    %448 = arith.maximumf %420, %442 : vector<8x128xf32>
    %c48_186 = arith.constant 48 : index
    %c0_187 = arith.constant 0 : index
    %449 = vector.load %arg12[%c48_186, %c0_187] : memref<64x512xf32, #tpu.memory_space<vmem>>, vector<8x512xf32>
    %450 = arith.truncf %447 : vector<8x256xf32> to vector<8x256xbf16>
    %cst_188 = arith.constant dense<0.000000e+00> : vector<8x512xf32>
    %451 = tpu.matmul %450, %283, %cst_188 {dimension_numbers = #tpu.dot_dimension_numbers<[1], [0], [0], [1], [0, 0, 1, 1], [], []>} : vector<8x256xbf16>, vector<256x512xbf16>, vector<8x512xf32> -> vector<8x512xf32>
    %452 = arith.addf %449, %451 : vector<8x512xf32>
    %453 = vector.extract_strided_slice %452 {offsets = [0, 0], sizes = [8, 384], strides = [1, 1]} : vector<8x512xf32> to vector<8x384xf32>
    %cst_189 = arith.constant 5.000000e-01 : f32
    %454 = vector.broadcast %cst_189 : f32 to vector<8x384xf32>
    %455 = arith.mulf %454, %453 : vector<8x384xf32>
    %456 = math.tanh %455 : vector<8x384xf32>
    %cst_190 = arith.constant 5.000000e-01 : f32
    %457 = vector.broadcast %cst_190 : f32 to vector<8x384xf32>
    %458 = arith.mulf %457, %456 : vector<8x384xf32>
    %cst_191 = arith.constant 5.000000e-01 : f32
    %459 = vector.broadcast %cst_191 : f32 to vector<8x384xf32>
    %460 = arith.addf %458, %459 : vector<8x384xf32>
    %461 = vector.extract_strided_slice %452 {offsets = [0, 384], sizes = [8, 128], strides = [1, 1]} : vector<8x512xf32> to vector<8x128xf32>
    %462 = math.tanh %461 : vector<8x128xf32>
    %463 = vector.extract_strided_slice %460 {offsets = [0, 128], sizes = [8, 128], strides = [1, 1]} : vector<8x384xf32> to vector<8x128xf32>
    %464 = arith.mulf %463, %439 : vector<8x128xf32>
    %465 = vector.extract_strided_slice %460 {offsets = [0, 0], sizes = [8, 128], strides = [1, 1]} : vector<8x384xf32> to vector<8x128xf32>
    %466 = arith.mulf %465, %462 : vector<8x128xf32>
    %467 = arith.addf %464, %466 : vector<8x128xf32>
    %468 = vector.extract_strided_slice %460 {offsets = [0, 256], sizes = [8, 128], strides = [1, 1]} : vector<8x384xf32> to vector<8x128xf32>
    %469 = math.tanh %467 : vector<8x128xf32>
    %470 = arith.mulf %468, %469 : vector<8x128xf32>
    %cst_192 = arith.constant 0.000000e+00 : f32
    %471 = vector.broadcast %cst_192 : f32 to vector<8x128xf32>
    %472 = arith.select %2, %470, %471 : vector<8x128xi1>, vector<8x128xf32>
    %cst_193 = arith.constant 0.000000e+00 : f32
    %473 = vector.broadcast %cst_193 : f32 to vector<8x128xf32>
    %474 = arith.select %2, %473, %470 : vector<8x128xi1>, vector<8x128xf32>
    %475 = tpu.concatenate %472, %474 in 1 : vector<8x128xf32>, vector<8x128xf32> -> vector<8x256xf32>
    %476 = arith.maximumf %448, %470 : vector<8x128xf32>
    %c56_194 = arith.constant 56 : index
    %c0_195 = arith.constant 0 : index
    %477 = vector.load %arg12[%c56_194, %c0_195] : memref<64x512xf32, #tpu.memory_space<vmem>>, vector<8x512xf32>
    %478 = arith.truncf %475 : vector<8x256xf32> to vector<8x256xbf16>
    %cst_196 = arith.constant dense<0.000000e+00> : vector<8x512xf32>
    %479 = tpu.matmul %478, %283, %cst_196 {dimension_numbers = #tpu.dot_dimension_numbers<[1], [0], [0], [1], [0, 0, 1, 1], [], []>} : vector<8x256xbf16>, vector<256x512xbf16>, vector<8x512xf32> -> vector<8x512xf32>
    %480 = arith.addf %477, %479 : vector<8x512xf32>
    %481 = vector.extract_strided_slice %480 {offsets = [0, 0], sizes = [8, 384], strides = [1, 1]} : vector<8x512xf32> to vector<8x384xf32>
    %cst_197 = arith.constant 5.000000e-01 : f32
    %482 = vector.broadcast %cst_197 : f32 to vector<8x384xf32>
    %483 = arith.mulf %482, %481 : vector<8x384xf32>
    %484 = math.tanh %483 : vector<8x384xf32>
    %cst_198 = arith.constant 5.000000e-01 : f32
    %485 = vector.broadcast %cst_198 : f32 to vector<8x384xf32>
    %486 = arith.mulf %485, %484 : vector<8x384xf32>
    %cst_199 = arith.constant 5.000000e-01 : f32
    %487 = vector.broadcast %cst_199 : f32 to vector<8x384xf32>
    %488 = arith.addf %486, %487 : vector<8x384xf32>
    %489 = vector.extract_strided_slice %480 {offsets = [0, 384], sizes = [8, 128], strides = [1, 1]} : vector<8x512xf32> to vector<8x128xf32>
    %490 = math.tanh %489 : vector<8x128xf32>
    %491 = vector.extract_strided_slice %488 {offsets = [0, 128], sizes = [8, 128], strides = [1, 1]} : vector<8x384xf32> to vector<8x128xf32>
    %492 = arith.mulf %491, %467 : vector<8x128xf32>
    %493 = vector.extract_strided_slice %488 {offsets = [0, 0], sizes = [8, 128], strides = [1, 1]} : vector<8x384xf32> to vector<8x128xf32>
    %494 = arith.mulf %493, %490 : vector<8x128xf32>
    %495 = arith.addf %492, %494 : vector<8x128xf32>
    %496 = vector.extract_strided_slice %488 {offsets = [0, 256], sizes = [8, 128], strides = [1, 1]} : vector<8x384xf32> to vector<8x128xf32>
    %497 = math.tanh %495 : vector<8x128xf32>
    %498 = arith.mulf %496, %497 : vector<8x128xf32>
    %499 = arith.maximumf %476, %498 : vector<8x128xf32>
    %500 = vector.extract_strided_slice %499 {offsets = [0, 0], sizes = [2, 128], strides = [1, 1]} : vector<8x128xf32> to vector<2x128xf32>
    %501 = vector.extract_strided_slice %499 {offsets = [2, 0], sizes = [2, 128], strides = [1, 1]} : vector<8x128xf32> to vector<2x128xf32>
    %502 = tpu.concatenate %500, %501 in 1 : vector<2x128xf32>, vector<2x128xf32> -> vector<2x256xf32>
    %503 = arith.truncf %502 : vector<2x256xf32> to vector<2x256xbf16>
    %c0_200 = arith.constant 0 : index
    %c0_201 = arith.constant 0 : index
    %504 = vector.load %arg7[%c0_200, %c0_201] : memref<256x128xbf16, #tpu.memory_space<vmem>>, vector<256x128xbf16>
    %cst_202 = arith.constant dense<0.000000e+00> : vector<2x128xf32>
    %505 = tpu.matmul %503, %504, %cst_202 {dimension_numbers = #tpu.dot_dimension_numbers<[1], [0], [0], [1], [0, 0, 1, 1], [], []>} : vector<2x256xbf16>, vector<256x128xbf16>, vector<2x128xf32> -> vector<2x128xf32>
    %c0_203 = arith.constant 0 : index
    %c0_204 = arith.constant 0 : index
    %506 = vector.load %arg8[%c0_203, %c0_204] : memref<1x128xf32, #tpu.memory_space<vmem>>, vector<1x128xf32>
    %507 = vector.broadcast %506 : vector<1x128xf32> to vector<2x128xf32>
    %508 = arith.addf %505, %507 : vector<2x128xf32>
    %cst_205 = arith.constant 0.000000e+00 : f32
    %509 = vector.broadcast %cst_205 : f32 to vector<2x128xf32>
    %510 = arith.maximumf %508, %509 : vector<2x128xf32>
    %511 = arith.truncf %510 : vector<2x128xf32> to vector<2x128xbf16>
    %c0_206 = arith.constant 0 : index
    %c0_207 = arith.constant 0 : index
    %512 = vector.load %arg9[%c0_206, %c0_207] : memref<128x4xbf16, #tpu.memory_space<vmem>>, vector<128x4xbf16>
    %cst_208 = arith.constant dense<0.000000e+00> : vector<2x4xf32>
    %513 = tpu.matmul %511, %512, %cst_208 {dimension_numbers = #tpu.dot_dimension_numbers<[1], [0], [0], [1], [0, 0, 1, 1], [], []>} : vector<2x128xbf16>, vector<128x4xbf16>, vector<2x4xf32> -> vector<2x4xf32>
    %c0_209 = arith.constant 0 : index
    %c0_210 = arith.constant 0 : index
    %514 = vector.load %arg10[%c0_209, %c0_210] : memref<1x4xf32, #tpu.memory_space<vmem>>, vector<1x4xf32>
    %515 = vector.broadcast %514 : vector<1x4xf32> to vector<2x4xf32>
    %516 = arith.addf %513, %515 : vector<2x4xf32>
    %c0_211 = arith.constant 0 : index
    %c0_212 = arith.constant 0 : index
    %517 = vector.load %arg11[%c0_211, %c0_212] : memref<2x4xf32, #tpu.memory_space<vmem>>, vector<2x4xf32>
    tpu.vector_store %arg11[%c0_211, %c0_212], %516 {strides = array<i32>} : memref<2x4xf32, #tpu.memory_space<vmem>>, vector<2x4xf32>,
    return
  }
}

</mosaic_0001>

<llo_original>
// kernel: lstm_model_forward.1
$region0: #{lstm_model_forward.1}
  #allocation0 [shape = 'u32[]', space=smem, size = 0x4, offset = 0x4, fixed_abs, tag = 'smem constant byte address 0x4 - core index']
  #allocation1 [shape = 'u32[144,128]{1,0:T(1,128)}', space=vmem, size = 0x12000, scoped, tag = 'internal scratch']
  #allocation2 [shape = 'f32[64,512]{1,0:T(8,128)}', space=vmem, size = 0x20000, scoped, tag = 'scratch operand']
  #allocation3 [shape = 'f32[64,256]{1,0:T(8,128)}', space=vmem, size = 0x10000, scoped, tag = 'scratch operand']
  #allocation4 [shape = 'f32[64,256]{1,0:T(8,128)}', space=vmem, size = 0x10000, scoped, tag = 'scratch operand']
  %s0 = inlined_call_operand.vmem [shape: bf16[64,32], index: 0, kind: input, shape index: {}]
  %s1 = inlined_call_operand.hbm [shape: bf16[32,512], index: 1, kind: input, shape index: {}]
  %s2 = inlined_call_operand.vmem [shape: f32[64,512], index: 2, kind: input, shape index: {}]
  %s3 = inlined_call_operand.hbm [shape: bf16[256,512], index: 3, kind: input, shape index: {}]
  %s4 = inlined_call_operand.hbm [shape: bf16[512,512], index: 4, kind: input, shape index: {}]
  %s5 = inlined_call_operand.hbm [shape: f32[64,512], index: 5, kind: input, shape index: {}]
  %s6 = inlined_call_operand.hbm [shape: bf16[256,512], index: 6, kind: input, shape index: {}]
  %s7 = inlined_call_operand.hbm [shape: bf16[256,128], index: 7, kind: input, shape index: {}]
  %s8 = inlined_call_operand.vmem [shape: f32[1,128], index: 8, kind: input, shape index: {}]
  %s9 = inlined_call_operand.vmem [shape: bf16[128,4], index: 9, kind: input, shape index: {}]
  %s10 = inlined_call_operand.vmem [shape: f32[1,4], index: 10, kind: input, shape index: {}]
  %s11 = inlined_call_operand.hbm [shape: f32[2,4], index: 11, kind: output, shape index: {}]
  %s12 = sld [smem:[#allocation0]]
  $region78: #{lstm_model_forward.1} parent=0
    _
  %s14 = ssub.s32 1, %s12
  %s15 = scalar_select 0, %s14, %s12
  $region1: #{lstm_model_forward.1} parent=0
    #allocation5 [shape = 'u8[32768]{0}', space=vmem, size = 0x8000, scoped, tag = 'input window, operand 1, single buffered']
    #allocation6 [shape = 's32[1]{0}', space=sflag, size = 0x4, scoped, tag = 'scoped memory for lstm_model_forward.1']
    #allocation7 [shape = 's32[1]{0}', space=sflag, size = 0x4, scoped, tag = 'scoped memory for lstm_model_forward.1']
    #allocation8 [shape = 'u8[262144]{0}', space=vmem, size = 0x40000, scoped, tag = 'input window, operand 3, single buffered']
    #allocation9 [shape = 's32[1]{0}', space=sflag, size = 0x4, scoped, tag = 'scoped memory for lstm_model_forward.1']
    #allocation10 [shape = 'u8[524288]{0}', space=vmem, size = 0x80000, scoped, tag = 'input window, operand 4, single buffered']
    #allocation11 [shape = 'u8[131072]{0}', space=vmem, size = 0x20000, scoped, tag = 'input window, operand 5, single buffered']
    #allocation12 [shape = 's32[1]{0}', space=sflag, size = 0x4, scoped, tag = 'scoped memory for lstm_model_forward.1']
    #allocation13 [shape = 'u8[262144]{0}', space=vmem, size = 0x40000, scoped, tag = 'input window, operand 6, single buffered']
    #allocation14 [shape = 'u8[65536]{0}', space=vmem, size = 0x10000, scoped, tag = 'input window, operand 7, single buffered']
    #allocation15 [shape = 's32[1]{0}', space=sflag, size = 0x4, scoped, tag = 'scoped memory for lstm_model_forward.1']
    #allocation16 [shape = 'u8[1024]{0}', space=vmem, size = 0x400, scoped, tag = 'output window, operand 0, single buffered']
    %16 = vsyncpa [#allocation6], 0
    %17 = vsyncpa [#allocation9], 0
    %18 = vsyncpa [#allocation12], 0
    %19 = vsyncpa [#allocation15], 0
    %20 = vsyncpa [#allocation7], 0
    // Predicated region
    $region2: #{lstm_model_forward.1} parent=1 // pred_check
      _
    $region3: #{lstm_model_forward.1} parent=1 // pred_check_branch
      %22 = sbr.rel (0) target = $region5
    $region4: #{lstm_model_forward.1} parent=1 // pred_region
      _
    $region5: #{lstm_model_forward.1} parent=1 // pred_fallthru
      _
    // Predicated region
    $region6: #{lstm_model_forward.1} parent=1 // pred_check
      _
    $region7: #{lstm_model_forward.1} parent=1 // pred_check_branch
      %24 = sbr.rel (0) target = $region9
    $region8: #{lstm_model_forward.1} parent=1 // pred_region
      %s26 = ssub.s32 1024, 1024
      %27 = vsyncadd [#allocation6], %s26
      %s28 = sshll.u32 [#allocation5], 4
      %s29 = int_to_ptr.vmem [resolvable:$true] %s28
      %34 = dma.hbm_to_vmem [thread:$0]  %s1, 1024, %s29, [#allocation6], 256, 256, 16
    $region9: #{lstm_model_forward.1} parent=1 // pred_fallthru
      _
    // Predicated region
    $region10: #{lstm_model_forward.1} parent=1 // pred_check
      _
    $region11: #{lstm_model_forward.1} parent=1 // pred_check_branch
      %36 = sbr.rel (0) target = $region13
    $region12: #{lstm_model_forward.1} parent=1 // pred_region
      _
    $region13: #{lstm_model_forward.1} parent=1 // pred_fallthru
      _
    // Predicated region
    $region14: #{lstm_model_forward.1} parent=1 // pred_check
      _
    $region15: #{lstm_model_forward.1} parent=1 // pred_check_branch
      %38 = sbr.rel (0) target = $region17
    $region16: #{lstm_model_forward.1} parent=1 // pred_region
      %s40 = ssub.s32 8192, 8192
      %41 = vsyncadd [#allocation9], %s40
      %s42 = sshll.u32 [#allocation8], 4
      %s43 = int_to_ptr.vmem [resolvable:$true] %s42
      %48 = dma.hbm_to_vmem [thread:$0]  %s3, 8192, %s43, [#allocation9], 256, 256, 16
    $region17: #{lstm_model_forward.1} parent=1 // pred_fallthru
      _
    // Predicated region
    $region18: #{lstm_model_forward.1} parent=1 // pred_check
      _
    $region19: #{lstm_model_forward.1} parent=1 // pred_check_branch
      %50 = sbr.rel (0) target = $region21
    $region20: #{lstm_model_forward.1} parent=1 // pred_region
      %s52 = ssub.s32 16384, 16384
      %53 = vsyncadd [#allocation9], %s52
      %s54 = sshll.u32 [#allocation10], 4
      %s55 = int_to_ptr.vmem [resolvable:$true] %s54
      %60 = dma.hbm_to_vmem [thread:$0]  %s4, 16384, %s55, [#allocation9], 256, 256, 16
    $region21: #{lstm_model_forward.1} parent=1 // pred_fallthru
      _
    // Predicated region
    $region22: #{lstm_model_forward.1} parent=1 // pred_check
      _
    $region23: #{lstm_model_forward.1} parent=1 // pred_check_branch
      %62 = sbr.rel (0) target = $region25
    $region24: #{lstm_model_forward.1} parent=1 // pred_region
      %s64 = ssub.s32 4096, 4096
      %65 = vsyncadd [#allocation12], %s64
      %s66 = sshll.u32 [#allocation11], 4
      %s67 = int_to_ptr.vmem [resolvable:$true] %s66
      %72 = dma.hbm_to_vmem [thread:$0]  %s5, 4096, %s67, [#allocation12], 512, 512, 32
    $region25: #{lstm_model_forward.1} parent=1 // pred_fallthru
      _
    // Predicated region
    $region26: #{lstm_model_forward.1} parent=1 // pred_check
      _
    $region27: #{lstm_model_forward.1} parent=1 // pred_check_branch
      %74 = sbr.rel (0) target = $region29
    $region28: #{lstm_model_forward.1} parent=1 // pred_region
      %s76 = ssub.s32 8192, 8192
      %77 = vsyncadd [#allocation12], %s76
      %s78 = sshll.u32 [#allocation13], 4
      %s79 = int_to_ptr.vmem [resolvable:$true] %s78
      %84 = dma.hbm_to_vmem [thread:$0]  %s6, 8192, %s79, [#allocation12], 256, 256, 16
    $region29: #{lstm_model_forward.1} parent=1 // pred_fallthru
      _
    // Predicated region
    $region30: #{lstm_model_forward.1} parent=1 // pred_check
      _
    $region31: #{lstm_model_forward.1} parent=1 // pred_check_branch
      %86 = sbr.rel (0) target = $region33
    $region32: #{lstm_model_forward.1} parent=1 // pred_region
      %s88 = ssub.s32 2048, 2048
      %89 = vsyncadd [#allocation15], %s88
      %s90 = sshll.u32 [#allocation14], 4
      %s91 = int_to_ptr.vmem [resolvable:$true] %s90
      %96 = dma.hbm_to_vmem [thread:$0]  %s7, 2048, %s91, [#allocation15], 64, 64, 4
    $region33: #{lstm_model_forward.1} parent=1 // pred_fallthru
      _
    // Predicated region
    $region34: #{lstm_model_forward.1} parent=1 // pred_check
      _
    $region35: #{lstm_model_forward.1} parent=1 // pred_check_branch
      %98 = sbr.rel (0) target = $region37
    $region36: #{lstm_model_forward.1} parent=1 // pred_region
      _
    $region37: #{lstm_model_forward.1} parent=1 // pred_fallthru
      _
    // Predicated region
    $region38: #{lstm_model_forward.1} parent=1 // pred_check
      _
    $region39: #{lstm_model_forward.1} parent=1 // pred_check_branch
      %100 = sbr.rel (0) target = $region41
    $region40: #{lstm_model_forward.1} parent=1 // pred_region
      _
    $region41: #{lstm_model_forward.1} parent=1 // pred_fallthru
      _
    // Predicated region
    $region42: #{lstm_model_forward.1} parent=1 // pred_check
      _
    $region43: #{lstm_model_forward.1} parent=1 // pred_check_branch
      %102 = sbr.rel (0) target = $region45
    $region44: #{lstm_model_forward.1} parent=1 // pred_region
      _
    $region45: #{lstm_model_forward.1} parent=1 // pred_fallthru
      _
    // Predicated region
    $region46: #{lstm_model_forward.1} parent=1 // pred_check
      _
    $region47: #{lstm_model_forward.1} parent=1 // pred_check_branch
      %104 = sbr.rel (0) target = $region49
    $region48: #{lstm_model_forward.1} parent=1 // pred_region
      %105 = dma.done [#allocation6], 1024
    $region49: #{lstm_model_forward.1} parent=1 // pred_fallthru
      _
    // Predicated region
    $region50: #{lstm_model_forward.1} parent=1 // pred_check
      _
    $region51: #{lstm_model_forward.1} parent=1 // pred_check_branch
      %107 = sbr.rel (0) target = $region53
    $region52: #{lstm_model_forward.1} parent=1 // pred_region
      %108 = dma.done [#allocation9], 8192
    $region53: #{lstm_model_forward.1} parent=1 // pred_fallthru
      _
    // Predicated region
    $region54: #{lstm_model_forward.1} parent=1 // pred_check
      _
    $region55: #{lstm_model_forward.1} parent=1 // pred_check_branch
      %110 = sbr.rel (0) target = $region57
    $region56: #{lstm_model_forward.1} parent=1 // pred_region
      %111 = dma.done [#allocation9], 16384
    $region57: #{lstm_model_forward.1} parent=1 // pred_fallthru
      _
    // Predicated region
    $region58: #{lstm_model_forward.1} parent=1 // pred_check
      _
    $region59: #{lstm_model_forward.1} parent=1 // pred_check_branch
      %113 = sbr.rel (0) target = $region61
    $region60: #{lstm_model_forward.1} parent=1 // pred_region
      %114 = dma.done [#allocation12], 4096
    $region61: #{lstm_model_forward.1} parent=1 // pred_fallthru
      _
    // Predicated region
    $region62: #{lstm_model_forward.1} parent=1 // pred_check
      _
    $region63: #{lstm_model_forward.1} parent=1 // pred_check_branch
      %116 = sbr.rel (0) target = $region65
    $region64: #{lstm_model_forward.1} parent=1 // pred_region
      %117 = dma.done [#allocation12], 8192
    $region65: #{lstm_model_forward.1} parent=1 // pred_fallthru
      _
    // Predicated region
    $region66: #{lstm_model_forward.1} parent=1 // pred_check
      _
    $region67: #{lstm_model_forward.1} parent=1 // pred_check_branch
      %119 = sbr.rel (0) target = $region69
    $region68: #{lstm_model_forward.1} parent=1 // pred_region
      %120 = dma.done [#allocation15], 2048
    $region69: #{lstm_model_forward.1} parent=1 // pred_fallthru
      _
    %v122 = vlaneseq
    %v123 = vshrl.u32 %v122, 7
    %vm124 = vcmp.lt.s32.totalorder %v123, 2
    %v125 = vld [vmem:[%s0] sm:$0xf]
    %v126 = vld [vmem:[%s0 + $0x4] sm:$0xf]
    %v127 = vld [vmem:[%s0 + $0x8] sm:$0xf]
    %v128 = vld [vmem:[%s0 + $0xc] sm:$0xf]
    %v129 = vld [vmem:[%s0 + $0x10] sm:$0xf]
    %v130 = vld [vmem:[%s0 + $0x14] sm:$0xf]
    %v131 = vld [vmem:[%s0 + $0x18] sm:$0xf]
    %v132 = vld [vmem:[%s0 + $0x1c] sm:$0xf]
    %v133 = vld [vmem:[#allocation5] sm:$0xff]
    %v134 = vld [vmem:[#allocation5 + $0x8] sm:$0xff]
    %v135 = vld [vmem:[#allocation5 + $0x10] sm:$0xff]
    %v136 = vld [vmem:[#allocation5 + $0x18] sm:$0xff]
    %v137 = vld [vmem:[#allocation5 + $0x20] sm:$0xff]
    %v138 = vld [vmem:[#allocation5 + $0x28] sm:$0xff]
    %v139 = vld [vmem:[#allocation5 + $0x30] sm:$0xff]
    %v140 = vld [vmem:[#allocation5 + $0x38] sm:$0xff]
    %v141 = vld [vmem:[%s2] sm:$0xff]
    %v142 = vld [vmem:[%s2 + $0x8] sm:$0xff]
    %v143 = vld [vmem:[%s2 + $0x10] sm:$0xff]
    %v144 = vld [vmem:[%s2 + $0x18] sm:$0xff]
    %v145 = vld [vmem:[%s2 + $0x20] sm:$0xff]
    %v146 = vld [vmem:[%s2 + $0x28] sm:$0xff]
    %v147 = vld [vmem:[%s2 + $0x30] sm:$0xff]
    %v148 = vld [vmem:[%s2 + $0x38] sm:$0xff]
    %v149 = vld [vmem:[%s2 + $0x40] sm:$0xff]
    %v150 = vld [vmem:[%s2 + $0x48] sm:$0xff]
    %v151 = vld [vmem:[%s2 + $0x50] sm:$0xff]
    %v152 = vld [vmem:[%s2 + $0x58] sm:$0xff]
    %v153 = vld [vmem:[%s2 + $0x60] sm:$0xff]
    %v154 = vld [vmem:[%s2 + $0x68] sm:$0xff]
    %v155 = vld [vmem:[%s2 + $0x70] sm:$0xff]
    %v156 = vld [vmem:[%s2 + $0x78] sm:$0xff]
    %v157 = vld [vmem:[%s2 + $0x80] sm:$0xff]
    %v158 = vld [vmem:[%s2 + $0x88] sm:$0xff]
    %v159 = vld [vmem:[%s2 + $0x90] sm:$0xff]
    %v160 = vld [vmem:[%s2 + $0x98] sm:$0xff]
    %v161 = vld [vmem:[%s2 + $0xa0] sm:$0xff]
    %v162 = vld [vmem:[%s2 + $0xa8] sm:$0xff]
    %v163 = vld [vmem:[%s2 + $0xb0] sm:$0xff]
    %v164 = vld [vmem:[%s2 + $0xb8] sm:$0xff]
    %v165 = vld [vmem:[%s2 + $0xc0] sm:$0xff]
    %v166 = vld [vmem:[%s2 + $0xc8] sm:$0xff]
    %v167 = vld [vmem:[%s2 + $0xd0] sm:$0xff]
    %v168 = vld [vmem:[%s2 + $0xd8] sm:$0xff]
    %v169 = vld [vmem:[%s2 + $0xe0] sm:$0xff]
    %v170 = vld [vmem:[%s2 + $0xe8] sm:$0xff]
    %v171 = vld [vmem:[%s2 + $0xf0] sm:$0xff]
    %v172 = vld [vmem:[%s2 + $0xf8] sm:$0xff]
    %v181 = vunpack.c.l.b16 %v125
    %v182 = vunpack.c.l.b16 %v126
    %v183 = vunpack.c.l.b16 %v127
    %v184 = vunpack.c.l.b16 %v128
    %v185 = vunpack.c.l.b16 %v129
    %v186 = vunpack.c.l.b16 %v130
    %v187 = vunpack.c.l.b16 %v131
    %v188 = vunpack.c.l.b16 %v132
    %v189 = vpack.c.b16 %v182, %v181
    %v190 = vpack.c.b16 %v184, %v183
    %v191 = vpack.c.b16 %v186, %v185
    %v192 = vpack.c.b16 %v188, %v187
    %v201 = vunpack.c.l.b16 %v133
    %v202 = vunpack.c.h.b16 %v133
    %v203 = vunpack.c.l.b16 %v134
    %v204 = vunpack.c.h.b16 %v134
    %v205 = vunpack.c.l.b16 %v135
    %v206 = vunpack.c.h.b16 %v135
    %v207 = vunpack.c.l.b16 %v136
    %v208 = vunpack.c.h.b16 %v136
    %v209 = vunpack.c.l.b16 %v137
    %v210 = vunpack.c.h.b16 %v137
    %v211 = vunpack.c.l.b16 %v138
    %v212 = vunpack.c.h.b16 %v138
    %v213 = vunpack.c.l.b16 %v139
    %v214 = vunpack.c.h.b16 %v139
    %v215 = vunpack.c.l.b16 %v140
    %v216 = vunpack.c.h.b16 %v140
    %v217 = vpack.c.b16 %v205, %v201
    %v218 = vpack.c.b16 %v206, %v202
    %v219 = vpack.c.b16 %v207, %v203
    %v220 = vpack.c.b16 %v208, %v204
    %v221 = vpack.c.b16 %v213, %v209
    %v222 = vpack.c.b16 %v214, %v210
    %v223 = vpack.c.b16 %v215, %v211
    %v224 = vpack.c.b16 %v216, %v212
    %vm233 = vcmask 261120
    %v235 = vsel %vm233, %v189, 0
    %v238 = vsel %vm233, %v190, 0
    %v241 = vsel %vm233, %v191, 0
    %v244 = vsel %vm233, %v192, 0
    %246 = vmatprep.subr.bf16.mxu0 0
    %247 = vmatpush1.bf16.msra.mxu0 0
    %248 = vmatprep.subr.bf16.mxu0 0
    %249 = vmatpush1.bf16.msra.mxu0 0
    %250 = vmatprep.subr.bf16.mxu0 0
    %251 = vmatpush1.bf16.msra.mxu0 0
    %252 = vmatprep.subr.bf16.mxu0 0
    %253 = vmatpush1.bf16.msra.mxu0 0
    %254 = vmatprep.subr.bf16.mxu0 0
    %255 = vmatpush1.bf16.msra.mxu0 0
    %256 = vmatprep.subr.bf16.mxu0 0
    %257 = vmatpush1.bf16.msra.mxu0 0
    %258 = vmatprep.subr.bf16.mxu0 %v222
    %259 = vmatpush1.bf16.msra.mxu0 %v221
    %260 = vmatprep.subr.bf16.mxu0 %v218
    %261 = vmatpush1.bf16.msra.mxu0 %v217
    %262 = vmatprep.subr.bf16.mxu0 0
    %263 = vmatpush2.bf16.msra.mxu0 0
    %264 = vmatprep.subr.bf16.mxu0 0
    %265 = vmatpush2.bf16.msra.mxu0 0
    %266 = vmatprep.subr.bf16.mxu0 0
    %267 = vmatpush2.bf16.msra.mxu0 0
    %268 = vmatprep.subr.bf16.mxu0 0
    %269 = vmatpush2.bf16.msra.mxu0 0
    %270 = vmatprep.subr.bf16.mxu0 0
    %271 = vmatpush2.bf16.msra.mxu0 0
    %272 = vmatprep.subr.bf16.mxu0 0
    %273 = vmatpush2.bf16.msra.mxu0 0
    %274 = vmatprep.subr.bf16.mxu0 0
    %275 = vmatpush2.bf16.msra.mxu0 0
    %276 = vmatprep.subr.bf16.mxu0 0
    %277 = vmatpush2.bf16.msra.mxu0 0
    %278 = vmatprep.mubr.bf16.mxu0 0
    %279 = vmatmul.mubr.bf16.gmra.mxu0 %v235
    %v280 = vpop.f32.mrf.mxu0
    %v281 = vadd.f32 %v141, %v280
    %v282 = vpop.f32.mrf.mxu0
    %v283 = vadd.f32 %v142, %v282
    %v284 = vpop.f32.mrf.mxu0
    %v285 = vadd.f32 %v145, %v284
    %v286 = vpop.f32.mrf.mxu0
    %v287 = vadd.f32 %v146, %v286
    %288 = vmatprep.mubr.bf16.mxu0 0
    %289 = vmatmul.mubr.bf16.gmra.mxu0 %v238
    %v290 = vpop.f32.mrf.mxu0
    %v291 = vadd.f32 %v149, %v290
    %v292 = vpop.f32.mrf.mxu0
    %v293 = vadd.f32 %v150, %v292
    %v294 = vpop.f32.mrf.mxu0
    %v295 = vadd.f32 %v153, %v294
    %v296 = vpop.f32.mrf.mxu0
    %v297 = vadd.f32 %v154, %v296
    %298 = vmatprep.mubr.bf16.mxu0 0
    %299 = vmatmul.mubr.bf16.gmra.mxu0 %v241
    %v300 = vpop.f32.mrf.mxu0
    %v301 = vadd.f32 %v157, %v300
    %v302 = vpop.f32.mrf.mxu0
    %v303 = vadd.f32 %v158, %v302
    %v304 = vpop.f32.mrf.mxu0
    %v305 = vadd.f32 %v161, %v304
    %v306 = vpop.f32.mrf.mxu0
    %v307 = vadd.f32 %v162, %v306
    %308 = vmatprep.mubr.bf16.mxu0 0
    %309 = vmatmul.mubr.bf16.gmra.mxu0 %v244
    %v310 = vpop.f32.mrf.mxu0
    %v311 = vadd.f32 %v165, %v310
    %v312 = vpop.f32.mrf.mxu0
    %v313 = vadd.f32 %v166, %v312
    %v314 = vpop.f32.mrf.mxu0
    %v315 = vadd.f32 %v169, %v314
    %v316 = vpop.f32.mrf.mxu0
    %v317 = vadd.f32 %v170, %v316
    %318 = vdwg.mxu0
    %319 = vmatprep.subr.bf16.mxu0 0
    %320 = vmatpush1.bf16.msra.mxu0 0
    %321 = vmatprep.subr.bf16.mxu0 0
    %322 = vmatpush1.bf16.msra.mxu0 0
    %323 = vmatprep.subr.bf16.mxu0 0
    %324 = vmatpush1.bf16.msra.mxu0 0
    %325 = vmatprep.subr.bf16.mxu0 0
    %326 = vmatpush1.bf16.msra.mxu0 0
    %327 = vmatprep.subr.bf16.mxu0 0
    %328 = vmatpush1.bf16.msra.mxu0 0
    %329 = vmatprep.subr.bf16.mxu0 0
    %330 = vmatpush1.bf16.msra.mxu0 0
    %331 = vmatprep.subr.bf16.mxu0 %v224
    %332 = vmatpush1.bf16.msra.mxu0 %v223
    %333 = vmatprep.subr.bf16.mxu0 %v220
    %334 = vmatpush1.bf16.msra.mxu0 %v219
    %335 = vmatprep.subr.bf16.mxu0 0
    %336 = vmatpush2.bf16.msra.mxu0 0
    %337 = vmatprep.subr.bf16.mxu0 0
    %338 = vmatpush2.bf16.msra.mxu0 0
    %339 = vmatprep.subr.bf16.mxu0 0
    %340 = vmatpush2.bf16.msra.mxu0 0
    %341 = vmatprep.subr.bf16.mxu0 0
    %342 = vmatpush2.bf16.msra.mxu0 0
    %343 = vmatprep.subr.bf16.mxu0 0
    %344 = vmatpush2.bf16.msra.mxu0 0
    %345 = vmatprep.subr.bf16.mxu0 0
    %346 = vmatpush2.bf16.msra.mxu0 0
    %347 = vmatprep.subr.bf16.mxu0 0
    %348 = vmatpush2.bf16.msra.mxu0 0
    %349 = vmatprep.subr.bf16.mxu0 0
    %350 = vmatpush2.bf16.msra.mxu0 0
    %351 = vmatprep.mubr.bf16.mxu0 0
    %352 = vmatmul.mubr.bf16.gmra.mxu0 %v235
    %v353 = vpop.f32.mrf.mxu0
    %v354 = vadd.f32 %v143, %v353
    %v355 = vpop.f32.mrf.mxu0
    %v356 = vadd.f32 %v144, %v355
    %v357 = vpop.f32.mrf.mxu0
    %v358 = vadd.f32 %v147, %v357
    %v359 = vpop.f32.mrf.mxu0
    %v360 = vadd.f32 %v148, %v359
    %361 = vmatprep.mubr.bf16.mxu0 0
    %362 = vmatmul.mubr.bf16.gmra.mxu0 %v238
    %v363 = vpop.f32.mrf.mxu0
    %v364 = vadd.f32 %v151, %v363
    %v365 = vpop.f32.mrf.mxu0
    %v366 = vadd.f32 %v152, %v365
    %v367 = vpop.f32.mrf.mxu0
    %v368 = vadd.f32 %v155, %v367
    %v369 = vpop.f32.mrf.mxu0
    %v370 = vadd.f32 %v156, %v369
    %371 = vmatprep.mubr.bf16.mxu0 0
    %372 = vmatmul.mubr.bf16.gmra.mxu0 %v241
    %v373 = vpop.f32.mrf.mxu0
    %v374 = vadd.f32 %v159, %v373
    %v375 = vpop.f32.mrf.mxu0
    %v376 = vadd.f32 %v160, %v375
    %v377 = vpop.f32.mrf.mxu0
    %v378 = vadd.f32 %v163, %v377
    %v379 = vpop.f32.mrf.mxu0
    %v380 = vadd.f32 %v164, %v379
    %381 = vmatprep.mubr.bf16.mxu0 0
    %382 = vmatmul.mubr.bf16.gmra.mxu0 %v244
    %v383 = vpop.f32.mrf.mxu0
    %v384 = vadd.f32 %v167, %v383
    %v385 = vpop.f32.mrf.mxu0
    %v386 = vadd.f32 %v168, %v385
    %v387 = vpop.f32.mrf.mxu0
    %v388 = vadd.f32 %v171, %v387
    %v389 = vpop.f32.mrf.mxu0
    %v390 = vadd.f32 %v172, %v389
    %391 = vdwg.mxu0
    %392 = vst [vmem:[#allocation2] sm:$0xff] %v281
    %393 = vst [vmem:[#allocation2 + $0x8] sm:$0xff] %v283
    %394 = vst [vmem:[#allocation2 + $0x10] sm:$0xff] %v354
    %395 = vst [vmem:[#allocation2 + $0x18] sm:$0xff] %v356
    %396 = vst [vmem:[#allocation2 + $0x20] sm:$0xff] %v285
    %397 = vst [vmem:[#allocation2 + $0x28] sm:$0xff] %v287
    %398 = vst [vmem:[#allocation2 + $0x30] sm:$0xff] %v358
    %399 = vst [vmem:[#allocation2 + $0x38] sm:$0xff] %v360
    %400 = vst [vmem:[#allocation2 + $0x40] sm:$0xff] %v291
    %401 = vst [vmem:[#allocation2 + $0x48] sm:$0xff] %v293
    %402 = vst [vmem:[#allocation2 + $0x50] sm:$0xff] %v364
    %403 = vst [vmem:[#allocation2 + $0x58] sm:$0xff] %v366
    %404 = vst [vmem:[#allocation2 + $0x60] sm:$0xff] %v295
    %405 = vst [vmem:[#allocation2 + $0x68] sm:$0xff] %v297
    %406 = vst [vmem:[#allocation2 + $0x70] sm:$0xff] %v368
    %407 = vst [vmem:[#allocation2 + $0x78] sm:$0xff] %v370
    %408 = vst [vmem:[#allocation2 + $0x80] sm:$0xff] %v301
    %409 = vst [vmem:[#allocation2 + $0x88] sm:$0xff] %v303
    %410 = vst [vmem:[#allocation2 + $0x90] sm:$0xff] %v374
    %411 = vst [vmem:[#allocation2 + $0x98] sm:$0xff] %v376
    %412 = vst [vmem:[#allocation2 + $0xa0] sm:$0xff] %v305
    %413 = vst [vmem:[#allocation2 + $0xa8] sm:$0xff] %v307
    %414 = vst [vmem:[#allocation2 + $0xb0] sm:$0xff] %v378
    %415 = vst [vmem:[#allocation2 + $0xb8] sm:$0xff] %v380
    %416 = vst [vmem:[#allocation2 + $0xc0] sm:$0xff] %v311
    %417 = vst [vmem:[#allocation2 + $0xc8] sm:$0xff] %v313
    %418 = vst [vmem:[#allocation2 + $0xd0] sm:$0xff] %v384
    %419 = vst [vmem:[#allocation2 + $0xd8] sm:$0xff] %v386
    %420 = vst [vmem:[#allocation2 + $0xe0] sm:$0xff] %v315
    %421 = vst [vmem:[#allocation2 + $0xe8] sm:$0xff] %v317
    %422 = vst [vmem:[#allocation2 + $0xf0] sm:$0xff] %v388
    %423 = vst [vmem:[#allocation2 + $0xf8] sm:$0xff] %v390
    %v424 = vld [vmem:[#allocation8] sm:$0xff]
    %v425 = vld [vmem:[#allocation8 + $0x8] sm:$0xff]
    %v426 = vld [vmem:[#allocation8 + $0x10] sm:$0xff]
    %v427 = vld [vmem:[#allocation8 + $0x18] sm:$0xff]
    %v428 = vld [vmem:[#allocation8 + $0x20] sm:$0xff]
    %v429 = vld [vmem:[#allocation8 + $0x28] sm:$0xff]
    %v430 = vld [vmem:[#allocation8 + $0x30] sm:$0xff]
    %v431 = vld [vmem:[#allocation8 + $0x38] sm:$0xff]
    %v432 = vld [vmem:[#allocation8 + $0x40] sm:$0xff]
    %v433 = vld [vmem:[#allocation8 + $0x48] sm:$0xff]
    %v434 = vld [vmem:[#allocation8 + $0x50] sm:$0xff]
    %v435 = vld [vmem:[#allocation8 + $0x58] sm:$0xff]
    %v436 = vld [vmem:[#allocation8 + $0x60] sm:$0xff]
    %v437 = vld [vmem:[#allocation8 + $0x68] sm:$0xff]
    %v438 = vld [vmem:[#allocation8 + $0x70] sm:$0xff]
    %v439 = vld [vmem:[#allocation8 + $0x78] sm:$0xff]
    %v440 = vld [vmem:[#allocation8 + $0x80] sm:$0xff]
    %v441 = vld [vmem:[#allocation8 + $0x88] sm:$0xff]
    %v442 = vld [vmem:[#allocation8 + $0x90] sm:$0xff]
    %v443 = vld [vmem:[#allocation8 + $0x98] sm:$0xff]
    %v444 = vld [vmem:[#allocation8 + $0xa0] sm:$0xff]
    %v445 = vld [vmem:[#allocation8 + $0xa8] sm:$0xff]
    %v446 = vld [vmem:[#allocation8 + $0xb0] sm:$0xff]
    %v447 = vld [vmem:[#allocation8 + $0xb8] sm:$0xff]
    %v448 = vld [vmem:[#allocation8 + $0xc0] sm:$0xff]
    %v449 = vld [vmem:[#allocation8 + $0xc8] sm:$0xff]
    %v450 = vld [vmem:[#allocation8 + $0xd0] sm:$0xff]
    %v451 = vld [vmem:[#allocation8 + $0xd8] sm:$0xff]
    %v452 = vld [vmem:[#allocation8 + $0xe0] sm:$0xff]
    %v453 = vld [vmem:[#allocation8 + $0xe8] sm:$0xff]
    %v454 = vld [vmem:[#allocation8 + $0xf0] sm:$0xff]
    %v455 = vld [vmem:[#allocation8 + $0xf8] sm:$0xff]
    %v456 = vld [vmem:[#allocation8 + $0x100] sm:$0xff]
    %v457 = vld [vmem:[#allocation8 + $0x108] sm:$0xff]
    %v458 = vld [vmem:[#allocation8 + $0x110] sm:$0xff]
    %v459 = vld [vmem:[#allocation8 + $0x118] sm:$0xff]
    %v460 = vld [vmem:[#allocation8 + $0x120] sm:$0xff]
    %v461 = vld [vmem:[#allocation8 + $0x128] sm:$0xff]
    %v462 = vld [vmem:[#allocation8 + $0x130] sm:$0xff]
    %v463 = vld [vmem:[#allocation8 + $0x138] sm:$0xff]
    %v464 = vld [vmem:[#allocation8 + $0x140] sm:$0xff]
    %v465 = vld [vmem:[#allocation8 + $0x148] sm:$0xff]
    %v466 = vld [vmem:[#allocation8 + $0x150] sm:$0xff]
    %v467 = vld [vmem:[#allocation8 + $0x158] sm:$0xff]
    %v468 = vld [vmem:[#allocation8 + $0x160] sm:$0xff]
    %v469 = vld [vmem:[#allocation8 + $0x168] sm:$0xff]
    %v470 = vld [vmem:[#allocation8 + $0x170] sm:$0xff]
    %v471 = vld [vmem:[#allocation8 + $0x178] sm:$0xff]
    %v472 = vld [vmem:[#allocation8 + $0x180] sm:$0xff]
    %v473 = vld [vmem:[#allocation8 + $0x188] sm:$0xff]
    %v474 = vld [vmem:[#allocation8 + $0x190] sm:$0xff]
    %v475 = vld [vmem:[#allocation8 + $0x198] sm:$0xff]
    %v476 = vld [vmem:[#allocation8 + $0x1a0] sm:$0xff]
    %v477 = vld [vmem:[#allocation8 + $0x1a8] sm:$0xff]
    %v478 = vld [vmem:[#allocation8 + $0x1b0] sm:$0xff]
    %v479 = vld [vmem:[#allocation8 + $0x1b8] sm:$0xff]
    %v480 = vld [vmem:[#allocation8 + $0x1c0] sm:$0xff]
    %v481 = vld [vmem:[#allocation8 + $0x1c8] sm:$0xff]
    %v482 = vld [vmem:[#allocation8 + $0x1d0] sm:$0xff]
    %v483 = vld [vmem:[#allocation8 + $0x1d8] sm:$0xff]
    %v484 = vld [vmem:[#allocation8 + $0x1e0] sm:$0xff]
    %v485 = vld [vmem:[#allocation8 + $0x1e8] sm:$0xff]
    %v486 = vld [vmem:[#allocation8 + $0x1f0] sm:$0xff]
    %v487 = vld [vmem:[#allocation8 + $0x1f8] sm:$0xff]
    %v488 = vld [vmem:[#allocation2] sm:$0xff]
    %v489 = vld [vmem:[#allocation2 + $0x8] sm:$0xff]
    %v490 = vld [vmem:[#allocation2 + $0x10] sm:$0xff]
    %v491 = vld [vmem:[#allocation2 + $0x18] sm:$0xff]
    %v492 = vmul.f32 %v488, 0.5
    %v493 = vmul.f32 %v489, 0.5
    %v494 = vmul.f32 %v490, 0.5
    %v495 = vtanh.pop %v492
    %v496 = vtanh.pop %v493
    %v497 = vtanh.pop %v494
    %v498 = vmul.f32 %v495, 0.5
    %v499 = vmul.f32 %v496, 0.5
    %v500 = vmul.f32 %v497, 0.5
    %v501 = vadd.f32 %v498, 0.5
    %v502 = vadd.f32 %v499, 0.5
    %v503 = vadd.f32 %v500, 0.5
    %v504 = vtanh.pop %v491
    %v505 = vmul.f32 %v502, 0.0
    %v506 = vmul.f32 %v501, %v504
    %v507 = vadd.f32 %v505, %v506
    %v508 = vtanh.pop %v507
    %v509 = vmul.f32 %v503, %v508
    %v510 = vsel %vm124, %v509, 0.0
    %v511 = vsel %vm124, 0.0, %v509
    %512 = vst [vmem:[#allocation3] sm:$0xff] %v510
    %513 = vst [vmem:[#allocation3 + $0x8] sm:$0xff] %v511
    %v514 = vld [vmem:[#allocation2 + $0x20] sm:$0xff]
    %v515 = vld [vmem:[#allocation2 + $0x28] sm:$0xff]
    %v516 = vld [vmem:[#allocation2 + $0x30] sm:$0xff]
    %v517 = vld [vmem:[#allocation2 + $0x38] sm:$0xff]
    %v518 = vpack.c.bf16 %v510, %v510
    %v519 = vpack.c.bf16 %v511, %v511
    %v584 = vunpack.c.l.b16 %v424
    %v585 = vunpack.c.h.b16 %v424
    %v586 = vunpack.c.l.b16 %v425
    %v587 = vunpack.c.h.b16 %v425
    %v588 = vunpack.c.l.b16 %v426
    %v589 = vunpack.c.h.b16 %v426
    %v590 = vunpack.c.l.b16 %v427
    %v591 = vunpack.c.h.b16 %v427
    %v592 = vunpack.c.l.b16 %v428
    %v593 = vunpack.c.h.b16 %v428
    %v594 = vunpack.c.l.b16 %v429
    %v595 = vunpack.c.h.b16 %v429
    %v596 = vunpack.c.l.b16 %v430
    %v597 = vunpack.c.h.b16 %v430
    %v598 = vunpack.c.l.b16 %v431
    %v599 = vunpack.c.h.b16 %v431
    %v600 = vunpack.c.l.b16 %v432
    %v601 = vunpack.c.h.b16 %v432
    %v602 = vunpack.c.l.b16 %v433
    %v603 = vunpack.c.h.b16 %v433
    %v604 = vunpack.c.l.b16 %v434
    %v605 = vunpack.c.h.b16 %v434
    %v606 = vunpack.c.l.b16 %v435
    %v607 = vunpack.c.h.b16 %v435
    %v608 = vunpack.c.l.b16 %v436
    %v609 = vunpack.c.h.b16 %v436
    %v610 = vunpack.c.l.b16 %v437
    %v611 = vunpack.c.h.b16 %v437
    %v612 = vunpack.c.l.b16 %v438
    %v613 = vunpack.c.h.b16 %v438
    %v614 = vunpack.c.l.b16 %v439
    %v615 = vunpack.c.h.b16 %v439
    %v616 = vunpack.c.l.b16 %v440
    %v617 = vunpack.c.h.b16 %v440
    %v618 = vunpack.c.l.b16 %v441
    %v619 = vunpack.c.h.b16 %v441
    %v620 = vunpack.c.l.b16 %v442
    %v621 = vunpack.c.h.b16 %v442
    %v622 = vunpack.c.l.b16 %v443
    %v623 = vunpack.c.h.b16 %v443
    %v624 = vunpack.c.l.b16 %v444
    %v625 = vunpack.c.h.b16 %v444
    %v626 = vunpack.c.l.b16 %v445
    %v627 = vunpack.c.h.b16 %v445
    %v628 = vunpack.c.l.b16 %v446
    %v629 = vunpack.c.h.b16 %v446
    %v630 = vunpack.c.l.b16 %v447
    %v631 = vunpack.c.h.b16 %v447
    %v632 = vunpack.c.l.b16 %v448
    %v633 = vunpack.c.h.b16 %v448
    %v634 = vunpack.c.l.b16 %v449
    %v635 = vunpack.c.h.b16 %v449
    %v636 = vunpack.c.l.b16 %v450
    %v637 = vunpack.c.h.b16 %v450
    %v638 = vunpack.c.l.b16 %v451
    %v639 = vunpack.c.h.b16 %v451
    %v640 = vunpack.c.l.b16 %v452
    %v641 = vunpack.c.h.b16 %v452
    %v642 = vunpack.c.l.b16 %v453
    %v643 = vunpack.c.h.b16 %v453
    %v644 = vunpack.c.l.b16 %v454
    %v645 = vunpack.c.h.b16 %v454
    %v646 = vunpack.c.l.b16 %v455
    %v647 = vunpack.c.h.b16 %v455
    %v648 = vunpack.c.l.b16 %v456
    %v649 = vunpack.c.h.b16 %v456
    %v650 = vunpack.c.l.b16 %v457
    %v651 = vunpack.c.h.b16 %v457
    %v652 = vunpack.c.l.b16 %v458
    %v653 = vunpack.c.h.b16 %v458
    %v654 = vunpack.c.l.b16 %v459
    %v655 = vunpack.c.h.b16 %v459
    %v656 = vunpack.c.l.b16 %v460
    %v657 = vunpack.c.h.b16 %v460
    %v658 = vunpack.c.l.b16 %v461
    %v659 = vunpack.c.h.b16 %v461
    %v660 = vunpack.c.l.b16 %v462
    %v661 = vunpack.c.h.b16 %v462
    %v662 = vunpack.c.l.b16 %v463
    %v663 = vunpack.c.h.b16 %v463
    %v664 = vunpack.c.l.b16 %v464
    %v665 = vunpack.c.h.b16 %v464
    %v666 = vunpack.c.l.b16 %v465
    %v667 = vunpack.c.h.b16 %v465
    %v668 = vunpack.c.l.b16 %v466
    %v669 = vunpack.c.h.b16 %v466
    %v670 = vunpack.c.l.b16 %v467
    %v671 = vunpack.c.h.b16 %v467
    %v672 = vunpack.c.l.b16 %v468
    %v673 = vunpack.c.h.b16 %v468
    %v674 = vunpack.c.l.b16 %v469
    %v675 = vunpack.c.h.b16 %v469
    %v676 = vunpack.c.l.b16 %v470
    %v677 = vunpack.c.h.b16 %v470
    %v678 = vunpack.c.l.b16 %v471
    %v679 = vunpack.c.h.b16 %v471
    %v680 = vunpack.c.l.b16 %v472
    %v681 = vunpack.c.h.b16 %v472
    %v682 = vunpack.c.l.b16 %v473
    %v683 = vunpack.c.h.b16 %v473
    %v684 = vunpack.c.l.b16 %v474
    %v685 = vunpack.c.h.b16 %v474
    %v686 = vunpack.c.l.b16 %v475
    %v687 = vunpack.c.h.b16 %v475
    %v688 = vunpack.c.l.b16 %v476
    %v689 = vunpack.c.h.b16 %v476
    %v690 = vunpack.c.l.b16 %v477
    %v691 = vunpack.c.h.b16 %v477
    %v692 = vunpack.c.l.b16 %v478
    %v693 = vunpack.c.h.b16 %v478
    %v694 = vunpack.c.l.b16 %v479
    %v695 = vunpack.c.h.b16 %v479
    %v696 = vunpack.c.l.b16 %v480
    %v697 = vunpack.c.h.b16 %v480
    %v698 = vunpack.c.l.b16 %v481
    %v699 = vunpack.c.h.b16 %v481
    %v700 = vunpack.c.l.b16 %v482
    %v701 = vunpack.c.h.b16 %v482
    %v702 = vunpack.c.l.b16 %v483
    %v703 = vunpack.c.h.b16 %v483
    %v704 = vunpack.c.l.b16 %v484
    %v705 = vunpack.c.h.b16 %v484
    %v706 = vunpack.c.l.b16 %v485
    %v707 = vunpack.c.h.b16 %v485
    %v708 = vunpack.c.l.b16 %v486
    %v709 = vunpack.c.h.b16 %v486
    %v710 = vunpack.c.l.b16 %v487
    %v711 = vunpack.c.h.b16 %v487
    %v712 = vpack.c.b16 %v588, %v584
    %v713 = vpack.c.b16 %v589, %v585
    %v714 = vpack.c.b16 %v590, %v586
    %v715 = vpack.c.b16 %v591, %v587
    %v716 = vpack.c.b16 %v596, %v592
    %v717 = vpack.c.b16 %v597, %v593
    %v718 = vpack.c.b16 %v598, %v594
    %v719 = vpack.c.b16 %v599, %v595
    %v720 = vpack.c.b16 %v604, %v600
    %v721 = vpack.c.b16 %v605, %v601
    %v722 = vpack.c.b16 %v606, %v602
    %v723 = vpack.c.b16 %v607, %v603
    %v724 = vpack.c.b16 %v612, %v608
    %v725 = vpack.c.b16 %v613, %v609
    %v726 = vpack.c.b16 %v614, %v610
    %v727 = vpack.c.b16 %v615, %v611
    %v728 = vpack.c.b16 %v620, %v616
    %v729 = vpack.c.b16 %v621, %v617
    %v730 = vpack.c.b16 %v622, %v618
    %v731 = vpack.c.b16 %v623, %v619
    %v732 = vpack.c.b16 %v628, %v624
    %v733 = vpack.c.b16 %v629, %v625
    %v734 = vpack.c.b16 %v630, %v626
    %v735 = vpack.c.b16 %v631, %v627
    %v736 = vpack.c.b16 %v636, %v632
    %v737 = vpack.c.b16 %v637, %v633
    %v738 = vpack.c.b16 %v638, %v634
    %v739 = vpack.c.b16 %v639, %v635
    %v740 = vpack.c.b16 %v644, %v640
    %v741 = vpack.c.b16 %v645, %v641
    %v742 = vpack.c.b16 %v646, %v642
    %v743 = vpack.c.b16 %v647, %v643
    %v744 = vpack.c.b16 %v652, %v648
    %v745 = vpack.c.b16 %v653, %v649
    %v746 = vpack.c.b16 %v654, %v650
    %v747 = vpack.c.b16 %v655, %v651
    %v748 = vpack.c.b16 %v660, %v656
    %v749 = vpack.c.b16 %v661, %v657
    %v750 = vpack.c.b16 %v662, %v658
    %v751 = vpack.c.b16 %v663, %v659
    %v752 = vpack.c.b16 %v668, %v664
    %v753 = vpack.c.b16 %v669, %v665
    %v754 = vpack.c.b16 %v670, %v666
    %v755 = vpack.c.b16 %v671, %v667
    %v756 = vpack.c.b16 %v676, %v672
    %v757 = vpack.c.b16 %v677, %v673
    %v758 = vpack.c.b16 %v678, %v674
    %v759 = vpack.c.b16 %v679, %v675
    %v760 = vpack.c.b16 %v684, %v680
    %v761 = vpack.c.b16 %v685, %v681
    %v762 = vpack.c.b16 %v686, %v682
    %v763 = vpack.c.b16 %v687, %v683
    %v764 = vpack.c.b16 %v692, %v688
    %v765 = vpack.c.b16 %v693, %v689
    %v766 = vpack.c.b16 %v694, %v690
    %v767 = vpack.c.b16 %v695, %v691
    %v768 = vpack.c.b16 %v700, %v696
    %v769 = vpack.c.b16 %v701, %v697
    %v770 = vpack.c.b16 %v702, %v698
    %v771 = vpack.c.b16 %v703, %v699
    %v772 = vpack.c.b16 %v708, %v704
    %v773 = vpack.c.b16 %v709, %v705
    %v774 = vpack.c.b16 %v710, %v706
    %v775 = vpack.c.b16 %v711, %v707
    %840 = vmatprep.subr.bf16.mxu0 %v741
    %841 = vmatpush1.bf16.msra.mxu0 %v740
    %842 = vmatprep.subr.bf16.mxu0 %v737
    %843 = vmatpush1.bf16.msra.mxu0 %v736
    %844 = vmatprep.subr.bf16.mxu0 %v733
    %845 = vmatpush1.bf16.msra.mxu0 %v732
    %846 = vmatprep.subr.bf16.mxu0 %v729
    %847 = vmatpush1.bf16.msra.mxu0 %v728
    %848 = vmatprep.subr.bf16.mxu0 %v725
    %849 = vmatpush1.bf16.msra.mxu0 %v724
    %850 = vmatprep.subr.bf16.mxu0 %v721
    %851 = vmatpush1.bf16.msra.mxu0 %v720
    %852 = vmatprep.subr.bf16.mxu0 %v717
    %853 = vmatpush1.bf16.msra.mxu0 %v716
    %854 = vmatprep.subr.bf16.mxu0 %v713
    %855 = vmatpush1.bf16.msra.mxu0 %v712
    %856 = vmatprep.subr.bf16.mxu0 %v773
    %857 = vmatpush2.bf16.msra.mxu0 %v772
    %858 = vmatprep.subr.bf16.mxu0 %v769
    %859 = vmatpush2.bf16.msra.mxu0 %v768
    %860 = vmatprep.subr.bf16.mxu0 %v765
    %861 = vmatpush2.bf16.msra.mxu0 %v764
    %862 = vmatprep.subr.bf16.mxu0 %v761
    %863 = vmatpush2.bf16.msra.mxu0 %v760
    %864 = vmatprep.subr.bf16.mxu0 %v757
    %865 = vmatpush2.bf16.msra.mxu0 %v756
    %866 = vmatprep.subr.bf16.mxu0 %v753
    %867 = vmatpush2.bf16.msra.mxu0 %v752
    %868 = vmatprep.subr.bf16.mxu0 %v749
    %869 = vmatpush2.bf16.msra.mxu0 %v748
    %870 = vmatprep.subr.bf16.mxu0 %v745
    %871 = vmatpush2.bf16.msra.mxu0 %v744
    %872 = vmatprep.mubr.bf16.mxu0 %v519
    %873 = vmatmul.mubr.bf16.gmra.mxu0 %v518
    %v874 = vpop.f32.mrf.mxu0
    %v875 = vadd.f32 0.0, %v874
    %v876 = vpop.f32.mrf.mxu0
    %v877 = vadd.f32 0.0, %v876
    %v878 = vpop.f32.mrf.mxu0
    %v879 = vpop.f32.mrf.mxu0
    %880 = vdwg.mxu0
    %881 = vmatprep.subr.bf16.mxu0 %v743
    %882 = vmatpush1.bf16.msra.mxu0 %v742
    %883 = vmatprep.subr.bf16.mxu0 %v739
    %884 = vmatpush1.bf16.msra.mxu0 %v738
    %885 = vmatprep.subr.bf16.mxu0 %v735
    %886 = vmatpush1.bf16.msra.mxu0 %v734
    %887 = vmatprep.subr.bf16.mxu0 %v731
    %888 = vmatpush1.bf16.msra.mxu0 %v730
    %889 = vmatprep.subr.bf16.mxu0 %v727
    %890 = vmatpush1.bf16.msra.mxu0 %v726
    %891 = vmatprep.subr.bf16.mxu0 %v723
    %892 = vmatpush1.bf16.msra.mxu0 %v722
    %893 = vmatprep.subr.bf16.mxu0 %v719
    %894 = vmatpush1.bf16.msra.mxu0 %v718
    %895 = vmatprep.subr.bf16.mxu0 %v715
    %896 = vmatpush1.bf16.msra.mxu0 %v714
    %897 = vmatprep.subr.bf16.mxu0 %v775
    %898 = vmatpush2.bf16.msra.mxu0 %v774
    %899 = vmatprep.subr.bf16.mxu0 %v771
    %900 = vmatpush2.bf16.msra.mxu0 %v770
    %901 = vmatprep.subr.bf16.mxu0 %v767
    %902 = vmatpush2.bf16.msra.mxu0 %v766
    %903 = vmatprep.subr.bf16.mxu0 %v763
    %904 = vmatpush2.bf16.msra.mxu0 %v762
    %905 = vmatprep.subr.bf16.mxu0 %v759
    %906 = vmatpush2.bf16.msra.mxu0 %v758
    %907 = vmatprep.subr.bf16.mxu0 %v755
    %908 = vmatpush2.bf16.msra.mxu0 %v754
    %909 = vmatprep.subr.bf16.mxu0 %v751
    %910 = vmatpush2.bf16.msra.mxu0 %v750
    %911 = vmatprep.subr.bf16.mxu0 %v747
    %912 = vmatpush2.bf16.msra.mxu0 %v746
    %913 = vmatprep.mubr.bf16.mxu0 %v519
    %914 = vmatmul.mubr.bf16.gmra.mxu0 %v518
    %v915 = vpop.f32.mrf.mxu0
    %v916 = vadd.f32 0.0, %v915
    %v917 = vpop.f32.mrf.mxu0
    %v918 = vadd.f32 0.0, %v917
    %v919 = vpop.f32.mrf.mxu0
    %v920 = vpop.f32.mrf.mxu0
    %921 = vdwg.mxu0
    %v922 = vadd.f32 %v514, %v875
    %v923 = vadd.f32 %v515, %v877
    %v924 = vadd.f32 %v516, %v916
    %v925 = vadd.f32 %v517, %v918
    %v926 = vmul.f32 %v922, 0.5
    %v927 = vmul.f32 %v923, 0.5
    %v928 = vmul.f32 %v924, 0.5
    %v929 = vtanh.pop %v926
    %v930 = vtanh.pop %v927
    %v931 = vtanh.pop %v928
    %v932 = vmul.f32 %v929, 0.5
    %v933 = vmul.f32 %v930, 0.5
    %v934 = vmul.f32 %v931, 0.5
    %v935 = vadd.f32 %v932, 0.5
    %v936 = vadd.f32 %v933, 0.5
    %v937 = vadd.f32 %v934, 0.5
    %v938 = vtanh.pop %v925
    %v939 = vmul.f32 %v936, %v507
    %v940 = vmul.f32 %v935, %v938
    %v941 = vadd.f32 %v939, %v940
    %v942 = vtanh.pop %v941
    %v943 = vmul.f32 %v937, %v942
    %v944 = vsel %vm124, %v943, 0.0
    %v945 = vsel %vm124, 0.0, %v943
    %946 = vst [vmem:[#allocation3 + $0x10] sm:$0xff] %v944
    %947 = vst [vmem:[#allocation3 + $0x18] sm:$0xff] %v945
    %v948 = vld [vmem:[#allocation2 + $0x40] sm:$0xff]
    %v949 = vld [vmem:[#allocation2 + $0x48] sm:$0xff]
    %v950 = vld [vmem:[#allocation2 + $0x50] sm:$0xff]
    %v951 = vld [vmem:[#allocation2 + $0x58] sm:$0xff]
    %v952 = vpack.c.bf16 %v944, %v944
    %v953 = vpack.c.bf16 %v945, %v945
    %954 = vmatprep.subr.bf16.mxu0 %v741
    %955 = vmatpush1.bf16.msra.mxu0 %v740
    %956 = vmatprep.subr.bf16.mxu0 %v737
    %957 = vmatpush1.bf16.msra.mxu0 %v736
    %958 = vmatprep.subr.bf16.mxu0 %v733
    %959 = vmatpush1.bf16.msra.mxu0 %v732
    %960 = vmatprep.subr.bf16.mxu0 %v729
    %961 = vmatpush1.bf16.msra.mxu0 %v728
    %962 = vmatprep.subr.bf16.mxu0 %v725
    %963 = vmatpush1.bf16.msra.mxu0 %v724
    %964 = vmatprep.subr.bf16.mxu0 %v721
    %965 = vmatpush1.bf16.msra.mxu0 %v720
    %966 = vmatprep.subr.bf16.mxu0 %v717
    %967 = vmatpush1.bf16.msra.mxu0 %v716
    %968 = vmatprep.subr.bf16.mxu0 %v713
    %969 = vmatpush1.bf16.msra.mxu0 %v712
    %970 = vmatprep.subr.bf16.mxu0 %v773
    %971 = vmatpush2.bf16.msra.mxu0 %v772
    %972 = vmatprep.subr.bf16.mxu0 %v769
    %973 = vmatpush2.bf16.msra.mxu0 %v768
    %974 = vmatprep.subr.bf16.mxu0 %v765
    %975 = vmatpush2.bf16.msra.mxu0 %v764
    %976 = vmatprep.subr.bf16.mxu0 %v761
    %977 = vmatpush2.bf16.msra.mxu0 %v760
    %978 = vmatprep.subr.bf16.mxu0 %v757
    %979 = vmatpush2.bf16.msra.mxu0 %v756
    %980 = vmatprep.subr.bf16.mxu0 %v753
    %981 = vmatpush2.bf16.msra.mxu0 %v752
    %982 = vmatprep.subr.bf16.mxu0 %v749
    %983 = vmatpush2.bf16.msra.mxu0 %v748
    %984 = vmatprep.subr.bf16.mxu0 %v745
    %985 = vmatpush2.bf16.msra.mxu0 %v744
    %986 = vmatprep.mubr.bf16.mxu0 %v953
    %987 = vmatmul.mubr.bf16.gmra.mxu0 %v952
    %v988 = vpop.f32.mrf.mxu0
    %v989 = vadd.f32 0.0, %v988
    %v990 = vpop.f32.mrf.mxu0
    %v991 = vadd.f32 0.0, %v990
    %v992 = vpop.f32.mrf.mxu0
    %v993 = vpop.f32.mrf.mxu0
    %994 = vdwg.mxu0
    %995 = vmatprep.subr.bf16.mxu0 %v743
    %996 = vmatpush1.bf16.msra.mxu0 %v742
    %997 = vmatprep.subr.bf16.mxu0 %v739
    %998 = vmatpush1.bf16.msra.mxu0 %v738
    %999 = vmatprep.subr.bf16.mxu0 %v735
    %1000 = vmatpush1.bf16.msra.mxu0 %v734
    %1001 = vmatprep.subr.bf16.mxu0 %v731
    %1002 = vmatpush1.bf16.msra.mxu0 %v730
    %1003 = vmatprep.subr.bf16.mxu0 %v727
    %1004 = vmatpush1.bf16.msra.mxu0 %v726
    %1005 = vmatprep.subr.bf16.mxu0 %v723
    %1006 = vmatpush1.bf16.msra.mxu0 %v722
    %1007 = vmatprep.subr.bf16.mxu0 %v719
    %1008 = vmatpush1.bf16.msra.mxu0 %v718
    %1009 = vmatprep.subr.bf16.mxu0 %v715
    %1010 = vmatpush1.bf16.msra.mxu0 %v714
    %1011 = vmatprep.subr.bf16.mxu0 %v775
    %1012 = vmatpush2.bf16.msra.mxu0 %v774
    %1013 = vmatprep.subr.bf16.mxu0 %v771
    %1014 = vmatpush2.bf16.msra.mxu0 %v770
    %1015 = vmatprep.subr.bf16.mxu0 %v767
    %1016 = vmatpush2.bf16.msra.mxu0 %v766
    %1017 = vmatprep.subr.bf16.mxu0 %v763
    %1018 = vmatpush2.bf16.msra.mxu0 %v762
    %1019 = vmatprep.subr.bf16.mxu0 %v759
    %1020 = vmatpush2.bf16.msra.mxu0 %v758
    %1021 = vmatprep.subr.bf16.mxu0 %v755
    %1022 = vmatpush2.bf16.msra.mxu0 %v754
    %1023 = vmatprep.subr.bf16.mxu0 %v751
    %1024 = vmatpush2.bf16.msra.mxu0 %v750
    %1025 = vmatprep.subr.bf16.mxu0 %v747
    %1026 = vmatpush2.bf16.msra.mxu0 %v746
    %1027 = vmatprep.mubr.bf16.mxu0 %v953
    %1028 = vmatmul.mubr.bf16.gmra.mxu0 %v952
    %v1029 = vpop.f32.mrf.mxu0
    %v1030 = vadd.f32 0.0, %v1029
    %v1031 = vpop.f32.mrf.mxu0
    %v1032 = vadd.f32 0.0, %v1031
    %v1033 = vpop.f32.mrf.mxu0
    %v1034 = vpop.f32.mrf.mxu0
    %1035 = vdwg.mxu0
    %v1036 = vadd.f32 %v948, %v989
    %v1037 = vadd.f32 %v949, %v991
    %v1038 = vadd.f32 %v950, %v1030
    %v1039 = vadd.f32 %v951, %v1032
    %v1040 = vmul.f32 %v1036, 0.5
    %v1041 = vmul.f32 %v1037, 0.5
    %v1042 = vmul.f32 %v1038, 0.5
    %v1043 = vtanh.pop %v1040
    %v1044 = vtanh.pop %v1041
    %v1045 = vtanh.pop %v1042
    %v1046 = vmul.f32 %v1043, 0.5
    %v1047 = vmul.f32 %v1044, 0.5
    %v1048 = vmul.f32 %v1045, 0.5
    %v1049 = vadd.f32 %v1046, 0.5
    %v1050 = vadd.f32 %v1047, 0.5
    %v1051 = vadd.f32 %v1048, 0.5
    %v1052 = vtanh.pop %v1039
    %v1053 = vmul.f32 %v1050, %v941
    %v1054 = vmul.f32 %v1049, %v1052
    %v1055 = vadd.f32 %v1053, %v1054
    %v1056 = vtanh.pop %v1055
    %v1057 = vmul.f32 %v1051, %v1056
    %v1058 = vsel %vm124, %v1057, 0.0
    %v1059 = vsel %vm124, 0.0, %v1057
    %1060 = vst [vmem:[#allocation3 + $0x20] sm:$0xff] %v1058
    %1061 = vst [vmem:[#allocation3 + $0x28] sm:$0xff] %v1059
    %v1062 = vld [vmem:[#allocation2 + $0x60] sm:$0xff]
    %v1063 = vld [vmem:[#allocation2 + $0x68] sm:$0xff]
    %v1064 = vld [vmem:[#allocation2 + $0x70] sm:$0xff]
    %v1065 = vld [vmem:[#allocation2 + $0x78] sm:$0xff]
    %v1066 = vpack.c.bf16 %v1058, %v1058
    %v1067 = vpack.c.bf16 %v1059, %v1059
    %1068 = vmatprep.subr.bf16.mxu0 %v741
    %1069 = vmatpush1.bf16.msra.mxu0 %v740
    %1070 = vmatprep.subr.bf16.mxu0 %v737
    %1071 = vmatpush1.bf16.msra.mxu0 %v736
    %1072 = vmatprep.subr.bf16.mxu0 %v733
    %1073 = vmatpush1.bf16.msra.mxu0 %v732
    %1074 = vmatprep.subr.bf16.mxu0 %v729
    %1075 = vmatpush1.bf16.msra.mxu0 %v728
    %1076 = vmatprep.subr.bf16.mxu0 %v725
    %1077 = vmatpush1.bf16.msra.mxu0 %v724
    %1078 = vmatprep.subr.bf16.mxu0 %v721
    %1079 = vmatpush1.bf16.msra.mxu0 %v720
    %1080 = vmatprep.subr.bf16.mxu0 %v717
    %1081 = vmatpush1.bf16.msra.mxu0 %v716
    %1082 = vmatprep.subr.bf16.mxu0 %v713
    %1083 = vmatpush1.bf16.msra.mxu0 %v712
    %1084 = vmatprep.subr.bf16.mxu0 %v773
    %1085 = vmatpush2.bf16.msra.mxu0 %v772
    %1086 = vmatprep.subr.bf16.mxu0 %v769
    %1087 = vmatpush2.bf16.msra.mxu0 %v768
    %1088 = vmatprep.subr.bf16.mxu0 %v765
    %1089 = vmatpush2.bf16.msra.mxu0 %v764
    %1090 = vmatprep.subr.bf16.mxu0 %v761
    %1091 = vmatpush2.bf16.msra.mxu0 %v760
    %1092 = vmatprep.subr.bf16.mxu0 %v757
    %1093 = vmatpush2.bf16.msra.mxu0 %v756
    %1094 = vmatprep.subr.bf16.mxu0 %v753
    %1095 = vmatpush2.bf16.msra.mxu0 %v752
    %1096 = vmatprep.subr.bf16.mxu0 %v749
    %1097 = vmatpush2.bf16.msra.mxu0 %v748
    %1098 = vmatprep.subr.bf16.mxu0 %v745
    %1099 = vmatpush2.bf16.msra.mxu0 %v744
    %1100 = vmatprep.mubr.bf16.mxu0 %v1067
    %1101 = vmatmul.mubr.bf16.gmra.mxu0 %v1066
    %v1102 = vpop.f32.mrf.mxu0
    %v1103 = vadd.f32 0.0, %v1102
    %v1104 = vpop.f32.mrf.mxu0
    %v1105 = vadd.f32 0.0, %v1104
    %v1106 = vpop.f32.mrf.mxu0
    %v1107 = vpop.f32.mrf.mxu0
    %1108 = vdwg.mxu0
    %1109 = vmatprep.subr.bf16.mxu0 %v743
    %1110 = vmatpush1.bf16.msra.mxu0 %v742
    %1111 = vmatprep.subr.bf16.mxu0 %v739
    %1112 = vmatpush1.bf16.msra.mxu0 %v738
    %1113 = vmatprep.subr.bf16.mxu0 %v735
    %1114 = vmatpush1.bf16.msra.mxu0 %v734
    %1115 = vmatprep.subr.bf16.mxu0 %v731
    %1116 = vmatpush1.bf16.msra.mxu0 %v730
    %1117 = vmatprep.subr.bf16.mxu0 %v727
    %1118 = vmatpush1.bf16.msra.mxu0 %v726
    %1119 = vmatprep.subr.bf16.mxu0 %v723
    %1120 = vmatpush1.bf16.msra.mxu0 %v722
    %1121 = vmatprep.subr.bf16.mxu0 %v719
    %1122 = vmatpush1.bf16.msra.mxu0 %v718
    %1123 = vmatprep.subr.bf16.mxu0 %v715
    %1124 = vmatpush1.bf16.msra.mxu0 %v714
    %1125 = vmatprep.subr.bf16.mxu0 %v775
    %1126 = vmatpush2.bf16.msra.mxu0 %v774
    %1127 = vmatprep.subr.bf16.mxu0 %v771
    %1128 = vmatpush2.bf16.msra.mxu0 %v770
    %1129 = vmatprep.subr.bf16.mxu0 %v767
    %1130 = vmatpush2.bf16.msra.mxu0 %v766
    %1131 = vmatprep.subr.bf16.mxu0 %v763
    %1132 = vmatpush2.bf16.msra.mxu0 %v762
    %1133 = vmatprep.subr.bf16.mxu0 %v759
    %1134 = vmatpush2.bf16.msra.mxu0 %v758
    %1135 = vmatprep.subr.bf16.mxu0 %v755
    %1136 = vmatpush2.bf16.msra.mxu0 %v754
    %1137 = vmatprep.subr.bf16.mxu0 %v751
    %1138 = vmatpush2.bf16.msra.mxu0 %v750
    %1139 = vmatprep.subr.bf16.mxu0 %v747
    %1140 = vmatpush2.bf16.msra.mxu0 %v746
    %1141 = vmatprep.mubr.bf16.mxu0 %v1067
    %1142 = vmatmul.mubr.bf16.gmra.mxu0 %v1066
    %v1143 = vpop.f32.mrf.mxu0
    %v1144 = vadd.f32 0.0, %v1143
    %v1145 = vpop.f32.mrf.mxu0
    %v1146 = vadd.f32 0.0, %v1145
    %v1147 = vpop.f32.mrf.mxu0
    %v1148 = vpop.f32.mrf.mxu0
    %1149 = vdwg.mxu0
    %v1150 = vadd.f32 %v1062, %v1103
    %v1151 = vadd.f32 %v1063, %v1105
    %v1152 = vadd.f32 %v1064, %v1144
    %v1153 = vadd.f32 %v1065, %v1146
    %v1154 = vmul.f32 %v1150, 0.5
    %v1155 = vmul.f32 %v1151, 0.5
    %v1156 = vmul.f32 %v1152, 0.5
    %v1157 = vtanh.pop %v1154
    %v1158 = vtanh.pop %v1155
    %v1159 = vtanh.pop %v1156
    %v1160 = vmul.f32 %v1157, 0.5
    %v1161 = vmul.f32 %v1158, 0.5
    %v1162 = vmul.f32 %v1159, 0.5
    %v1163 = vadd.f32 %v1160, 0.5
    %v1164 = vadd.f32 %v1161, 0.5
    %v1165 = vadd.f32 %v1162, 0.5
    %v1166 = vtanh.pop %v1153
    %v1167 = vmul.f32 %v1164, %v1055
    %v1168 = vmul.f32 %v1163, %v1166
    %v1169 = vadd.f32 %v1167, %v1168
    %v1170 = vtanh.pop %v1169
    %v1171 = vmul.f32 %v1165, %v1170
    %v1172 = vsel %vm124, %v1171, 0.0
    %v1173 = vsel %vm124, 0.0, %v1171
    %1174 = vst [vmem:[#allocation3 + $0x30] sm:$0xff] %v1172
    %1175 = vst [vmem:[#allocation3 + $0x38] sm:$0xff] %v1173
    %v1176 = vld [vmem:[#allocation2 + $0x80] sm:$0xff]
    %v1177 = vld [vmem:[#allocation2 + $0x88] sm:$0xff]
    %v1178 = vld [vmem:[#allocation2 + $0x90] sm:$0xff]
    %v1179 = vld [vmem:[#allocation2 + $0x98] sm:$0xff]
    %v1180 = vpack.c.bf16 %v1172, %v1172
    %v1181 = vpack.c.bf16 %v1173, %v1173
    %1182 = vmatprep.subr.bf16.mxu0 %v741
    %1183 = vmatpush1.bf16.msra.mxu0 %v740
    %1184 = vmatprep.subr.bf16.mxu0 %v737
    %1185 = vmatpush1.bf16.msra.mxu0 %v736
    %1186 = vmatprep.subr.bf16.mxu0 %v733
    %1187 = vmatpush1.bf16.msra.mxu0 %v732
    %1188 = vmatprep.subr.bf16.mxu0 %v729
    %1189 = vmatpush1.bf16.msra.mxu0 %v728
    %1190 = vmatprep.subr.bf16.mxu0 %v725
    %1191 = vmatpush1.bf16.msra.mxu0 %v724
    %1192 = vmatprep.subr.bf16.mxu0 %v721
    %1193 = vmatpush1.bf16.msra.mxu0 %v720
    %1194 = vmatprep.subr.bf16.mxu0 %v717
    %1195 = vmatpush1.bf16.msra.mxu0 %v716
    %1196 = vmatprep.subr.bf16.mxu0 %v713
    %1197 = vmatpush1.bf16.msra.mxu0 %v712
    %1198 = vmatprep.subr.bf16.mxu0 %v773
    %1199 = vmatpush2.bf16.msra.mxu0 %v772
    %1200 = vmatprep.subr.bf16.mxu0 %v769
    %1201 = vmatpush2.bf16.msra.mxu0 %v768
    %1202 = vmatprep.subr.bf16.mxu0 %v765
    %1203 = vmatpush2.bf16.msra.mxu0 %v764
    %1204 = vmatprep.subr.bf16.mxu0 %v761
    %1205 = vmatpush2.bf16.msra.mxu0 %v760
    %1206 = vmatprep.subr.bf16.mxu0 %v757
    %1207 = vmatpush2.bf16.msra.mxu0 %v756
    %1208 = vmatprep.subr.bf16.mxu0 %v753
    %1209 = vmatpush2.bf16.msra.mxu0 %v752
    %1210 = vmatprep.subr.bf16.mxu0 %v749
    %1211 = vmatpush2.bf16.msra.mxu0 %v748
    %1212 = vmatprep.subr.bf16.mxu0 %v745
    %1213 = vmatpush2.bf16.msra.mxu0 %v744
    %1214 = vmatprep.mubr.bf16.mxu0 %v1181
    %1215 = vmatmul.mubr.bf16.gmra.mxu0 %v1180
    %v1216 = vpop.f32.mrf.mxu0
    %v1217 = vadd.f32 0.0, %v1216
    %v1218 = vpop.f32.mrf.mxu0
    %v1219 = vadd.f32 0.0, %v1218
    %v1220 = vpop.f32.mrf.mxu0
    %v1221 = vpop.f32.mrf.mxu0
    %1222 = vdwg.mxu0
    %1223 = vmatprep.subr.bf16.mxu0 %v743
    %1224 = vmatpush1.bf16.msra.mxu0 %v742
    %1225 = vmatprep.subr.bf16.mxu0 %v739
    %1226 = vmatpush1.bf16.msra.mxu0 %v738
    %1227 = vmatprep.subr.bf16.mxu0 %v735
    %1228 = vmatpush1.bf16.msra.mxu0 %v734
    %1229 = vmatprep.subr.bf16.mxu0 %v731
    %1230 = vmatpush1.bf16.msra.mxu0 %v730
    %1231 = vmatprep.subr.bf16.mxu0 %v727
    %1232 = vmatpush1.bf16.msra.mxu0 %v726
    %1233 = vmatprep.subr.bf16.mxu0 %v723
    %1234 = vmatpush1.bf16.msra.mxu0 %v722
    %1235 = vmatprep.subr.bf16.mxu0 %v719
    %1236 = vmatpush1.bf16.msra.mxu0 %v718
    %1237 = vmatprep.subr.bf16.mxu0 %v715
    %1238 = vmatpush1.bf16.msra.mxu0 %v714
    %1239 = vmatprep.subr.bf16.mxu0 %v775
    %1240 = vmatpush2.bf16.msra.mxu0 %v774
    %1241 = vmatprep.subr.bf16.mxu0 %v771
    %1242 = vmatpush2.bf16.msra.mxu0 %v770
    %1243 = vmatprep.subr.bf16.mxu0 %v767
    %1244 = vmatpush2.bf16.msra.mxu0 %v766
    %1245 = vmatprep.subr.bf16.mxu0 %v763
    %1246 = vmatpush2.bf16.msra.mxu0 %v762
    %1247 = vmatprep.subr.bf16.mxu0 %v759
    %1248 = vmatpush2.bf16.msra.mxu0 %v758
    %1249 = vmatprep.subr.bf16.mxu0 %v755
    %1250 = vmatpush2.bf16.msra.mxu0 %v754
    %1251 = vmatprep.subr.bf16.mxu0 %v751
    %1252 = vmatpush2.bf16.msra.mxu0 %v750
    %1253 = vmatprep.subr.bf16.mxu0 %v747
    %1254 = vmatpush2.bf16.msra.mxu0 %v746
    %1255 = vmatprep.mubr.bf16.mxu0 %v1181
    %1256 = vmatmul.mubr.bf16.gmra.mxu0 %v1180
    %v1257 = vpop.f32.mrf.mxu0
    %v1258 = vadd.f32 0.0, %v1257
    %v1259 = vpop.f32.mrf.mxu0
    %v1260 = vadd.f32 0.0, %v1259
    %v1261 = vpop.f32.mrf.mxu0
    %v1262 = vpop.f32.mrf.mxu0
    %1263 = vdwg.mxu0
    %v1264 = vadd.f32 %v1176, %v1217
    %v1265 = vadd.f32 %v1177, %v1219
    %v1266 = vadd.f32 %v1178, %v1258
    %v1267 = vadd.f32 %v1179, %v1260
    %v1268 = vmul.f32 %v1264, 0.5
    %v1269 = vmul.f32 %v1265, 0.5
    %v1270 = vmul.f32 %v1266, 0.5
    %v1271 = vtanh.pop %v1268
    %v1272 = vtanh.pop %v1269
    %v1273 = vtanh.pop %v1270
    %v1274 = vmul.f32 %v1271, 0.5
    %v1275 = vmul.f32 %v1272, 0.5
    %v1276 = vmul.f32 %v1273, 0.5
    %v1277 = vadd.f32 %v1274, 0.5
    %v1278 = vadd.f32 %v1275, 0.5
    %v1279 = vadd.f32 %v1276, 0.5
    %v1280 = vtanh.pop %v1267
    %v1281 = vmul.f32 %v1278, %v1169
    %v1282 = vmul.f32 %v1277, %v1280
    %v1283 = vadd.f32 %v1281, %v1282
    %v1284 = vtanh.pop %v1283
    %v1285 = vmul.f32 %v1279, %v1284
    %v1286 = vsel %vm124, %v1285, 0.0
    %v1287 = vsel %vm124, 0.0, %v1285
    %1288 = vst [vmem:[#allocation3 + $0x40] sm:$0xff] %v1286
    %1289 = vst [vmem:[#allocation3 + $0x48] sm:$0xff] %v1287
    %v1290 = vld [vmem:[#allocation2 + $0xa0] sm:$0xff]
    %v1291 = vld [vmem:[#allocation2 + $0xa8] sm:$0xff]
    %v1292 = vld [vmem:[#allocation2 + $0xb0] sm:$0xff]
    %v1293 = vld [vmem:[#allocation2 + $0xb8] sm:$0xff]
    %v1294 = vpack.c.bf16 %v1286, %v1286
    %v1295 = vpack.c.bf16 %v1287, %v1287
    %1296 = vmatprep.subr.bf16.mxu0 %v741
    %1297 = vmatpush1.bf16.msra.mxu0 %v740
    %1298 = vmatprep.subr.bf16.mxu0 %v737
    %1299 = vmatpush1.bf16.msra.mxu0 %v736
    %1300 = vmatprep.subr.bf16.mxu0 %v733
    %1301 = vmatpush1.bf16.msra.mxu0 %v732
    %1302 = vmatprep.subr.bf16.mxu0 %v729
    %1303 = vmatpush1.bf16.msra.mxu0 %v728
    %1304 = vmatprep.subr.bf16.mxu0 %v725
    %1305 = vmatpush1.bf16.msra.mxu0 %v724
    %1306 = vmatprep.subr.bf16.mxu0 %v721
    %1307 = vmatpush1.bf16.msra.mxu0 %v720
    %1308 = vmatprep.subr.bf16.mxu0 %v717
    %1309 = vmatpush1.bf16.msra.mxu0 %v716
    %1310 = vmatprep.subr.bf16.mxu0 %v713
    %1311 = vmatpush1.bf16.msra.mxu0 %v712
    %1312 = vmatprep.subr.bf16.mxu0 %v773
    %1313 = vmatpush2.bf16.msra.mxu0 %v772
    %1314 = vmatprep.subr.bf16.mxu0 %v769
    %1315 = vmatpush2.bf16.msra.mxu0 %v768
    %1316 = vmatprep.subr.bf16.mxu0 %v765
    %1317 = vmatpush2.bf16.msra.mxu0 %v764
    %1318 = vmatprep.subr.bf16.mxu0 %v761
    %1319 = vmatpush2.bf16.msra.mxu0 %v760
    %1320 = vmatprep.subr.bf16.mxu0 %v757
    %1321 = vmatpush2.bf16.msra.mxu0 %v756
    %1322 = vmatprep.subr.bf16.mxu0 %v753
    %1323 = vmatpush2.bf16.msra.mxu0 %v752
    %1324 = vmatprep.subr.bf16.mxu0 %v749
    %1325 = vmatpush2.bf16.msra.mxu0 %v748
    %1326 = vmatprep.subr.bf16.mxu0 %v745
    %1327 = vmatpush2.bf16.msra.mxu0 %v744
    %1328 = vmatprep.mubr.bf16.mxu0 %v1295
    %1329 = vmatmul.mubr.bf16.gmra.mxu0 %v1294
    %v1330 = vpop.f32.mrf.mxu0
    %v1331 = vadd.f32 0.0, %v1330
    %v1332 = vpop.f32.mrf.mxu0
    %v1333 = vadd.f32 0.0, %v1332
    %v1334 = vpop.f32.mrf.mxu0
    %v1335 = vpop.f32.mrf.mxu0
    %1336 = vdwg.mxu0
    %1337 = vmatprep.subr.bf16.mxu0 %v743
    %1338 = vmatpush1.bf16.msra.mxu0 %v742
    %1339 = vmatprep.subr.bf16.mxu0 %v739
    %1340 = vmatpush1.bf16.msra.mxu0 %v738
    %1341 = vmatprep.subr.bf16.mxu0 %v735
    %1342 = vmatpush1.bf16.msra.mxu0 %v734
    %1343 = vmatprep.subr.bf16.mxu0 %v731
    %1344 = vmatpush1.bf16.msra.mxu0 %v730
    %1345 = vmatprep.subr.bf16.mxu0 %v727
    %1346 = vmatpush1.bf16.msra.mxu0 %v726
    %1347 = vmatprep.subr.bf16.mxu0 %v723
    %1348 = vmatpush1.bf16.msra.mxu0 %v722
    %1349 = vmatprep.subr.bf16.mxu0 %v719
    %1350 = vmatpush1.bf16.msra.mxu0 %v718
    %1351 = vmatprep.subr.bf16.mxu0 %v715
    %1352 = vmatpush1.bf16.msra.mxu0 %v714
    %1353 = vmatprep.subr.bf16.mxu0 %v775
    %1354 = vmatpush2.bf16.msra.mxu0 %v774
    %1355 = vmatprep.subr.bf16.mxu0 %v771
    %1356 = vmatpush2.bf16.msra.mxu0 %v770
    %1357 = vmatprep.subr.bf16.mxu0 %v767
    %1358 = vmatpush2.bf16.msra.mxu0 %v766
    %1359 = vmatprep.subr.bf16.mxu0 %v763
    %1360 = vmatpush2.bf16.msra.mxu0 %v762
    %1361 = vmatprep.subr.bf16.mxu0 %v759
    %1362 = vmatpush2.bf16.msra.mxu0 %v758
    %1363 = vmatprep.subr.bf16.mxu0 %v755
    %1364 = vmatpush2.bf16.msra.mxu0 %v754
    %1365 = vmatprep.subr.bf16.mxu0 %v751
    %1366 = vmatpush2.bf16.msra.mxu0 %v750
    %1367 = vmatprep.subr.bf16.mxu0 %v747
    %1368 = vmatpush2.bf16.msra.mxu0 %v746
    %1369 = vmatprep.mubr.bf16.mxu0 %v1295
    %1370 = vmatmul.mubr.bf16.gmra.mxu0 %v1294
    %v1371 = vpop.f32.mrf.mxu0
    %v1372 = vadd.f32 0.0, %v1371
    %v1373 = vpop.f32.mrf.mxu0
    %v1374 = vadd.f32 0.0, %v1373
    %v1375 = vpop.f32.mrf.mxu0
    %v1376 = vpop.f32.mrf.mxu0
    %1377 = vdwg.mxu0
    %v1378 = vadd.f32 %v1290, %v1331
    %v1379 = vadd.f32 %v1291, %v1333
    %v1380 = vadd.f32 %v1292, %v1372
    %v1381 = vadd.f32 %v1293, %v1374
    %v1382 = vmul.f32 %v1378, 0.5
    %v1383 = vmul.f32 %v1379, 0.5
    %v1384 = vmul.f32 %v1380, 0.5
    %v1385 = vtanh.pop %v1382
    %v1386 = vtanh.pop %v1383
    %v1387 = vtanh.pop %v1384
    %v1388 = vmul.f32 %v1385, 0.5
    %v1389 = vmul.f32 %v1386, 0.5
    %v1390 = vmul.f32 %v1387, 0.5
    %v1391 = vadd.f32 %v1388, 0.5
    %v1392 = vadd.f32 %v1389, 0.5
    %v1393 = vadd.f32 %v1390, 0.5
    %v1394 = vtanh.pop %v1381
    %v1395 = vmul.f32 %v1392, %v1283
    %v1396 = vmul.f32 %v1391, %v1394
    %v1397 = vadd.f32 %v1395, %v1396
    %v1398 = vtanh.pop %v1397
    %v1399 = vmul.f32 %v1393, %v1398
    %v1400 = vsel %vm124, %v1399, 0.0
    %v1401 = vsel %vm124, 0.0, %v1399
    %1402 = vst [vmem:[#allocation3 + $0x50] sm:$0xff] %v1400
    %1403 = vst [vmem:[#allocation3 + $0x58] sm:$0xff] %v1401
    %v1404 = vld [vmem:[#allocation2 + $0xc0] sm:$0xff]
    %v1405 = vld [vmem:[#allocation2 + $0xc8] sm:$0xff]
    %v1406 = vld [vmem:[#allocation2 + $0xd0] sm:$0xff]
    %v1407 = vld [vmem:[#allocation2 + $0xd8] sm:$0xff]
    %v1408 = vpack.c.bf16 %v1400, %v1400
    %v1409 = vpack.c.bf16 %v1401, %v1401
    %1410 = vmatprep.subr.bf16.mxu0 %v741
    %1411 = vmatpush1.bf16.msra.mxu0 %v740
    %1412 = vmatprep.subr.bf16.mxu0 %v737
    %1413 = vmatpush1.bf16.msra.mxu0 %v736
    %1414 = vmatprep.subr.bf16.mxu0 %v733
    %1415 = vmatpush1.bf16.msra.mxu0 %v732
    %1416 = vmatprep.subr.bf16.mxu0 %v729
    %1417 = vmatpush1.bf16.msra.mxu0 %v728
    %1418 = vmatprep.subr.bf16.mxu0 %v725
    %1419 = vmatpush1.bf16.msra.mxu0 %v724
    %1420 = vmatprep.subr.bf16.mxu0 %v721
    %1421 = vmatpush1.bf16.msra.mxu0 %v720
    %1422 = vmatprep.subr.bf16.mxu0 %v717
    %1423 = vmatpush1.bf16.msra.mxu0 %v716
    %1424 = vmatprep.subr.bf16.mxu0 %v713
    %1425 = vmatpush1.bf16.msra.mxu0 %v712
    %1426 = vmatprep.subr.bf16.mxu0 %v773
    %1427 = vmatpush2.bf16.msra.mxu0 %v772
    %1428 = vmatprep.subr.bf16.mxu0 %v769
    %1429 = vmatpush2.bf16.msra.mxu0 %v768
    %1430 = vmatprep.subr.bf16.mxu0 %v765
    %1431 = vmatpush2.bf16.msra.mxu0 %v764
    %1432 = vmatprep.subr.bf16.mxu0 %v761
    %1433 = vmatpush2.bf16.msra.mxu0 %v760
    %1434 = vmatprep.subr.bf16.mxu0 %v757
    %1435 = vmatpush2.bf16.msra.mxu0 %v756
    %1436 = vmatprep.subr.bf16.mxu0 %v753
    %1437 = vmatpush2.bf16.msra.mxu0 %v752
    %1438 = vmatprep.subr.bf16.mxu0 %v749
    %1439 = vmatpush2.bf16.msra.mxu0 %v748
    %1440 = vmatprep.subr.bf16.mxu0 %v745
    %1441 = vmatpush2.bf16.msra.mxu0 %v744
    %1442 = vmatprep.mubr.bf16.mxu0 %v1409
    %1443 = vmatmul.mubr.bf16.gmra.mxu0 %v1408
    %v1444 = vpop.f32.mrf.mxu0
    %v1445 = vadd.f32 0.0, %v1444
    %v1446 = vpop.f32.mrf.mxu0
    %v1447 = vadd.f32 0.0, %v1446
    %v1448 = vpop.f32.mrf.mxu0
    %v1449 = vpop.f32.mrf.mxu0
    %1450 = vdwg.mxu0
    %1451 = vmatprep.subr.bf16.mxu0 %v743
    %1452 = vmatpush1.bf16.msra.mxu0 %v742
    %1453 = vmatprep.subr.bf16.mxu0 %v739
    %1454 = vmatpush1.bf16.msra.mxu0 %v738
    %1455 = vmatprep.subr.bf16.mxu0 %v735
    %1456 = vmatpush1.bf16.msra.mxu0 %v734
    %1457 = vmatprep.subr.bf16.mxu0 %v731
    %1458 = vmatpush1.bf16.msra.mxu0 %v730
    %1459 = vmatprep.subr.bf16.mxu0 %v727
    %1460 = vmatpush1.bf16.msra.mxu0 %v726
    %1461 = vmatprep.subr.bf16.mxu0 %v723
    %1462 = vmatpush1.bf16.msra.mxu0 %v722
    %1463 = vmatprep.subr.bf16.mxu0 %v719
    %1464 = vmatpush1.bf16.msra.mxu0 %v718
    %1465 = vmatprep.subr.bf16.mxu0 %v715
    %1466 = vmatpush1.bf16.msra.mxu0 %v714
    %1467 = vmatprep.subr.bf16.mxu0 %v775
    %1468 = vmatpush2.bf16.msra.mxu0 %v774
    %1469 = vmatprep.subr.bf16.mxu0 %v771
    %1470 = vmatpush2.bf16.msra.mxu0 %v770
    %1471 = vmatprep.subr.bf16.mxu0 %v767
    %1472 = vmatpush2.bf16.msra.mxu0 %v766
    %1473 = vmatprep.subr.bf16.mxu0 %v763
    %1474 = vmatpush2.bf16.msra.mxu0 %v762
    %1475 = vmatprep.subr.bf16.mxu0 %v759
    %1476 = vmatpush2.bf16.msra.mxu0 %v758
    %1477 = vmatprep.subr.bf16.mxu0 %v755
    %1478 = vmatpush2.bf16.msra.mxu0 %v754
    %1479 = vmatprep.subr.bf16.mxu0 %v751
    %1480 = vmatpush2.bf16.msra.mxu0 %v750
    %1481 = vmatprep.subr.bf16.mxu0 %v747
    %1482 = vmatpush2.bf16.msra.mxu0 %v746
    %1483 = vmatprep.mubr.bf16.mxu0 %v1409
    %1484 = vmatmul.mubr.bf16.gmra.mxu0 %v1408
    %v1485 = vpop.f32.mrf.mxu0
    %v1486 = vadd.f32 0.0, %v1485
    %v1487 = vpop.f32.mrf.mxu0
    %v1488 = vadd.f32 0.0, %v1487
    %v1489 = vpop.f32.mrf.mxu0
    %v1490 = vpop.f32.mrf.mxu0
    %1491 = vdwg.mxu0
    %v1492 = vadd.f32 %v1404, %v1445
    %v1493 = vadd.f32 %v1405, %v1447
    %v1494 = vadd.f32 %v1406, %v1486
    %v1495 = vadd.f32 %v1407, %v1488
    %v1496 = vmul.f32 %v1492, 0.5
    %v1497 = vmul.f32 %v1493, 0.5
    %v1498 = vmul.f32 %v1494, 0.5
    %v1499 = vtanh.pop %v1496
    %v1500 = vtanh.pop %v1497
    %v1501 = vtanh.pop %v1498
    %v1502 = vmul.f32 %v1499, 0.5
    %v1503 = vmul.f32 %v1500, 0.5
    %v1504 = vmul.f32 %v1501, 0.5
    %v1505 = vadd.f32 %v1502, 0.5
    %v1506 = vadd.f32 %v1503, 0.5
    %v1507 = vadd.f32 %v1504, 0.5
    %v1508 = vtanh.pop %v1495
    %v1509 = vmul.f32 %v1506, %v1397
    %v1510 = vmul.f32 %v1505, %v1508
    %v1511 = vadd.f32 %v1509, %v1510
    %v1512 = vtanh.pop %v1511
    %v1513 = vmul.f32 %v1507, %v1512
    %v1514 = vsel %vm124, %v1513, 0.0
    %v1515 = vsel %vm124, 0.0, %v1513
    %1516 = vst [vmem:[#allocation3 + $0x60] sm:$0xff] %v1514
    %1517 = vst [vmem:[#allocation3 + $0x68] sm:$0xff] %v1515
    %v1518 = vld [vmem:[#allocation2 + $0xe0] sm:$0xff]
    %v1519 = vld [vmem:[#allocation2 + $0xe8] sm:$0xff]
    %v1520 = vld [vmem:[#allocation2 + $0xf0] sm:$0xff]
    %v1521 = vld [vmem:[#allocation2 + $0xf8] sm:$0xff]
    %v1522 = vpack.c.bf16 %v1514, %v1514
    %v1523 = vpack.c.bf16 %v1515, %v1515
    %1524 = vmatprep.subr.bf16.mxu0 %v741
    %1525 = vmatpush1.bf16.msra.mxu0 %v740
    %1526 = vmatprep.subr.bf16.mxu0 %v737
    %1527 = vmatpush1.bf16.msra.mxu0 %v736
    %1528 = vmatprep.subr.bf16.mxu0 %v733
    %1529 = vmatpush1.bf16.msra.mxu0 %v732
    %1530 = vmatprep.subr.bf16.mxu0 %v729
    %1531 = vmatpush1.bf16.msra.mxu0 %v728
    %1532 = vmatprep.subr.bf16.mxu0 %v725
    %1533 = vmatpush1.bf16.msra.mxu0 %v724
    %1534 = vmatprep.subr.bf16.mxu0 %v721
    %1535 = vmatpush1.bf16.msra.mxu0 %v720
    %1536 = vmatprep.subr.bf16.mxu0 %v717
    %1537 = vmatpush1.bf16.msra.mxu0 %v716
    %1538 = vmatprep.subr.bf16.mxu0 %v713
    %1539 = vmatpush1.bf16.msra.mxu0 %v712
    %1540 = vmatprep.subr.bf16.mxu0 %v773
    %1541 = vmatpush2.bf16.msra.mxu0 %v772
    %1542 = vmatprep.subr.bf16.mxu0 %v769
    %1543 = vmatpush2.bf16.msra.mxu0 %v768
    %1544 = vmatprep.subr.bf16.mxu0 %v765
    %1545 = vmatpush2.bf16.msra.mxu0 %v764
    %1546 = vmatprep.subr.bf16.mxu0 %v761
    %1547 = vmatpush2.bf16.msra.mxu0 %v760
    %1548 = vmatprep.subr.bf16.mxu0 %v757
    %1549 = vmatpush2.bf16.msra.mxu0 %v756
    %1550 = vmatprep.subr.bf16.mxu0 %v753
    %1551 = vmatpush2.bf16.msra.mxu0 %v752
    %1552 = vmatprep.subr.bf16.mxu0 %v749
    %1553 = vmatpush2.bf16.msra.mxu0 %v748
    %1554 = vmatprep.subr.bf16.mxu0 %v745
    %1555 = vmatpush2.bf16.msra.mxu0 %v744
    %1556 = vmatprep.mubr.bf16.mxu0 %v1523
    %1557 = vmatmul.mubr.bf16.gmra.mxu0 %v1522
    %v1558 = vpop.f32.mrf.mxu0
    %v1559 = vadd.f32 0.0, %v1558
    %v1560 = vpop.f32.mrf.mxu0
    %v1561 = vadd.f32 0.0, %v1560
    %v1562 = vpop.f32.mrf.mxu0
    %v1563 = vpop.f32.mrf.mxu0
    %1564 = vdwg.mxu0
    %1565 = vmatprep.subr.bf16.mxu0 %v743
    %1566 = vmatpush1.bf16.msra.mxu0 %v742
    %1567 = vmatprep.subr.bf16.mxu0 %v739
    %1568 = vmatpush1.bf16.msra.mxu0 %v738
    %1569 = vmatprep.subr.bf16.mxu0 %v735
    %1570 = vmatpush1.bf16.msra.mxu0 %v734
    %1571 = vmatprep.subr.bf16.mxu0 %v731
    %1572 = vmatpush1.bf16.msra.mxu0 %v730
    %1573 = vmatprep.subr.bf16.mxu0 %v727
    %1574 = vmatpush1.bf16.msra.mxu0 %v726
    %1575 = vmatprep.subr.bf16.mxu0 %v723
    %1576 = vmatpush1.bf16.msra.mxu0 %v722
    %1577 = vmatprep.subr.bf16.mxu0 %v719
    %1578 = vmatpush1.bf16.msra.mxu0 %v718
    %1579 = vmatprep.subr.bf16.mxu0 %v715
    %1580 = vmatpush1.bf16.msra.mxu0 %v714
    %1581 = vmatprep.subr.bf16.mxu0 %v775
    %1582 = vmatpush2.bf16.msra.mxu0 %v774
    %1583 = vmatprep.subr.bf16.mxu0 %v771
    %1584 = vmatpush2.bf16.msra.mxu0 %v770
    %1585 = vmatprep.subr.bf16.mxu0 %v767
    %1586 = vmatpush2.bf16.msra.mxu0 %v766
    %1587 = vmatprep.subr.bf16.mxu0 %v763
    %1588 = vmatpush2.bf16.msra.mxu0 %v762
    %1589 = vmatprep.subr.bf16.mxu0 %v759
    %1590 = vmatpush2.bf16.msra.mxu0 %v758
    %1591 = vmatprep.subr.bf16.mxu0 %v755
    %1592 = vmatpush2.bf16.msra.mxu0 %v754
    %1593 = vmatprep.subr.bf16.mxu0 %v751
    %1594 = vmatpush2.bf16.msra.mxu0 %v750
    %1595 = vmatprep.subr.bf16.mxu0 %v747
    %1596 = vmatpush2.bf16.msra.mxu0 %v746
    %1597 = vmatprep.mubr.bf16.mxu0 %v1523
    %1598 = vmatmul.mubr.bf16.gmra.mxu0 %v1522
    %v1599 = vpop.f32.mrf.mxu0
    %v1600 = vadd.f32 0.0, %v1599
    %v1601 = vpop.f32.mrf.mxu0
    %v1602 = vadd.f32 0.0, %v1601
    %v1603 = vpop.f32.mrf.mxu0
    %v1604 = vpop.f32.mrf.mxu0
    %1605 = vdwg.mxu0
    %v1606 = vadd.f32 %v1518, %v1559
    %v1607 = vadd.f32 %v1519, %v1561
    %v1608 = vadd.f32 %v1520, %v1600
    %v1609 = vadd.f32 %v1521, %v1602
    %v1610 = vmul.f32 %v1606, 0.5
    %v1611 = vmul.f32 %v1607, 0.5
    %v1612 = vmul.f32 %v1608, 0.5
    %v1613 = vtanh.pop %v1610
    %v1614 = vtanh.pop %v1611
    %v1615 = vtanh.pop %v1612
    %v1616 = vmul.f32 %v1613, 0.5
    %v1617 = vmul.f32 %v1614, 0.5
    %v1618 = vmul.f32 %v1615, 0.5
    %v1619 = vadd.f32 %v1616, 0.5
    %v1620 = vadd.f32 %v1617, 0.5
    %v1621 = vadd.f32 %v1618, 0.5
    %v1622 = vtanh.pop %v1609
    %v1623 = vmul.f32 %v1620, %v1511
    %v1624 = vmul.f32 %v1619, %v1622
    %v1625 = vadd.f32 %v1623, %v1624
    %v1626 = vtanh.pop %v1625
    %v1627 = vmul.f32 %v1621, %v1626
    %v1628 = vsel %vm124, %v1627, 0.0
    %v1629 = vsel %vm124, 0.0, %v1627
    %1630 = vst [vmem:[#allocation3 + $0x70] sm:$0xff] %v1628
    %1631 = vst [vmem:[#allocation3 + $0x78] sm:$0xff] %v1629
    %1632 = vst [vmem:[#allocation4] sm:$0xff] 0.0
    %1633 = vst [vmem:[#allocation4 + $0x8] sm:$0xff] 0.0
    %1634 = vst [vmem:[#allocation4 + $0x10] sm:$0xff] 0.0
    %1635 = vst [vmem:[#allocation4 + $0x18] sm:$0xff] 0.0
    %1636 = vst [vmem:[#allocation4 + $0x20] sm:$0xff] 0.0
    %1637 = vst [vmem:[#allocation4 + $0x28] sm:$0xff] 0.0
    %1638 = vst [vmem:[#allocation4 + $0x30] sm:$0xff] 0.0
    %1639 = vst [vmem:[#allocation4 + $0x38] sm:$0xff] 0.0
    %1640 = vst [vmem:[#allocation4 + $0x40] sm:$0xff] 0.0
    %1641 = vst [vmem:[#allocation4 + $0x48] sm:$0xff] 0.0
    %1642 = vst [vmem:[#allocation4 + $0x50] sm:$0xff] 0.0
    %1643 = vst [vmem:[#allocation4 + $0x58] sm:$0xff] 0.0
    %1644 = vst [vmem:[#allocation4 + $0x60] sm:$0xff] 0.0
    %1645 = vst [vmem:[#allocation4 + $0x68] sm:$0xff] 0.0
    %1646 = vst [vmem:[#allocation4 + $0x70] sm:$0xff] 0.0
    %1647 = vst [vmem:[#allocation4 + $0x78] sm:$0xff] 0.0
    %v1648 = vld [vmem:[#allocation3 + $0x70] sm:$0xff]
    %v1649 = vld [vmem:[#allocation3 + $0x78] sm:$0xff]
    %v1652 = vrot.slane %v1648, 2
    %v1653 = vrot.slane %v1649, 2
    %1656 = vst [vmem:[#allocation4] sm:$0x3] %v1652
    %1657 = vst [vmem:[#allocation4 + $0x8] sm:$0x3] %v1653
    %v1658 = vrot.slane %v1648, 6
    %v1659 = vrot.slane %v1649, 6
    %1662 = vst [vmem:[#allocation4] sm:$0xc] %v1658
    %1663 = vst [vmem:[#allocation4 + $0x8] sm:$0xc] %v1659
    %v1664 = vld [vmem:[#allocation3 + $0x60] sm:$0xff]
    %v1665 = vld [vmem:[#allocation3 + $0x68] sm:$0xff]
    %v1668 = vrot.slane %v1664, 2
    %v1669 = vrot.slane %v1665, 2
    %1672 = vst [vmem:[#allocation4 + $0x10] sm:$0x3] %v1668
    %1673 = vst [vmem:[#allocation4 + $0x18] sm:$0x3] %v1669
    %v1674 = vrot.slane %v1664, 6
    %v1675 = vrot.slane %v1665, 6
    %1678 = vst [vmem:[#allocation4 + $0x10] sm:$0xc] %v1674
    %1679 = vst [vmem:[#allocation4 + $0x18] sm:$0xc] %v1675
    %v1680 = vld [vmem:[#allocation3 + $0x50] sm:$0xff]
    %v1681 = vld [vmem:[#allocation3 + $0x58] sm:$0xff]
    %v1684 = vrot.slane %v1680, 2
    %v1685 = vrot.slane %v1681, 2
    %1688 = vst [vmem:[#allocation4 + $0x20] sm:$0x3] %v1684
    %1689 = vst [vmem:[#allocation4 + $0x28] sm:$0x3] %v1685
    %v1690 = vrot.slane %v1680, 6
    %v1691 = vrot.slane %v1681, 6
    %1694 = vst [vmem:[#allocation4 + $0x20] sm:$0xc] %v1690
    %1695 = vst [vmem:[#allocation4 + $0x28] sm:$0xc] %v1691
    %v1696 = vld [vmem:[#allocation3 + $0x40] sm:$0xff]
    %v1697 = vld [vmem:[#allocation3 + $0x48] sm:$0xff]
    %v1700 = vrot.slane %v1696, 2
    %v1701 = vrot.slane %v1697, 2
    %1704 = vst [vmem:[#allocation4 + $0x30] sm:$0x3] %v1700
    %1705 = vst [vmem:[#allocation4 + $0x38] sm:$0x3] %v1701
    %v1706 = vrot.slane %v1696, 6
    %v1707 = vrot.slane %v1697, 6
    %1710 = vst [vmem:[#allocation4 + $0x30] sm:$0xc] %v1706
    %1711 = vst [vmem:[#allocation4 + $0x38] sm:$0xc] %v1707
    %v1712 = vld [vmem:[#allocation3 + $0x30] sm:$0xff]
    %v1713 = vld [vmem:[#allocation3 + $0x38] sm:$0xff]
    %v1716 = vrot.slane %v1712, 2
    %v1717 = vrot.slane %v1713, 2
    %1720 = vst [vmem:[#allocation4 + $0x40] sm:$0x3] %v1716
    %1721 = vst [vmem:[#allocation4 + $0x48] sm:$0x3] %v1717
    %v1722 = vrot.slane %v1712, 6
    %v1723 = vrot.slane %v1713, 6
    %1726 = vst [vmem:[#allocation4 + $0x40] sm:$0xc] %v1722
    %1727 = vst [vmem:[#allocation4 + $0x48] sm:$0xc] %v1723
    %v1728 = vld [vmem:[#allocation3 + $0x20] sm:$0xff]
    %v1729 = vld [vmem:[#allocation3 + $0x28] sm:$0xff]
    %v1732 = vrot.slane %v1728, 2
    %v1733 = vrot.slane %v1729, 2
    %1736 = vst [vmem:[#allocation4 + $0x50] sm:$0x3] %v1732
    %1737 = vst [vmem:[#allocation4 + $0x58] sm:$0x3] %v1733
    %v1738 = vrot.slane %v1728, 6
    %v1739 = vrot.slane %v1729, 6
    %1742 = vst [vmem:[#allocation4 + $0x50] sm:$0xc] %v1738
    %1743 = vst [vmem:[#allocation4 + $0x58] sm:$0xc] %v1739
    %v1744 = vld [vmem:[#allocation3 + $0x10] sm:$0xff]
    %v1745 = vld [vmem:[#allocation3 + $0x18] sm:$0xff]
    %v1748 = vrot.slane %v1744, 2
    %v1749 = vrot.slane %v1745, 2
    %1752 = vst [vmem:[#allocation4 + $0x60] sm:$0x3] %v1748
    %1753 = vst [vmem:[#allocation4 + $0x68] sm:$0x3] %v1749
    %v1754 = vrot.slane %v1744, 6
    %v1755 = vrot.slane %v1745, 6
    %1758 = vst [vmem:[#allocation4 + $0x60] sm:$0xc] %v1754
    %1759 = vst [vmem:[#allocation4 + $0x68] sm:$0xc] %v1755
    %v1760 = vld [vmem:[#allocation3] sm:$0xff]
    %v1761 = vld [vmem:[#allocation3 + $0x8] sm:$0xff]
    %v1764 = vrot.slane %v1760, 2
    %v1765 = vrot.slane %v1761, 2
    %1768 = vst [vmem:[#allocation4 + $0x70] sm:$0x3] %v1764
    %1769 = vst [vmem:[#allocation4 + $0x78] sm:$0x3] %v1765
    %v1770 = vrot.slane %v1760, 6
    %v1771 = vrot.slane %v1761, 6
    %1774 = vst [vmem:[#allocation4 + $0x70] sm:$0xc] %v1770
    %1775 = vst [vmem:[#allocation4 + $0x78] sm:$0xc] %v1771
    %v1776 = vld [vmem:[#allocation3] sm:$0xff]
    %v1777 = vld [vmem:[#allocation3 + $0x8] sm:$0xff]
    %v1778 = vld [vmem:[#allocation3 + $0x10] sm:$0xff]
    %v1779 = vld [vmem:[#allocation3 + $0x18] sm:$0xff]
    %v1780 = vld [vmem:[#allocation3 + $0x20] sm:$0xff]
    %v1781 = vld [vmem:[#allocation3 + $0x28] sm:$0xff]
    %v1782 = vld [vmem:[#allocation3 + $0x30] sm:$0xff]
    %v1783 = vld [vmem:[#allocation3 + $0x38] sm:$0xff]
    %v1784 = vld [vmem:[#allocation3 + $0x40] sm:$0xff]
    %v1785 = vld [vmem:[#allocation3 + $0x48] sm:$0xff]
    %v1786 = vld [vmem:[#allocation3 + $0x50] sm:$0xff]
    %v1787 = vld [vmem:[#allocation3 + $0x58] sm:$0xff]
    %v1788 = vld [vmem:[#allocation3 + $0x60] sm:$0xff]
    %v1789 = vld [vmem:[#allocation3 + $0x68] sm:$0xff]
    %v1790 = vld [vmem:[#allocation3 + $0x70] sm:$0xff]
    %v1791 = vld [vmem:[#allocation3 + $0x78] sm:$0xff]
    %v1792 = vld [vmem:[#allocation4] sm:$0xff]
    %v1793 = vld [vmem:[#allocation4 + $0x8] sm:$0xff]
    %v1794 = vld [vmem:[#allocation4 + $0x10] sm:$0xff]
    %v1795 = vld [vmem:[#allocation4 + $0x18] sm:$0xff]
    %v1796 = vld [vmem:[#allocation4 + $0x20] sm:$0xff]
    %v1797 = vld [vmem:[#allocation4 + $0x28] sm:$0xff]
    %v1798 = vld [vmem:[#allocation4 + $0x30] sm:$0xff]
    %v1799 = vld [vmem:[#allocation4 + $0x38] sm:$0xff]
    %v1800 = vld [vmem:[#allocation4 + $0x40] sm:$0xff]
    %v1801 = vld [vmem:[#allocation4 + $0x48] sm:$0xff]
    %v1802 = vld [vmem:[#allocation4 + $0x50] sm:$0xff]
    %v1803 = vld [vmem:[#allocation4 + $0x58] sm:$0xff]
    %v1804 = vld [vmem:[#allocation4 + $0x60] sm:$0xff]
    %v1805 = vld [vmem:[#allocation4 + $0x68] sm:$0xff]
    %v1806 = vld [vmem:[#allocation4 + $0x70] sm:$0xff]
    %v1807 = vld [vmem:[#allocation4 + $0x78] sm:$0xff]
    %v1808 = vpack.c.bf16 %v1778, %v1776
    %v1809 = vpack.c.bf16 %v1779, %v1777
    %v1810 = vpack.c.bf16 %v1794, %v1792
    %v1811 = vpack.c.bf16 %v1795, %v1793
    %v1812 = vpack.c.bf16 %v1782, %v1780
    %v1813 = vpack.c.bf16 %v1783, %v1781
    %v1814 = vpack.c.bf16 %v1798, %v1796
    %v1815 = vpack.c.bf16 %v1799, %v1797
    %v1816 = vpack.c.bf16 %v1786, %v1784
    %v1817 = vpack.c.bf16 %v1787, %v1785
    %v1818 = vpack.c.bf16 %v1802, %v1800
    %v1819 = vpack.c.bf16 %v1803, %v1801
    %v1820 = vpack.c.bf16 %v1790, %v1788
    %v1821 = vpack.c.bf16 %v1791, %v1789
    %v1822 = vpack.c.bf16 %v1806, %v1804
    %v1823 = vpack.c.bf16 %v1807, %v1805
    %v1824 = vld [vmem:[#allocation10] sm:$0xff]
    %v1825 = vld [vmem:[#allocation10 + $0x8] sm:$0xff]
    %v1826 = vld [vmem:[#allocation10 + $0x10] sm:$0xff]
    %v1827 = vld [vmem:[#allocation10 + $0x18] sm:$0xff]
    %v1828 = vld [vmem:[#allocation10 + $0x20] sm:$0xff]
    %v1829 = vld [vmem:[#allocation10 + $0x28] sm:$0xff]
    %v1830 = vld [vmem:[#allocation10 + $0x30] sm:$0xff]
    %v1831 = vld [vmem:[#allocation10 + $0x38] sm:$0xff]
    %v1832 = vld [vmem:[#allocation10 + $0x40] sm:$0xff]
    %v1833 = vld [vmem:[#allocation10 + $0x48] sm:$0xff]
    %v1834 = vld [vmem:[#allocation10 + $0x50] sm:$0xff]
    %v1835 = vld [vmem:[#allocation10 + $0x58] sm:$0xff]
    %v1836 = vld [vmem:[#allocation10 + $0x60] sm:$0xff]
    %v1837 = vld [vmem:[#allocation10 + $0x68] sm:$0xff]
    %v1838 = vld [vmem:[#allocation10 + $0x70] sm:$0xff]
    %v1839 = vld [vmem:[#allocation10 + $0x78] sm:$0xff]
    %v1840 = vld [vmem:[#allocation10 + $0x80] sm:$0xff]
    %v1841 = vld [vmem:[#allocation10 + $0x88] sm:$0xff]
    %v1842 = vld [vmem:[#allocation10 + $0x90] sm:$0xff]
    %v1843 = vld [vmem:[#allocation10 + $0x98] sm:$0xff]
    %v1844 = vld [vmem:[#allocation10 + $0xa0] sm:$0xff]
    %v1845 = vld [vmem:[#allocation10 + $0xa8] sm:$0xff]
    %v1846 = vld [vmem:[#allocation10 + $0xb0] sm:$0xff]
    %v1847 = vld [vmem:[#allocation10 + $0xb8] sm:$0xff]
    %v1848 = vld [vmem:[#allocation10 + $0xc0] sm:$0xff]
    %v1849 = vld [vmem:[#allocation10 + $0xc8] sm:$0xff]
    %v1850 = vld [vmem:[#allocation10 + $0xd0] sm:$0xff]
    %v1851 = vld [vmem:[#allocation10 + $0xd8] sm:$0xff]
    %v1852 = vld [vmem:[#allocation10 + $0xe0] sm:$0xff]
    %v1853 = vld [vmem:[#allocation10 + $0xe8] sm:$0xff]
    %v1854 = vld [vmem:[#allocation10 + $0xf0] sm:$0xff]
    %v1855 = vld [vmem:[#allocation10 + $0xf8] sm:$0xff]
    %v1856 = vld [vmem:[#allocation10 + $0x100] sm:$0xff]
    %v1857 = vld [vmem:[#allocation10 + $0x108] sm:$0xff]
    %v1858 = vld [vmem:[#allocation10 + $0x110] sm:$0xff]
    %v1859 = vld [vmem:[#allocation10 + $0x118] sm:$0xff]
    %v1860 = vld [vmem:[#allocation10 + $0x120] sm:$0xff]
    %v1861 = vld [vmem:[#allocation10 + $0x128] sm:$0xff]
    %v1862 = vld [vmem:[#allocation10 + $0x130] sm:$0xff]
    %v1863 = vld [vmem:[#allocation10 + $0x138] sm:$0xff]
    %v1864 = vld [vmem:[#allocation10 + $0x140] sm:$0xff]
    %v1865 = vld [vmem:[#allocation10 + $0x148] sm:$0xff]
    %v1866 = vld [vmem:[#allocation10 + $0x150] sm:$0xff]
    %v1867 = vld [vmem:[#allocation10 + $0x158] sm:$0xff]
    %v1868 = vld [vmem:[#allocation10 + $0x160] sm:$0xff]
    %v1869 = vld [vmem:[#allocation10 + $0x168] sm:$0xff]
    %v1870 = vld [vmem:[#allocation10 + $0x170] sm:$0xff]
    %v1871 = vld [vmem:[#allocation10 + $0x178] sm:$0xff]
    %v1872 = vld [vmem:[#allocation10 + $0x180] sm:$0xff]
    %v1873 = vld [vmem:[#allocation10 + $0x188] sm:$0xff]
    %v1874 = vld [vmem:[#allocation10 + $0x190] sm:$0xff]
    %v1875 = vld [vmem:[#allocation10 + $0x198] sm:$0xff]
    %v1876 = vld [vmem:[#allocation10 + $0x1a0] sm:$0xff]
    %v1877 = vld [vmem:[#allocation10 + $0x1a8] sm:$0xff]
    %v1878 = vld [vmem:[#allocation10 + $0x1b0] sm:$0xff]
    %v1879 = vld [vmem:[#allocation10 + $0x1b8] sm:$0xff]
    %v1880 = vld [vmem:[#allocation10 + $0x1c0] sm:$0xff]
    %v1881 = vld [vmem:[#allocation10 + $0x1c8] sm:$0xff]
    %v1882 = vld [vmem:[#allocation10 + $0x1d0] sm:$0xff]
    %v1883 = vld [vmem:[#allocation10 + $0x1d8] sm:$0xff]
    %v1884 = vld [vmem:[#allocation10 + $0x1e0] sm:$0xff]
    %v1885 = vld [vmem:[#allocation10 + $0x1e8] sm:$0xff]
    %v1886 = vld [vmem:[#allocation10 + $0x1f0] sm:$0xff]
    %v1887 = vld [vmem:[#allocation10 + $0x1f8] sm:$0xff]
    %v1888 = vld [vmem:[#allocation10 + $0x200] sm:$0xff]
    %v1889 = vld [vmem:[#allocation10 + $0x208] sm:$0xff]
    %v1890 = vld [vmem:[#allocation10 + $0x210] sm:$0xff]
    %v1891 = vld [vmem:[#allocation10 + $0x218] sm:$0xff]
    %v1892 = vld [vmem:[#allocation10 + $0x220] sm:$0xff]
    %v1893 = vld [vmem:[#allocation10 + $0x228] sm:$0xff]
    %v1894 = vld [vmem:[#allocation10 + $0x230] sm:$0xff]
    %v1895 = vld [vmem:[#allocation10 + $0x238] sm:$0xff]
    %v1896 = vld [vmem:[#allocation10 + $0x240] sm:$0xff]
    %v1897 = vld [vmem:[#allocation10 + $0x248] sm:$0xff]
    %v1898 = vld [vmem:[#allocation10 + $0x250] sm:$0xff]
    %v1899 = vld [vmem:[#allocation10 + $0x258] sm:$0xff]
    %v1900 = vld [vmem:[#allocation10 + $0x260] sm:$0xff]
    %v1901 = vld [vmem:[#allocation10 + $0x268] sm:$0xff]
    %v1902 = vld [vmem:[#allocation10 + $0x270] sm:$0xff]
    %v1903 = vld [vmem:[#allocation10 + $0x278] sm:$0xff]
    %v1904 = vld [vmem:[#allocation10 + $0x280] sm:$0xff]
    %v1905 = vld [vmem:[#allocation10 + $0x288] sm:$0xff]
    %v1906 = vld [vmem:[#allocation10 + $0x290] sm:$0xff]
    %v1907 = vld [vmem:[#allocation10 + $0x298] sm:$0xff]
    %v1908 = vld [vmem:[#allocation10 + $0x2a0] sm:$0xff]
    %v1909 = vld [vmem:[#allocation10 + $0x2a8] sm:$0xff]
    %v1910 = vld [vmem:[#allocation10 + $0x2b0] sm:$0xff]
    %v1911 = vld [vmem:[#allocation10 + $0x2b8] sm:$0xff]
    %v1912 = vld [vmem:[#allocation10 + $0x2c0] sm:$0xff]
    %v1913 = vld [vmem:[#allocation10 + $0x2c8] sm:$0xff]
    %v1914 = vld [vmem:[#allocation10 + $0x2d0] sm:$0xff]
    %v1915 = vld [vmem:[#allocation10 + $0x2d8] sm:$0xff]
    %v1916 = vld [vmem:[#allocation10 + $0x2e0] sm:$0xff]
    %v1917 = vld [vmem:[#allocation10 + $0x2e8] sm:$0xff]
    %v1918 = vld [vmem:[#allocation10 + $0x2f0] sm:$0xff]
    %v1919 = vld [vmem:[#allocation10 + $0x2f8] sm:$0xff]
    %v1920 = vld [vmem:[#allocation10 + $0x300] sm:$0xff]
    %v1921 = vld [vmem:[#allocation10 + $0x308] sm:$0xff]
    %v1922 = vld [vmem:[#allocation10 + $0x310] sm:$0xff]
    %v1923 = vld [vmem:[#allocation10 + $0x318] sm:$0xff]
    %v1924 = vld [vmem:[#allocation10 + $0x320] sm:$0xff]
    %v1925 = vld [vmem:[#allocation10 + $0x328] sm:$0xff]
    %v1926 = vld [vmem:[#allocation10 + $0x330] sm:$0xff]
    %v1927 = vld [vmem:[#allocation10 + $0x338] sm:$0xff]
    %v1928 = vld [vmem:[#allocation10 + $0x340] sm:$0xff]
    %v1929 = vld [vmem:[#allocation10 + $0x348] sm:$0xff]
    %v1930 = vld [vmem:[#allocation10 + $0x350] sm:$0xff]
    %v1931 = vld [vmem:[#allocation10 + $0x358] sm:$0xff]
    %v1932 = vld [vmem:[#allocation10 + $0x360] sm:$0xff]
    %v1933 = vld [vmem:[#allocation10 + $0x368] sm:$0xff]
    %v1934 = vld [vmem:[#allocation10 + $0x370] sm:$0xff]
    %v1935 = vld [vmem:[#allocation10 + $0x378] sm:$0xff]
    %v1936 = vld [vmem:[#allocation10 + $0x380] sm:$0xff]
    %v1937 = vld [vmem:[#allocation10 + $0x388] sm:$0xff]
    %v1938 = vld [vmem:[#allocation10 + $0x390] sm:$0xff]
    %v1939 = vld [vmem:[#allocation10 + $0x398] sm:$0xff]
    %v1940 = vld [vmem:[#allocation10 + $0x3a0] sm:$0xff]
    %v1941 = vld [vmem:[#allocation10 + $0x3a8] sm:$0xff]
    %v1942 = vld [vmem:[#allocation10 + $0x3b0] sm:$0xff]
    %v1943 = vld [vmem:[#allocation10 + $0x3b8] sm:$0xff]
    %v1944 = vld [vmem:[#allocation10 + $0x3c0] sm:$0xff]
    %v1945 = vld [vmem:[#allocation10 + $0x3c8] sm:$0xff]
    %v1946 = vld [vmem:[#allocation10 + $0x3d0] sm:$0xff]
    %v1947 = vld [vmem:[#allocation10 + $0x3d8] sm:$0xff]
    %v1948 = vld [vmem:[#allocation10 + $0x3e0] sm:$0xff]
    %v1949 = vld [vmem:[#allocation10 + $0x3e8] sm:$0xff]
    %v1950 = vld [vmem:[#allocation10 + $0x3f0] sm:$0xff]
    %v1951 = vld [vmem:[#allocation10 + $0x3f8] sm:$0xff]
    %v1952 = vld [vmem:[#allocation11] sm:$0xff]
    %v1953 = vld [vmem:[#allocation11 + $0x8] sm:$0xff]
    %v1954 = vld [vmem:[#allocation11 + $0x10] sm:$0xff]
    %v1955 = vld [vmem:[#allocation11 + $0x18] sm:$0xff]
    %v1956 = vld [vmem:[#allocation11 + $0x20] sm:$0xff]
    %v1957 = vld [vmem:[#allocation11 + $0x28] sm:$0xff]
    %v1958 = vld [vmem:[#allocation11 + $0x30] sm:$0xff]
    %v1959 = vld [vmem:[#allocation11 + $0x38] sm:$0xff]
    %v1960 = vld [vmem:[#allocation11 + $0x40] sm:$0xff]
    %v1961 = vld [vmem:[#allocation11 + $0x48] sm:$0xff]
    %v1962 = vld [vmem:[#allocation11 + $0x50] sm:$0xff]
    %v1963 = vld [vmem:[#allocation11 + $0x58] sm:$0xff]
    %v1964 = vld [vmem:[#allocation11 + $0x60] sm:$0xff]
    %v1965 = vld [vmem:[#allocation11 + $0x68] sm:$0xff]
    %v1966 = vld [vmem:[#allocation11 + $0x70] sm:$0xff]
    %v1967 = vld [vmem:[#allocation11 + $0x78] sm:$0xff]
    %v1968 = vld [vmem:[#allocation11 + $0x80] sm:$0xff]
    %v1969 = vld [vmem:[#allocation11 + $0x88] sm:$0xff]
    %v1970 = vld [vmem:[#allocation11 + $0x90] sm:$0xff]
    %v1971 = vld [vmem:[#allocation11 + $0x98] sm:$0xff]
    %v1972 = vld [vmem:[#allocation11 + $0xa0] sm:$0xff]
    %v1973 = vld [vmem:[#allocation11 + $0xa8] sm:$0xff]
    %v1974 = vld [vmem:[#allocation11 + $0xb0] sm:$0xff]
    %v1975 = vld [vmem:[#allocation11 + $0xb8] sm:$0xff]
    %v1976 = vld [vmem:[#allocation11 + $0xc0] sm:$0xff]
    %v1977 = vld [vmem:[#allocation11 + $0xc8] sm:$0xff]
    %v1978 = vld [vmem:[#allocation11 + $0xd0] sm:$0xff]
    %v1979 = vld [vmem:[#allocation11 + $0xd8] sm:$0xff]
    %v1980 = vld [vmem:[#allocation11 + $0xe0] sm:$0xff]
    %v1981 = vld [vmem:[#allocation11 + $0xe8] sm:$0xff]
    %v1982 = vld [vmem:[#allocation11 + $0xf0] sm:$0xff]
    %v1983 = vld [vmem:[#allocation11 + $0xf8] sm:$0xff]
    %v2112 = vunpack.c.l.b16 %v1824
    %v2113 = vunpack.c.h.b16 %v1824
    %v2114 = vunpack.c.l.b16 %v1825
    %v2115 = vunpack.c.h.b16 %v1825
    %v2116 = vunpack.c.l.b16 %v1826
    %v2117 = vunpack.c.h.b16 %v1826
    %v2118 = vunpack.c.l.b16 %v1827
    %v2119 = vunpack.c.h.b16 %v1827
    %v2120 = vunpack.c.l.b16 %v1828
    %v2121 = vunpack.c.h.b16 %v1828
    %v2122 = vunpack.c.l.b16 %v1829
    %v2123 = vunpack.c.h.b16 %v1829
    %v2124 = vunpack.c.l.b16 %v1830
    %v2125 = vunpack.c.h.b16 %v1830
    %v2126 = vunpack.c.l.b16 %v1831
    %v2127 = vunpack.c.h.b16 %v1831
    %v2128 = vunpack.c.l.b16 %v1832
    %v2129 = vunpack.c.h.b16 %v1832
    %v2130 = vunpack.c.l.b16 %v1833
    %v2131 = vunpack.c.h.b16 %v1833
    %v2132 = vunpack.c.l.b16 %v1834
    %v2133 = vunpack.c.h.b16 %v1834
    %v2134 = vunpack.c.l.b16 %v1835
    %v2135 = vunpack.c.h.b16 %v1835
    %v2136 = vunpack.c.l.b16 %v1836
    %v2137 = vunpack.c.h.b16 %v1836
    %v2138 = vunpack.c.l.b16 %v1837
    %v2139 = vunpack.c.h.b16 %v1837
    %v2140 = vunpack.c.l.b16 %v1838
    %v2141 = vunpack.c.h.b16 %v1838
    %v2142 = vunpack.c.l.b16 %v1839
    %v2143 = vunpack.c.h.b16 %v1839
    %v2144 = vunpack.c.l.b16 %v1840
    %v2145 = vunpack.c.h.b16 %v1840
    %v2146 = vunpack.c.l.b16 %v1841
    %v2147 = vunpack.c.h.b16 %v1841
    %v2148 = vunpack.c.l.b16 %v1842
    %v2149 = vunpack.c.h.b16 %v1842
    %v2150 = vunpack.c.l.b16 %v1843
    %v2151 = vunpack.c.h.b16 %v1843
    %v2152 = vunpack.c.l.b16 %v1844
    %v2153 = vunpack.c.h.b16 %v1844
    %v2154 = vunpack.c.l.b16 %v1845
    %v2155 = vunpack.c.h.b16 %v1845
    %v2156 = vunpack.c.l.b16 %v1846
    %v2157 = vunpack.c.h.b16 %v1846
    %v2158 = vunpack.c.l.b16 %v1847
    %v2159 = vunpack.c.h.b16 %v1847
    %v2160 = vunpack.c.l.b16 %v1848
    %v2161 = vunpack.c.h.b16 %v1848
    %v2162 = vunpack.c.l.b16 %v1849
    %v2163 = vunpack.c.h.b16 %v1849
    %v2164 = vunpack.c.l.b16 %v1850
    %v2165 = vunpack.c.h.b16 %v1850
    %v2166 = vunpack.c.l.b16 %v1851
    %v2167 = vunpack.c.h.b16 %v1851
    %v2168 = vunpack.c.l.b16 %v1852
    %v2169 = vunpack.c.h.b16 %v1852
    %v2170 = vunpack.c.l.b16 %v1853
    %v2171 = vunpack.c.h.b16 %v1853
    %v2172 = vunpack.c.l.b16 %v1854
    %v2173 = vunpack.c.h.b16 %v1854
    %v2174 = vunpack.c.l.b16 %v1855
    %v2175 = vunpack.c.h.b16 %v1855
    %v2176 = vunpack.c.l.b16 %v1856
    %v2177 = vunpack.c.h.b16 %v1856
    %v2178 = vunpack.c.l.b16 %v1857
    %v2179 = vunpack.c.h.b16 %v1857
    %v2180 = vunpack.c.l.b16 %v1858
    %v2181 = vunpack.c.h.b16 %v1858
    %v2182 = vunpack.c.l.b16 %v1859
    %v2183 = vunpack.c.h.b16 %v1859
    %v2184 = vunpack.c.l.b16 %v1860
    %v2185 = vunpack.c.h.b16 %v1860
    %v2186 = vunpack.c.l.b16 %v1861
    %v2187 = vunpack.c.h.b16 %v1861
    %v2188 = vunpack.c.l.b16 %v1862
    %v2189 = vunpack.c.h.b16 %v1862
    %v2190 = vunpack.c.l.b16 %v1863
    %v2191 = vunpack.c.h.b16 %v1863
    %v2192 = vunpack.c.l.b16 %v1864
    %v2193 = vunpack.c.h.b16 %v1864
    %v2194 = vunpack.c.l.b16 %v1865
    %v2195 = vunpack.c.h.b16 %v1865
    %v2196 = vunpack.c.l.b16 %v1866
    %v2197 = vunpack.c.h.b16 %v1866
    %v2198 = vunpack.c.l.b16 %v1867
    %v2199 = vunpack.c.h.b16 %v1867
    %v2200 = vunpack.c.l.b16 %v1868
    %v2201 = vunpack.c.h.b16 %v1868
    %v2202 = vunpack.c.l.b16 %v1869
    %v2203 = vunpack.c.h.b16 %v1869
    %v2204 = vunpack.c.l.b16 %v1870
    %v2205 = vunpack.c.h.b16 %v1870
    %v2206 = vunpack.c.l.b16 %v1871
    %v2207 = vunpack.c.h.b16 %v1871
    %v2208 = vunpack.c.l.b16 %v1872
    %v2209 = vunpack.c.h.b16 %v1872
    %v2210 = vunpack.c.l.b16 %v1873
    %v2211 = vunpack.c.h.b16 %v1873
    %v2212 = vunpack.c.l.b16 %v1874
    %v2213 = vunpack.c.h.b16 %v1874
    %v2214 = vunpack.c.l.b16 %v1875
    %v2215 = vunpack.c.h.b16 %v1875
    %v2216 = vunpack.c.l.b16 %v1876
    %v2217 = vunpack.c.h.b16 %v1876
    %v2218 = vunpack.c.l.b16 %v1877
    %v2219 = vunpack.c.h.b16 %v1877
    %v2220 = vunpack.c.l.b16 %v1878
    %v2221 = vunpack.c.h.b16 %v1878
    %v2222 = vunpack.c.l.b16 %v1879
    %v2223 = vunpack.c.h.b16 %v1879
    %v2224 = vunpack.c.l.b16 %v1880
    %v2225 = vunpack.c.h.b16 %v1880
    %v2226 = vunpack.c.l.b16 %v1881
    %v2227 = vunpack.c.h.b16 %v1881
    %v2228 = vunpack.c.l.b16 %v1882
    %v2229 = vunpack.c.h.b16 %v1882
    %v2230 = vunpack.c.l.b16 %v1883
    %v2231 = vunpack.c.h.b16 %v1883
    %v2232 = vunpack.c.l.b16 %v1884
    %v2233 = vunpack.c.h.b16 %v1884
    %v2234 = vunpack.c.l.b16 %v1885
    %v2235 = vunpack.c.h.b16 %v1885
    %v2236 = vunpack.c.l.b16 %v1886
    %v2237 = vunpack.c.h.b16 %v1886
    %v2238 = vunpack.c.l.b16 %v1887
    %v2239 = vunpack.c.h.b16 %v1887
    %v2240 = vunpack.c.l.b16 %v1888
    %v2241 = vunpack.c.h.b16 %v1888
    %v2242 = vunpack.c.l.b16 %v1889
    %v2243 = vunpack.c.h.b16 %v1889
    %v2244 = vunpack.c.l.b16 %v1890
    %v2245 = vunpack.c.h.b16 %v1890
    %v2246 = vunpack.c.l.b16 %v1891
    %v2247 = vunpack.c.h.b16 %v1891
    %v2248 = vunpack.c.l.b16 %v1892
    %v2249 = vunpack.c.h.b16 %v1892
    %v2250 = vunpack.c.l.b16 %v1893
    %v2251 = vunpack.c.h.b16 %v1893
    %v2252 = vunpack.c.l.b16 %v1894
    %v2253 = vunpack.c.h.b16 %v1894
    %v2254 = vunpack.c.l.b16 %v1895
    %v2255 = vunpack.c.h.b16 %v1895
    %v2256 = vunpack.c.l.b16 %v1896
    %v2257 = vunpack.c.h.b16 %v1896
    %v2258 = vunpack.c.l.b16 %v1897
    %v2259 = vunpack.c.h.b16 %v1897
    %v2260 = vunpack.c.l.b16 %v1898
    %v2261 = vunpack.c.h.b16 %v1898
    %v2262 = vunpack.c.l.b16 %v1899
    %v2263 = vunpack.c.h.b16 %v1899
    %v2264 = vunpack.c.l.b16 %v1900
    %v2265 = vunpack.c.h.b16 %v1900
    %v2266 = vunpack.c.l.b16 %v1901
    %v2267 = vunpack.c.h.b16 %v1901
    %v2268 = vunpack.c.l.b16 %v1902
    %v2269 = vunpack.c.h.b16 %v1902
    %v2270 = vunpack.c.l.b16 %v1903
    %v2271 = vunpack.c.h.b16 %v1903
    %v2272 = vunpack.c.l.b16 %v1904
    %v2273 = vunpack.c.h.b16 %v1904
    %v2274 = vunpack.c.l.b16 %v1905
    %v2275 = vunpack.c.h.b16 %v1905
    %v2276 = vunpack.c.l.b16 %v1906
    %v2277 = vunpack.c.h.b16 %v1906
    %v2278 = vunpack.c.l.b16 %v1907
    %v2279 = vunpack.c.h.b16 %v1907
    %v2280 = vunpack.c.l.b16 %v1908
    %v2281 = vunpack.c.h.b16 %v1908
    %v2282 = vunpack.c.l.b16 %v1909
    %v2283 = vunpack.c.h.b16 %v1909
    %v2284 = vunpack.c.l.b16 %v1910
    %v2285 = vunpack.c.h.b16 %v1910
    %v2286 = vunpack.c.l.b16 %v1911
    %v2287 = vunpack.c.h.b16 %v1911
    %v2288 = vunpack.c.l.b16 %v1912
    %v2289 = vunpack.c.h.b16 %v1912
    %v2290 = vunpack.c.l.b16 %v1913
    %v2291 = vunpack.c.h.b16 %v1913
    %v2292 = vunpack.c.l.b16 %v1914
    %v2293 = vunpack.c.h.b16 %v1914
    %v2294 = vunpack.c.l.b16 %v1915
    %v2295 = vunpack.c.h.b16 %v1915
    %v2296 = vunpack.c.l.b16 %v1916
    %v2297 = vunpack.c.h.b16 %v1916
    %v2298 = vunpack.c.l.b16 %v1917
    %v2299 = vunpack.c.h.b16 %v1917
    %v2300 = vunpack.c.l.b16 %v1918
    %v2301 = vunpack.c.h.b16 %v1918
    %v2302 = vunpack.c.l.b16 %v1919
    %v2303 = vunpack.c.h.b16 %v1919
    %v2304 = vunpack.c.l.b16 %v1920
    %v2305 = vunpack.c.h.b16 %v1920
    %v2306 = vunpack.c.l.b16 %v1921
    %v2307 = vunpack.c.h.b16 %v1921
    %v2308 = vunpack.c.l.b16 %v1922
    %v2309 = vunpack.c.h.b16 %v1922
    %v2310 = vunpack.c.l.b16 %v1923
    %v2311 = vunpack.c.h.b16 %v1923
    %v2312 = vunpack.c.l.b16 %v1924
    %v2313 = vunpack.c.h.b16 %v1924
    %v2314 = vunpack.c.l.b16 %v1925
    %v2315 = vunpack.c.h.b16 %v1925
    %v2316 = vunpack.c.l.b16 %v1926
    %v2317 = vunpack.c.h.b16 %v1926
    %v2318 = vunpack.c.l.b16 %v1927
    %v2319 = vunpack.c.h.b16 %v1927
    %v2320 = vunpack.c.l.b16 %v1928
    %v2321 = vunpack.c.h.b16 %v1928
    %v2322 = vunpack.c.l.b16 %v1929
    %v2323 = vunpack.c.h.b16 %v1929
    %v2324 = vunpack.c.l.b16 %v1930
    %v2325 = vunpack.c.h.b16 %v1930
    %v2326 = vunpack.c.l.b16 %v1931
    %v2327 = vunpack.c.h.b16 %v1931
    %v2328 = vunpack.c.l.b16 %v1932
    %v2329 = vunpack.c.h.b16 %v1932
    %v2330 = vunpack.c.l.b16 %v1933
    %v2331 = vunpack.c.h.b16 %v1933
    %v2332 = vunpack.c.l.b16 %v1934
    %v2333 = vunpack.c.h.b16 %v1934
    %v2334 = vunpack.c.l.b16 %v1935
    %v2335 = vunpack.c.h.b16 %v1935
    %v2336 = vunpack.c.l.b16 %v1936
    %v2337 = vunpack.c.h.b16 %v1936
    %v2338 = vunpack.c.l.b16 %v1937
    %v2339 = vunpack.c.h.b16 %v1937
    %v2340 = vunpack.c.l.b16 %v1938
    %v2341 = vunpack.c.h.b16 %v1938
    %v2342 = vunpack.c.l.b16 %v1939
    %v2343 = vunpack.c.h.b16 %v1939
    %v2344 = vunpack.c.l.b16 %v1940
    %v2345 = vunpack.c.h.b16 %v1940
    %v2346 = vunpack.c.l.b16 %v1941
    %v2347 = vunpack.c.h.b16 %v1941
    %v2348 = vunpack.c.l.b16 %v1942
    %v2349 = vunpack.c.h.b16 %v1942
    %v2350 = vunpack.c.l.b16 %v1943
    %v2351 = vunpack.c.h.b16 %v1943
    %v2352 = vunpack.c.l.b16 %v1944
    %v2353 = vunpack.c.h.b16 %v1944
    %v2354 = vunpack.c.l.b16 %v1945
    %v2355 = vunpack.c.h.b16 %v1945
    %v2356 = vunpack.c.l.b16 %v1946
    %v2357 = vunpack.c.h.b16 %v1946
    %v2358 = vunpack.c.l.b16 %v1947
    %v2359 = vunpack.c.h.b16 %v1947
    %v2360 = vunpack.c.l.b16 %v1948
    %v2361 = vunpack.c.h.b16 %v1948
    %v2362 = vunpack.c.l.b16 %v1949
    %v2363 = vunpack.c.h.b16 %v1949
    %v2364 = vunpack.c.l.b16 %v1950
    %v2365 = vunpack.c.h.b16 %v1950
    %v2366 = vunpack.c.l.b16 %v1951
    %v2367 = vunpack.c.h.b16 %v1951
    %v2368 = vpack.c.b16 %v2116, %v2112
    %v2369 = vpack.c.b16 %v2117, %v2113
    %v2370 = vpack.c.b16 %v2118, %v2114
    %v2371 = vpack.c.b16 %v2119, %v2115
    %v2372 = vpack.c.b16 %v2124, %v2120
    %v2373 = vpack.c.b16 %v2125, %v2121
    %v2374 = vpack.c.b16 %v2126, %v2122
    %v2375 = vpack.c.b16 %v2127, %v2123
    %v2376 = vpack.c.b16 %v2132, %v2128
    %v2377 = vpack.c.b16 %v2133, %v2129
    %v2378 = vpack.c.b16 %v2134, %v2130
    %v2379 = vpack.c.b16 %v2135, %v2131
    %v2380 = vpack.c.b16 %v2140, %v2136
    %v2381 = vpack.c.b16 %v2141, %v2137
    %v2382 = vpack.c.b16 %v2142, %v2138
    %v2383 = vpack.c.b16 %v2143, %v2139
    %v2384 = vpack.c.b16 %v2148, %v2144
    %v2385 = vpack.c.b16 %v2149, %v2145
    %v2386 = vpack.c.b16 %v2150, %v2146
    %v2387 = vpack.c.b16 %v2151, %v2147
    %v2388 = vpack.c.b16 %v2156, %v2152
    %v2389 = vpack.c.b16 %v2157, %v2153
    %v2390 = vpack.c.b16 %v2158, %v2154
    %v2391 = vpack.c.b16 %v2159, %v2155
    %v2392 = vpack.c.b16 %v2164, %v2160
    %v2393 = vpack.c.b16 %v2165, %v2161
    %v2394 = vpack.c.b16 %v2166, %v2162
    %v2395 = vpack.c.b16 %v2167, %v2163
    %v2396 = vpack.c.b16 %v2172, %v2168
    %v2397 = vpack.c.b16 %v2173, %v2169
    %v2398 = vpack.c.b16 %v2174, %v2170
    %v2399 = vpack.c.b16 %v2175, %v2171
    %v2400 = vpack.c.b16 %v2180, %v2176
    %v2401 = vpack.c.b16 %v2181, %v2177
    %v2402 = vpack.c.b16 %v2182, %v2178
    %v2403 = vpack.c.b16 %v2183, %v2179
    %v2404 = vpack.c.b16 %v2188, %v2184
    %v2405 = vpack.c.b16 %v2189, %v2185
    %v2406 = vpack.c.b16 %v2190, %v2186
    %v2407 = vpack.c.b16 %v2191, %v2187
    %v2408 = vpack.c.b16 %v2196, %v2192
    %v2409 = vpack.c.b16 %v2197, %v2193
    %v2410 = vpack.c.b16 %v2198, %v2194
    %v2411 = vpack.c.b16 %v2199, %v2195
    %v2412 = vpack.c.b16 %v2204, %v2200
    %v2413 = vpack.c.b16 %v2205, %v2201
    %v2414 = vpack.c.b16 %v2206, %v2202
    %v2415 = vpack.c.b16 %v2207, %v2203
    %v2416 = vpack.c.b16 %v2212, %v2208
    %v2417 = vpack.c.b16 %v2213, %v2209
    %v2418 = vpack.c.b16 %v2214, %v2210
    %v2419 = vpack.c.b16 %v2215, %v2211
    %v2420 = vpack.c.b16 %v2220, %v2216
    %v2421 = vpack.c.b16 %v2221, %v2217
    %v2422 = vpack.c.b16 %v2222, %v2218
    %v2423 = vpack.c.b16 %v2223, %v2219
    %v2424 = vpack.c.b16 %v2228, %v2224
    %v2425 = vpack.c.b16 %v2229, %v2225
    %v2426 = vpack.c.b16 %v2230, %v2226
    %v2427 = vpack.c.b16 %v2231, %v2227
    %v2428 = vpack.c.b16 %v2236, %v2232
    %v2429 = vpack.c.b16 %v2237, %v2233
    %v2430 = vpack.c.b16 %v2238, %v2234
    %v2431 = vpack.c.b16 %v2239, %v2235
    %v2432 = vpack.c.b16 %v2244, %v2240
    %v2433 = vpack.c.b16 %v2245, %v2241
    %v2434 = vpack.c.b16 %v2246, %v2242
    %v2435 = vpack.c.b16 %v2247, %v2243
    %v2436 = vpack.c.b16 %v2252, %v2248
    %v2437 = vpack.c.b16 %v2253, %v2249
    %v2438 = vpack.c.b16 %v2254, %v2250
    %v2439 = vpack.c.b16 %v2255, %v2251
    %v2440 = vpack.c.b16 %v2260, %v2256
    %v2441 = vpack.c.b16 %v2261, %v2257
    %v2442 = vpack.c.b16 %v2262, %v2258
    %v2443 = vpack.c.b16 %v2263, %v2259
    %v2444 = vpack.c.b16 %v2268, %v2264
    %v2445 = vpack.c.b16 %v2269, %v2265
    %v2446 = vpack.c.b16 %v2270, %v2266
    %v2447 = vpack.c.b16 %v2271, %v2267
    %v2448 = vpack.c.b16 %v2276, %v2272
    %v2449 = vpack.c.b16 %v2277, %v2273
    %v2450 = vpack.c.b16 %v2278, %v2274
    %v2451 = vpack.c.b16 %v2279, %v2275
    %v2452 = vpack.c.b16 %v2284, %v2280
    %v2453 = vpack.c.b16 %v2285, %v2281
    %v2454 = vpack.c.b16 %v2286, %v2282
    %v2455 = vpack.c.b16 %v2287, %v2283
    %v2456 = vpack.c.b16 %v2292, %v2288
    %v2457 = vpack.c.b16 %v2293, %v2289
    %v2458 = vpack.c.b16 %v2294, %v2290
    %v2459 = vpack.c.b16 %v2295, %v2291
    %v2460 = vpack.c.b16 %v2300, %v2296
    %v2461 = vpack.c.b16 %v2301, %v2297
    %v2462 = vpack.c.b16 %v2302, %v2298
    %v2463 = vpack.c.b16 %v2303, %v2299
    %v2464 = vpack.c.b16 %v2308, %v2304
    %v2465 = vpack.c.b16 %v2309, %v2305
    %v2466 = vpack.c.b16 %v2310, %v2306
    %v2467 = vpack.c.b16 %v2311, %v2307
    %v2468 = vpack.c.b16 %v2316, %v2312
    %v2469 = vpack.c.b16 %v2317, %v2313
    %v2470 = vpack.c.b16 %v2318, %v2314
    %v2471 = vpack.c.b16 %v2319, %v2315
    %v2472 = vpack.c.b16 %v2324, %v2320
    %v2473 = vpack.c.b16 %v2325, %v2321
    %v2474 = vpack.c.b16 %v2326, %v2322
    %v2475 = vpack.c.b16 %v2327, %v2323
    %v2476 = vpack.c.b16 %v2332, %v2328
    %v2477 = vpack.c.b16 %v2333, %v2329
    %v2478 = vpack.c.b16 %v2334, %v2330
    %v2479 = vpack.c.b16 %v2335, %v2331
    %v2480 = vpack.c.b16 %v2340, %v2336
    %v2481 = vpack.c.b16 %v2341, %v2337
    %v2482 = vpack.c.b16 %v2342, %v2338
    %v2483 = vpack.c.b16 %v2343, %v2339
    %v2484 = vpack.c.b16 %v2348, %v2344
    %v2485 = vpack.c.b16 %v2349, %v2345
    %v2486 = vpack.c.b16 %v2350, %v2346
    %v2487 = vpack.c.b16 %v2351, %v2347
    %v2488 = vpack.c.b16 %v2356, %v2352
    %v2489 = vpack.c.b16 %v2357, %v2353
    %v2490 = vpack.c.b16 %v2358, %v2354
    %v2491 = vpack.c.b16 %v2359, %v2355
    %v2492 = vpack.c.b16 %v2364, %v2360
    %v2493 = vpack.c.b16 %v2365, %v2361
    %v2494 = vpack.c.b16 %v2366, %v2362
    %v2495 = vpack.c.b16 %v2367, %v2363
    %2624 = vmatprep.subr.bf16.mxu0 %v2397
    %2625 = vmatpush1.bf16.msra.mxu0 %v2396
    %2626 = vmatprep.subr.bf16.mxu0 %v2393
    %2627 = vmatpush1.bf16.msra.mxu0 %v2392
    %2628 = vmatprep.subr.bf16.mxu0 %v2389
    %2629 = vmatpush1.bf16.msra.mxu0 %v2388
    %2630 = vmatprep.subr.bf16.mxu0 %v2385
    %2631 = vmatpush1.bf16.msra.mxu0 %v2384
    %2632 = vmatprep.subr.bf16.mxu0 %v2381
    %2633 = vmatpush1.bf16.msra.mxu0 %v2380
    %2634 = vmatprep.subr.bf16.mxu0 %v2377
    %2635 = vmatpush1.bf16.msra.mxu0 %v2376
    %2636 = vmatprep.subr.bf16.mxu0 %v2373
    %2637 = vmatpush1.bf16.msra.mxu0 %v2372
    %2638 = vmatprep.subr.bf16.mxu0 %v2369
    %2639 = vmatpush1.bf16.msra.mxu0 %v2368
    %2640 = vmatprep.subr.bf16.mxu0 %v2429
    %2641 = vmatpush2.bf16.msra.mxu0 %v2428
    %2642 = vmatprep.subr.bf16.mxu0 %v2425
    %2643 = vmatpush2.bf16.msra.mxu0 %v2424
    %2644 = vmatprep.subr.bf16.mxu0 %v2421
    %2645 = vmatpush2.bf16.msra.mxu0 %v2420
    %2646 = vmatprep.subr.bf16.mxu0 %v2417
    %2647 = vmatpush2.bf16.msra.mxu0 %v2416
    %2648 = vmatprep.subr.bf16.mxu0 %v2413
    %2649 = vmatpush2.bf16.msra.mxu0 %v2412
    %2650 = vmatprep.subr.bf16.mxu0 %v2409
    %2651 = vmatpush2.bf16.msra.mxu0 %v2408
    %2652 = vmatprep.subr.bf16.mxu0 %v2405
    %2653 = vmatpush2.bf16.msra.mxu0 %v2404
    %2654 = vmatprep.subr.bf16.mxu0 %v2401
    %2655 = vmatpush2.bf16.msra.mxu0 %v2400
    %2656 = vmatprep.mubr.bf16.mxu0 %v1809
    %2657 = vmatmul.mubr.bf16.gmra.mxu0 %v1808
    %v2658 = vpop.f32.mrf.mxu0
    %v2659 = vadd.f32 %v1952, %v2658
    %v2660 = vpop.f32.mrf.mxu0
    %v2661 = vadd.f32 %v1953, %v2660
    %v2662 = vpop.f32.mrf.mxu0
    %v2663 = vadd.f32 %v1956, %v2662
    %v2664 = vpop.f32.mrf.mxu0
    %v2665 = vadd.f32 %v1957, %v2664
    %2666 = vmatprep.mubr.bf16.mxu0 %v1813
    %2667 = vmatmul.mubr.bf16.gmra.mxu0 %v1812
    %v2668 = vpop.f32.mrf.mxu0
    %v2669 = vadd.f32 %v1960, %v2668
    %v2670 = vpop.f32.mrf.mxu0
    %v2671 = vadd.f32 %v1961, %v2670
    %v2672 = vpop.f32.mrf.mxu0
    %v2673 = vadd.f32 %v1964, %v2672
    %v2674 = vpop.f32.mrf.mxu0
    %v2675 = vadd.f32 %v1965, %v2674
    %2676 = vmatprep.mubr.bf16.mxu0 %v1817
    %2677 = vmatmul.mubr.bf16.gmra.mxu0 %v1816
    %v2678 = vpop.f32.mrf.mxu0
    %v2679 = vadd.f32 %v1968, %v2678
    %v2680 = vpop.f32.mrf.mxu0
    %v2681 = vadd.f32 %v1969, %v2680
    %v2682 = vpop.f32.mrf.mxu0
    %v2683 = vadd.f32 %v1972, %v2682
    %v2684 = vpop.f32.mrf.mxu0
    %v2685 = vadd.f32 %v1973, %v2684
    %2686 = vmatprep.mubr.bf16.mxu0 %v1821
    %2687 = vmatmul.mubr.bf16.gmra.mxu0 %v1820
    %v2688 = vpop.f32.mrf.mxu0
    %v2689 = vadd.f32 %v1976, %v2688
    %v2690 = vpop.f32.mrf.mxu0
    %v2691 = vadd.f32 %v1977, %v2690
    %v2692 = vpop.f32.mrf.mxu0
    %v2693 = vadd.f32 %v1980, %v2692
    %v2694 = vpop.f32.mrf.mxu0
    %v2695 = vadd.f32 %v1981, %v2694
    %2696 = vdwg.mxu0
    %2697 = vmatprep.subr.bf16.mxu0 %v2461
    %2698 = vmatpush1.bf16.msra.mxu0 %v2460
    %2699 = vmatprep.subr.bf16.mxu0 %v2457
    %2700 = vmatpush1.bf16.msra.mxu0 %v2456
    %2701 = vmatprep.subr.bf16.mxu0 %v2453
    %2702 = vmatpush1.bf16.msra.mxu0 %v2452
    %2703 = vmatprep.subr.bf16.mxu0 %v2449
    %2704 = vmatpush1.bf16.msra.mxu0 %v2448
    %2705 = vmatprep.subr.bf16.mxu0 %v2445
    %2706 = vmatpush1.bf16.msra.mxu0 %v2444
    %2707 = vmatprep.subr.bf16.mxu0 %v2441
    %2708 = vmatpush1.bf16.msra.mxu0 %v2440
    %2709 = vmatprep.subr.bf16.mxu0 %v2437
    %2710 = vmatpush1.bf16.msra.mxu0 %v2436
    %2711 = vmatprep.subr.bf16.mxu0 %v2433
    %2712 = vmatpush1.bf16.msra.mxu0 %v2432
    %2713 = vmatprep.subr.bf16.mxu0 %v2493
    %2714 = vmatpush2.bf16.msra.mxu0 %v2492
    %2715 = vmatprep.subr.bf16.mxu0 %v2489
    %2716 = vmatpush2.bf16.msra.mxu0 %v2488
    %2717 = vmatprep.subr.bf16.mxu0 %v2485
    %2718 = vmatpush2.bf16.msra.mxu0 %v2484
    %2719 = vmatprep.subr.bf16.mxu0 %v2481
    %2720 = vmatpush2.bf16.msra.mxu0 %v2480
    %2721 = vmatprep.subr.bf16.mxu0 %v2477
    %2722 = vmatpush2.bf16.msra.mxu0 %v2476
    %2723 = vmatprep.subr.bf16.mxu0 %v2473
    %2724 = vmatpush2.bf16.msra.mxu0 %v2472
    %2725 = vmatprep.subr.bf16.mxu0 %v2469
    %2726 = vmatpush2.bf16.msra.mxu0 %v2468
    %2727 = vmatprep.subr.bf16.mxu0 %v2465
    %2728 = vmatpush2.bf16.msra.mxu0 %v2464
    %2729 = vmatprep.mubr.bf16.mxu0 %v1811
    %2730 = vmatmul.mubr.bf16.gmra.mxu0 %v1810
    %v2731 = vpop.f32.mrf.mxu0
    %v2732 = vadd.f32 %v2659, %v2731
    %v2733 = vpop.f32.mrf.mxu0
    %v2734 = vadd.f32 %v2661, %v2733
    %v2735 = vpop.f32.mrf.mxu0
    %v2736 = vadd.f32 %v2663, %v2735
    %v2737 = vpop.f32.mrf.mxu0
    %v2738 = vadd.f32 %v2665, %v2737
    %2739 = vmatprep.mubr.bf16.mxu0 %v1815
    %2740 = vmatmul.mubr.bf16.gmra.mxu0 %v1814
    %v2741 = vpop.f32.mrf.mxu0
    %v2742 = vadd.f32 %v2669, %v2741
    %v2743 = vpop.f32.mrf.mxu0
    %v2744 = vadd.f32 %v2671, %v2743
    %v2745 = vpop.f32.mrf.mxu0
    %v2746 = vadd.f32 %v2673, %v2745
    %v2747 = vpop.f32.mrf.mxu0
    %v2748 = vadd.f32 %v2675, %v2747
    %2749 = vmatprep.mubr.bf16.mxu0 %v1819
    %2750 = vmatmul.mubr.bf16.gmra.mxu0 %v1818
    %v2751 = vpop.f32.mrf.mxu0
    %v2752 = vadd.f32 %v2679, %v2751
    %v2753 = vpop.f32.mrf.mxu0
    %v2754 = vadd.f32 %v2681, %v2753
    %v2755 = vpop.f32.mrf.mxu0
    %v2756 = vadd.f32 %v2683, %v2755
    %v2757 = vpop.f32.mrf.mxu0
    %v2758 = vadd.f32 %v2685, %v2757
    %2759 = vmatprep.mubr.bf16.mxu0 %v1823
    %2760 = vmatmul.mubr.bf16.gmra.mxu0 %v1822
    %v2761 = vpop.f32.mrf.mxu0
    %v2762 = vadd.f32 %v2689, %v2761
    %v2763 = vpop.f32.mrf.mxu0
    %v2764 = vadd.f32 %v2691, %v2763
    %v2765 = vpop.f32.mrf.mxu0
    %v2766 = vadd.f32 %v2693, %v2765
    %v2767 = vpop.f32.mrf.mxu0
    %v2768 = vadd.f32 %v2695, %v2767
    %2769 = vdwg.mxu0
    %2770 = vmatprep.subr.bf16.mxu0 %v2399
    %2771 = vmatpush1.bf16.msra.mxu0 %v2398
    %2772 = vmatprep.subr.bf16.mxu0 %v2395
    %2773 = vmatpush1.bf16.msra.mxu0 %v2394
    %2774 = vmatprep.subr.bf16.mxu0 %v2391
    %2775 = vmatpush1.bf16.msra.mxu0 %v2390
    %2776 = vmatprep.subr.bf16.mxu0 %v2387
    %2777 = vmatpush1.bf16.msra.mxu0 %v2386
    %2778 = vmatprep.subr.bf16.mxu0 %v2383
    %2779 = vmatpush1.bf16.msra.mxu0 %v2382
    %2780 = vmatprep.subr.bf16.mxu0 %v2379
    %2781 = vmatpush1.bf16.msra.mxu0 %v2378
    %2782 = vmatprep.subr.bf16.mxu0 %v2375
    %2783 = vmatpush1.bf16.msra.mxu0 %v2374
    %2784 = vmatprep.subr.bf16.mxu0 %v2371
    %2785 = vmatpush1.bf16.msra.mxu0 %v2370
    %2786 = vmatprep.subr.bf16.mxu0 %v2431
    %2787 = vmatpush2.bf16.msra.mxu0 %v2430
    %2788 = vmatprep.subr.bf16.mxu0 %v2427
    %2789 = vmatpush2.bf16.msra.mxu0 %v2426
    %2790 = vmatprep.subr.bf16.mxu0 %v2423
    %2791 = vmatpush2.bf16.msra.mxu0 %v2422
    %2792 = vmatprep.subr.bf16.mxu0 %v2419
    %2793 = vmatpush2.bf16.msra.mxu0 %v2418
    %2794 = vmatprep.subr.bf16.mxu0 %v2415
    %2795 = vmatpush2.bf16.msra.mxu0 %v2414
    %2796 = vmatprep.subr.bf16.mxu0 %v2411
    %2797 = vmatpush2.bf16.msra.mxu0 %v2410
    %2798 = vmatprep.subr.bf16.mxu0 %v2407
    %2799 = vmatpush2.bf16.msra.mxu0 %v2406
    %2800 = vmatprep.subr.bf16.mxu0 %v2403
    %2801 = vmatpush2.bf16.msra.mxu0 %v2402
    %2802 = vmatprep.mubr.bf16.mxu0 %v1809
    %2803 = vmatmul.mubr.bf16.gmra.mxu0 %v1808
    %v2804 = vpop.f32.mrf.mxu0
    %v2805 = vadd.f32 %v1954, %v2804
    %v2806 = vpop.f32.mrf.mxu0
    %v2807 = vadd.f32 %v1955, %v2806
    %v2808 = vpop.f32.mrf.mxu0
    %v2809 = vadd.f32 %v1958, %v2808
    %v2810 = vpop.f32.mrf.mxu0
    %v2811 = vadd.f32 %v1959, %v2810
    %2812 = vmatprep.mubr.bf16.mxu0 %v1813
    %2813 = vmatmul.mubr.bf16.gmra.mxu0 %v1812
    %v2814 = vpop.f32.mrf.mxu0
    %v2815 = vadd.f32 %v1962, %v2814
    %v2816 = vpop.f32.mrf.mxu0
    %v2817 = vadd.f32 %v1963, %v2816
    %v2818 = vpop.f32.mrf.mxu0
    %v2819 = vadd.f32 %v1966, %v2818
    %v2820 = vpop.f32.mrf.mxu0
    %v2821 = vadd.f32 %v1967, %v2820
    %2822 = vmatprep.mubr.bf16.mxu0 %v1817
    %2823 = vmatmul.mubr.bf16.gmra.mxu0 %v1816
    %v2824 = vpop.f32.mrf.mxu0
    %v2825 = vadd.f32 %v1970, %v2824
    %v2826 = vpop.f32.mrf.mxu0
    %v2827 = vadd.f32 %v1971, %v2826
    %v2828 = vpop.f32.mrf.mxu0
    %v2829 = vadd.f32 %v1974, %v2828
    %v2830 = vpop.f32.mrf.mxu0
    %v2831 = vadd.f32 %v1975, %v2830
    %2832 = vmatprep.mubr.bf16.mxu0 %v1821
    %2833 = vmatmul.mubr.bf16.gmra.mxu0 %v1820
    %v2834 = vpop.f32.mrf.mxu0
    %v2835 = vadd.f32 %v1978, %v2834
    %v2836 = vpop.f32.mrf.mxu0
    %v2837 = vadd.f32 %v1979, %v2836
    %v2838 = vpop.f32.mrf.mxu0
    %v2839 = vadd.f32 %v1982, %v2838
    %v2840 = vpop.f32.mrf.mxu0
    %v2841 = vadd.f32 %v1983, %v2840
    %2842 = vdwg.mxu0
    %2843 = vmatprep.subr.bf16.mxu0 %v2463
    %2844 = vmatpush1.bf16.msra.mxu0 %v2462
    %2845 = vmatprep.subr.bf16.mxu0 %v2459
    %2846 = vmatpush1.bf16.msra.mxu0 %v2458
    %2847 = vmatprep.subr.bf16.mxu0 %v2455
    %2848 = vmatpush1.bf16.msra.mxu0 %v2454
    %2849 = vmatprep.subr.bf16.mxu0 %v2451
    %2850 = vmatpush1.bf16.msra.mxu0 %v2450
    %2851 = vmatprep.subr.bf16.mxu0 %v2447
    %2852 = vmatpush1.bf16.msra.mxu0 %v2446
    %2853 = vmatprep.subr.bf16.mxu0 %v2443
    %2854 = vmatpush1.bf16.msra.mxu0 %v2442
    %2855 = vmatprep.subr.bf16.mxu0 %v2439
    %2856 = vmatpush1.bf16.msra.mxu0 %v2438
    %2857 = vmatprep.subr.bf16.mxu0 %v2435
    %2858 = vmatpush1.bf16.msra.mxu0 %v2434
    %2859 = vmatprep.subr.bf16.mxu0 %v2495
    %2860 = vmatpush2.bf16.msra.mxu0 %v2494
    %2861 = vmatprep.subr.bf16.mxu0 %v2491
    %2862 = vmatpush2.bf16.msra.mxu0 %v2490
    %2863 = vmatprep.subr.bf16.mxu0 %v2487
    %2864 = vmatpush2.bf16.msra.mxu0 %v2486
    %2865 = vmatprep.subr.bf16.mxu0 %v2483
    %2866 = vmatpush2.bf16.msra.mxu0 %v2482
    %2867 = vmatprep.subr.bf16.mxu0 %v2479
    %2868 = vmatpush2.bf16.msra.mxu0 %v2478
    %2869 = vmatprep.subr.bf16.mxu0 %v2475
    %2870 = vmatpush2.bf16.msra.mxu0 %v2474
    %2871 = vmatprep.subr.bf16.mxu0 %v2471
    %2872 = vmatpush2.bf16.msra.mxu0 %v2470
    %2873 = vmatprep.subr.bf16.mxu0 %v2467
    %2874 = vmatpush2.bf16.msra.mxu0 %v2466
    %2875 = vmatprep.mubr.bf16.mxu0 %v1811
    %2876 = vmatmul.mubr.bf16.gmra.mxu0 %v1810
    %v2877 = vpop.f32.mrf.mxu0
    %v2878 = vadd.f32 %v2805, %v2877
    %v2879 = vpop.f32.mrf.mxu0
    %v2880 = vadd.f32 %v2807, %v2879
    %v2881 = vpop.f32.mrf.mxu0
    %v2882 = vadd.f32 %v2809, %v2881
    %v2883 = vpop.f32.mrf.mxu0
    %v2884 = vadd.f32 %v2811, %v2883
    %2885 = vmatprep.mubr.bf16.mxu0 %v1815
    %2886 = vmatmul.mubr.bf16.gmra.mxu0 %v1814
    %v2887 = vpop.f32.mrf.mxu0
    %v2888 = vadd.f32 %v2815, %v2887
    %v2889 = vpop.f32.mrf.mxu0
    %v2890 = vadd.f32 %v2817, %v2889
    %v2891 = vpop.f32.mrf.mxu0
    %v2892 = vadd.f32 %v2819, %v2891
    %v2893 = vpop.f32.mrf.mxu0
    %v2894 = vadd.f32 %v2821, %v2893
    %2895 = vmatprep.mubr.bf16.mxu0 %v1819
    %2896 = vmatmul.mubr.bf16.gmra.mxu0 %v1818
    %v2897 = vpop.f32.mrf.mxu0
    %v2898 = vadd.f32 %v2825, %v2897
    %v2899 = vpop.f32.mrf.mxu0
    %v2900 = vadd.f32 %v2827, %v2899
    %v2901 = vpop.f32.mrf.mxu0
    %v2902 = vadd.f32 %v2829, %v2901
    %v2903 = vpop.f32.mrf.mxu0
    %v2904 = vadd.f32 %v2831, %v2903
    %2905 = vmatprep.mubr.bf16.mxu0 %v1823
    %2906 = vmatmul.mubr.bf16.gmra.mxu0 %v1822
    %v2907 = vpop.f32.mrf.mxu0
    %v2908 = vadd.f32 %v2835, %v2907
    %v2909 = vpop.f32.mrf.mxu0
    %v2910 = vadd.f32 %v2837, %v2909
    %v2911 = vpop.f32.mrf.mxu0
    %v2912 = vadd.f32 %v2839, %v2911
    %v2913 = vpop.f32.mrf.mxu0
    %v2914 = vadd.f32 %v2841, %v2913
    %2915 = vdwg.mxu0
    %2916 = vst [vmem:[#allocation2] sm:$0xff] %v2732
    %2917 = vst [vmem:[#allocation2 + $0x8] sm:$0xff] %v2734
    %2918 = vst [vmem:[#allocation2 + $0x10] sm:$0xff] %v2878
    %2919 = vst [vmem:[#allocation2 + $0x18] sm:$0xff] %v2880
    %2920 = vst [vmem:[#allocation2 + $0x20] sm:$0xff] %v2736
    %2921 = vst [vmem:[#allocation2 + $0x28] sm:$0xff] %v2738
    %2922 = vst [vmem:[#allocation2 + $0x30] sm:$0xff] %v2882
    %2923 = vst [vmem:[#allocation2 + $0x38] sm:$0xff] %v2884
    %2924 = vst [vmem:[#allocation2 + $0x40] sm:$0xff] %v2742
    %2925 = vst [vmem:[#allocation2 + $0x48] sm:$0xff] %v2744
    %2926 = vst [vmem:[#allocation2 + $0x50] sm:$0xff] %v2888
    %2927 = vst [vmem:[#allocation2 + $0x58] sm:$0xff] %v2890
    %2928 = vst [vmem:[#allocation2 + $0x60] sm:$0xff] %v2746
    %2929 = vst [vmem:[#allocation2 + $0x68] sm:$0xff] %v2748
    %2930 = vst [vmem:[#allocation2 + $0x70] sm:$0xff] %v2892
    %2931 = vst [vmem:[#allocation2 + $0x78] sm:$0xff] %v2894
    %2932 = vst [vmem:[#allocation2 + $0x80] sm:$0xff] %v2752
    %2933 = vst [vmem:[#allocation2 + $0x88] sm:$0xff] %v2754
    %2934 = vst [vmem:[#allocation2 + $0x90] sm:$0xff] %v2898
    %2935 = vst [vmem:[#allocation2 + $0x98] sm:$0xff] %v2900
    %2936 = vst [vmem:[#allocation2 + $0xa0] sm:$0xff] %v2756
    %2937 = vst [vmem:[#allocation2 + $0xa8] sm:$0xff] %v2758
    %2938 = vst [vmem:[#allocation2 + $0xb0] sm:$0xff] %v2902
    %2939 = vst [vmem:[#allocation2 + $0xb8] sm:$0xff] %v2904
    %2940 = vst [vmem:[#allocation2 + $0xc0] sm:$0xff] %v2762
    %2941 = vst [vmem:[#allocation2 + $0xc8] sm:$0xff] %v2764
    %2942 = vst [vmem:[#allocation2 + $0xd0] sm:$0xff] %v2908
    %2943 = vst [vmem:[#allocation2 + $0xd8] sm:$0xff] %v2910
    %2944 = vst [vmem:[#allocation2 + $0xe0] sm:$0xff] %v2766
    %2945 = vst [vmem:[#allocation2 + $0xe8] sm:$0xff] %v2768
    %2946 = vst [vmem:[#allocation2 + $0xf0] sm:$0xff] %v2912
    %2947 = vst [vmem:[#allocation2 + $0xf8] sm:$0xff] %v2914
    %v2948 = vld [vmem:[#allocation13] sm:$0xff]
    %v2949 = vld [vmem:[#allocation13 + $0x8] sm:$0xff]
    %v2950 = vld [vmem:[#allocation13 + $0x10] sm:$0xff]
    %v2951 = vld [vmem:[#allocation13 + $0x18] sm:$0xff]
    %v2952 = vld [vmem:[#allocation13 + $0x20] sm:$0xff]
    %v2953 = vld [vmem:[#allocation13 + $0x28] sm:$0xff]
    %v2954 = vld [vmem:[#allocation13 + $0x30] sm:$0xff]
    %v2955 = vld [vmem:[#allocation13 + $0x38] sm:$0xff]
    %v2956 = vld [vmem:[#allocation13 + $0x40] sm:$0xff]
    %v2957 = vld [vmem:[#allocation13 + $0x48] sm:$0xff]
    %v2958 = vld [vmem:[#allocation13 + $0x50] sm:$0xff]
    %v2959 = vld [vmem:[#allocation13 + $0x58] sm:$0xff]
    %v2960 = vld [vmem:[#allocation13 + $0x60] sm:$0xff]
    %v2961 = vld [vmem:[#allocation13 + $0x68] sm:$0xff]
    %v2962 = vld [vmem:[#allocation13 + $0x70] sm:$0xff]
    %v2963 = vld [vmem:[#allocation13 + $0x78] sm:$0xff]
    %v2964 = vld [vmem:[#allocation13 + $0x80] sm:$0xff]
    %v2965 = vld [vmem:[#allocation13 + $0x88] sm:$0xff]
    %v2966 = vld [vmem:[#allocation13 + $0x90] sm:$0xff]
    %v2967 = vld [vmem:[#allocation13 + $0x98] sm:$0xff]
    %v2968 = vld [vmem:[#allocation13 + $0xa0] sm:$0xff]
    %v2969 = vld [vmem:[#allocation13 + $0xa8] sm:$0xff]
    %v2970 = vld [vmem:[#allocation13 + $0xb0] sm:$0xff]
    %v2971 = vld [vmem:[#allocation13 + $0xb8] sm:$0xff]
    %v2972 = vld [vmem:[#allocation13 + $0xc0] sm:$0xff]
    %v2973 = vld [vmem:[#allocation13 + $0xc8] sm:$0xff]
    %v2974 = vld [vmem:[#allocation13 + $0xd0] sm:$0xff]
    %v2975 = vld [vmem:[#allocation13 + $0xd8] sm:$0xff]
    %v2976 = vld [vmem:[#allocation13 + $0xe0] sm:$0xff]
    %v2977 = vld [vmem:[#allocation13 + $0xe8] sm:$0xff]
    %v2978 = vld [vmem:[#allocation13 + $0xf0] sm:$0xff]
    %v2979 = vld [vmem:[#allocation13 + $0xf8] sm:$0xff]
    %v2980 = vld [vmem:[#allocation13 + $0x100] sm:$0xff]
    %v2981 = vld [vmem:[#allocation13 + $0x108] sm:$0xff]
    %v2982 = vld [vmem:[#allocation13 + $0x110] sm:$0xff]
    %v2983 = vld [vmem:[#allocation13 + $0x118] sm:$0xff]
    %v2984 = vld [vmem:[#allocation13 + $0x120] sm:$0xff]
    %v2985 = vld [vmem:[#allocation13 + $0x128] sm:$0xff]
    %v2986 = vld [vmem:[#allocation13 + $0x130] sm:$0xff]
    %v2987 = vld [vmem:[#allocation13 + $0x138] sm:$0xff]
    %v2988 = vld [vmem:[#allocation13 + $0x140] sm:$0xff]
    %v2989 = vld [vmem:[#allocation13 + $0x148] sm:$0xff]
    %v2990 = vld [vmem:[#allocation13 + $0x150] sm:$0xff]
    %v2991 = vld [vmem:[#allocation13 + $0x158] sm:$0xff]
    %v2992 = vld [vmem:[#allocation13 + $0x160] sm:$0xff]
    %v2993 = vld [vmem:[#allocation13 + $0x168] sm:$0xff]
    %v2994 = vld [vmem:[#allocation13 + $0x170] sm:$0xff]
    %v2995 = vld [vmem:[#allocation13 + $0x178] sm:$0xff]
    %v2996 = vld [vmem:[#allocation13 + $0x180] sm:$0xff]
    %v2997 = vld [vmem:[#allocation13 + $0x188] sm:$0xff]
    %v2998 = vld [vmem:[#allocation13 + $0x190] sm:$0xff]
    %v2999 = vld [vmem:[#allocation13 + $0x198] sm:$0xff]
    %v3000 = vld [vmem:[#allocation13 + $0x1a0] sm:$0xff]
    %v3001 = vld [vmem:[#allocation13 + $0x1a8] sm:$0xff]
    %v3002 = vld [vmem:[#allocation13 + $0x1b0] sm:$0xff]
    %v3003 = vld [vmem:[#allocation13 + $0x1b8] sm:$0xff]
    %v3004 = vld [vmem:[#allocation13 + $0x1c0] sm:$0xff]
    %v3005 = vld [vmem:[#allocation13 + $0x1c8] sm:$0xff]
    %v3006 = vld [vmem:[#allocation13 + $0x1d0] sm:$0xff]
    %v3007 = vld [vmem:[#allocation13 + $0x1d8] sm:$0xff]
    %v3008 = vld [vmem:[#allocation13 + $0x1e0] sm:$0xff]
    %v3009 = vld [vmem:[#allocation13 + $0x1e8] sm:$0xff]
    %v3010 = vld [vmem:[#allocation13 + $0x1f0] sm:$0xff]
    %v3011 = vld [vmem:[#allocation13 + $0x1f8] sm:$0xff]
    %v3012 = vld [vmem:[#allocation2] sm:$0xff]
    %v3013 = vld [vmem:[#allocation2 + $0x8] sm:$0xff]
    %v3014 = vld [vmem:[#allocation2 + $0x10] sm:$0xff]
    %v3015 = vld [vmem:[#allocation2 + $0x18] sm:$0xff]
    %v3016 = vmul.f32 %v3012, 0.5
    %v3017 = vmul.f32 %v3013, 0.5
    %v3018 = vmul.f32 %v3014, 0.5
    %v3019 = vtanh.pop %v3016
    %v3020 = vtanh.pop %v3017
    %v3021 = vtanh.pop %v3018
    %v3022 = vmul.f32 %v3019, 0.5
    %v3023 = vmul.f32 %v3020, 0.5
    %v3024 = vmul.f32 %v3021, 0.5
    %v3025 = vadd.f32 %v3022, 0.5
    %v3026 = vadd.f32 %v3023, 0.5
    %v3027 = vadd.f32 %v3024, 0.5
    %v3028 = vtanh.pop %v3015
    %v3029 = vmul.f32 %v3026, 0.0
    %v3030 = vmul.f32 %v3025, %v3028
    %v3031 = vadd.f32 %v3029, %v3030
    %v3032 = vtanh.pop %v3031
    %v3033 = vmul.f32 %v3027, %v3032
    %v3034 = vsel %vm124, %v3033, 0.0
    %v3035 = vsel %vm124, 0.0, %v3033
    %v3036 = vld [vmem:[#allocation2 + $0x20] sm:$0xff]
    %v3037 = vld [vmem:[#allocation2 + $0x28] sm:$0xff]
    %v3038 = vld [vmem:[#allocation2 + $0x30] sm:$0xff]
    %v3039 = vld [vmem:[#allocation2 + $0x38] sm:$0xff]
    %v3040 = vpack.c.bf16 %v3034, %v3034
    %v3041 = vpack.c.bf16 %v3035, %v3035
    %v3106 = vunpack.c.l.b16 %v2948
    %v3107 = vunpack.c.h.b16 %v2948
    %v3108 = vunpack.c.l.b16 %v2949
    %v3109 = vunpack.c.h.b16 %v2949
    %v3110 = vunpack.c.l.b16 %v2950
    %v3111 = vunpack.c.h.b16 %v2950
    %v3112 = vunpack.c.l.b16 %v2951
    %v3113 = vunpack.c.h.b16 %v2951
    %v3114 = vunpack.c.l.b16 %v2952
    %v3115 = vunpack.c.h.b16 %v2952
    %v3116 = vunpack.c.l.b16 %v2953
    %v3117 = vunpack.c.h.b16 %v2953
    %v3118 = vunpack.c.l.b16 %v2954
    %v3119 = vunpack.c.h.b16 %v2954
    %v3120 = vunpack.c.l.b16 %v2955
    %v3121 = vunpack.c.h.b16 %v2955
    %v3122 = vunpack.c.l.b16 %v2956
    %v3123 = vunpack.c.h.b16 %v2956
    %v3124 = vunpack.c.l.b16 %v2957
    %v3125 = vunpack.c.h.b16 %v2957
    %v3126 = vunpack.c.l.b16 %v2958
    %v3127 = vunpack.c.h.b16 %v2958
    %v3128 = vunpack.c.l.b16 %v2959
    %v3129 = vunpack.c.h.b16 %v2959
    %v3130 = vunpack.c.l.b16 %v2960
    %v3131 = vunpack.c.h.b16 %v2960
    %v3132 = vunpack.c.l.b16 %v2961
    %v3133 = vunpack.c.h.b16 %v2961
    %v3134 = vunpack.c.l.b16 %v2962
    %v3135 = vunpack.c.h.b16 %v2962
    %v3136 = vunpack.c.l.b16 %v2963
    %v3137 = vunpack.c.h.b16 %v2963
    %v3138 = vunpack.c.l.b16 %v2964
    %v3139 = vunpack.c.h.b16 %v2964
    %v3140 = vunpack.c.l.b16 %v2965
    %v3141 = vunpack.c.h.b16 %v2965
    %v3142 = vunpack.c.l.b16 %v2966
    %v3143 = vunpack.c.h.b16 %v2966
    %v3144 = vunpack.c.l.b16 %v2967
    %v3145 = vunpack.c.h.b16 %v2967
    %v3146 = vunpack.c.l.b16 %v2968
    %v3147 = vunpack.c.h.b16 %v2968
    %v3148 = vunpack.c.l.b16 %v2969
    %v3149 = vunpack.c.h.b16 %v2969
    %v3150 = vunpack.c.l.b16 %v2970
    %v3151 = vunpack.c.h.b16 %v2970
    %v3152 = vunpack.c.l.b16 %v2971
    %v3153 = vunpack.c.h.b16 %v2971
    %v3154 = vunpack.c.l.b16 %v2972
    %v3155 = vunpack.c.h.b16 %v2972
    %v3156 = vunpack.c.l.b16 %v2973
    %v3157 = vunpack.c.h.b16 %v2973
    %v3158 = vunpack.c.l.b16 %v2974
    %v3159 = vunpack.c.h.b16 %v2974
    %v3160 = vunpack.c.l.b16 %v2975
    %v3161 = vunpack.c.h.b16 %v2975
    %v3162 = vunpack.c.l.b16 %v2976
    %v3163 = vunpack.c.h.b16 %v2976
    %v3164 = vunpack.c.l.b16 %v2977
    %v3165 = vunpack.c.h.b16 %v2977
    %v3166 = vunpack.c.l.b16 %v2978
    %v3167 = vunpack.c.h.b16 %v2978
    %v3168 = vunpack.c.l.b16 %v2979
    %v3169 = vunpack.c.h.b16 %v2979
    %v3170 = vunpack.c.l.b16 %v2980
    %v3171 = vunpack.c.h.b16 %v2980
    %v3172 = vunpack.c.l.b16 %v2981
    %v3173 = vunpack.c.h.b16 %v2981
    %v3174 = vunpack.c.l.b16 %v2982
    %v3175 = vunpack.c.h.b16 %v2982
    %v3176 = vunpack.c.l.b16 %v2983
    %v3177 = vunpack.c.h.b16 %v2983
    %v3178 = vunpack.c.l.b16 %v2984
    %v3179 = vunpack.c.h.b16 %v2984
    %v3180 = vunpack.c.l.b16 %v2985
    %v3181 = vunpack.c.h.b16 %v2985
    %v3182 = vunpack.c.l.b16 %v2986
    %v3183 = vunpack.c.h.b16 %v2986
    %v3184 = vunpack.c.l.b16 %v2987
    %v3185 = vunpack.c.h.b16 %v2987
    %v3186 = vunpack.c.l.b16 %v2988
    %v3187 = vunpack.c.h.b16 %v2988
    %v3188 = vunpack.c.l.b16 %v2989
    %v3189 = vunpack.c.h.b16 %v2989
    %v3190 = vunpack.c.l.b16 %v2990
    %v3191 = vunpack.c.h.b16 %v2990
    %v3192 = vunpack.c.l.b16 %v2991
    %v3193 = vunpack.c.h.b16 %v2991
    %v3194 = vunpack.c.l.b16 %v2992
    %v3195 = vunpack.c.h.b16 %v2992
    %v3196 = vunpack.c.l.b16 %v2993
    %v3197 = vunpack.c.h.b16 %v2993
    %v3198 = vunpack.c.l.b16 %v2994
    %v3199 = vunpack.c.h.b16 %v2994
    %v3200 = vunpack.c.l.b16 %v2995
    %v3201 = vunpack.c.h.b16 %v2995
    %v3202 = vunpack.c.l.b16 %v2996
    %v3203 = vunpack.c.h.b16 %v2996
    %v3204 = vunpack.c.l.b16 %v2997
    %v3205 = vunpack.c.h.b16 %v2997
    %v3206 = vunpack.c.l.b16 %v2998
    %v3207 = vunpack.c.h.b16 %v2998
    %v3208 = vunpack.c.l.b16 %v2999
    %v3209 = vunpack.c.h.b16 %v2999
    %v3210 = vunpack.c.l.b16 %v3000
    %v3211 = vunpack.c.h.b16 %v3000
    %v3212 = vunpack.c.l.b16 %v3001
    %v3213 = vunpack.c.h.b16 %v3001
    %v3214 = vunpack.c.l.b16 %v3002
    %v3215 = vunpack.c.h.b16 %v3002
    %v3216 = vunpack.c.l.b16 %v3003
    %v3217 = vunpack.c.h.b16 %v3003
    %v3218 = vunpack.c.l.b16 %v3004
    %v3219 = vunpack.c.h.b16 %v3004
    %v3220 = vunpack.c.l.b16 %v3005
    %v3221 = vunpack.c.h.b16 %v3005
    %v3222 = vunpack.c.l.b16 %v3006
    %v3223 = vunpack.c.h.b16 %v3006
    %v3224 = vunpack.c.l.b16 %v3007
    %v3225 = vunpack.c.h.b16 %v3007
    %v3226 = vunpack.c.l.b16 %v3008
    %v3227 = vunpack.c.h.b16 %v3008
    %v3228 = vunpack.c.l.b16 %v3009
    %v3229 = vunpack.c.h.b16 %v3009
    %v3230 = vunpack.c.l.b16 %v3010
    %v3231 = vunpack.c.h.b16 %v3010
    %v3232 = vunpack.c.l.b16 %v3011
    %v3233 = vunpack.c.h.b16 %v3011
    %v3234 = vpack.c.b16 %v3110, %v3106
    %v3235 = vpack.c.b16 %v3111, %v3107
    %v3236 = vpack.c.b16 %v3112, %v3108
    %v3237 = vpack.c.b16 %v3113, %v3109
    %v3238 = vpack.c.b16 %v3118, %v3114
    %v3239 = vpack.c.b16 %v3119, %v3115
    %v3240 = vpack.c.b16 %v3120, %v3116
    %v3241 = vpack.c.b16 %v3121, %v3117
    %v3242 = vpack.c.b16 %v3126, %v3122
    %v3243 = vpack.c.b16 %v3127, %v3123
    %v3244 = vpack.c.b16 %v3128, %v3124
    %v3245 = vpack.c.b16 %v3129, %v3125
    %v3246 = vpack.c.b16 %v3134, %v3130
    %v3247 = vpack.c.b16 %v3135, %v3131
    %v3248 = vpack.c.b16 %v3136, %v3132
    %v3249 = vpack.c.b16 %v3137, %v3133
    %v3250 = vpack.c.b16 %v3142, %v3138
    %v3251 = vpack.c.b16 %v3143, %v3139
    %v3252 = vpack.c.b16 %v3144, %v3140
    %v3253 = vpack.c.b16 %v3145, %v3141
    %v3254 = vpack.c.b16 %v3150, %v3146
    %v3255 = vpack.c.b16 %v3151, %v3147
    %v3256 = vpack.c.b16 %v3152, %v3148
    %v3257 = vpack.c.b16 %v3153, %v3149
    %v3258 = vpack.c.b16 %v3158, %v3154
    %v3259 = vpack.c.b16 %v3159, %v3155
    %v3260 = vpack.c.b16 %v3160, %v3156
    %v3261 = vpack.c.b16 %v3161, %v3157
    %v3262 = vpack.c.b16 %v3166, %v3162
    %v3263 = vpack.c.b16 %v3167, %v3163
    %v3264 = vpack.c.b16 %v3168, %v3164
    %v3265 = vpack.c.b16 %v3169, %v3165
    %v3266 = vpack.c.b16 %v3174, %v3170
    %v3267 = vpack.c.b16 %v3175, %v3171
    %v3268 = vpack.c.b16 %v3176, %v3172
    %v3269 = vpack.c.b16 %v3177, %v3173
    %v3270 = vpack.c.b16 %v3182, %v3178
    %v3271 = vpack.c.b16 %v3183, %v3179
    %v3272 = vpack.c.b16 %v3184, %v3180
    %v3273 = vpack.c.b16 %v3185, %v3181
    %v3274 = vpack.c.b16 %v3190, %v3186
    %v3275 = vpack.c.b16 %v3191, %v3187
    %v3276 = vpack.c.b16 %v3192, %v3188
    %v3277 = vpack.c.b16 %v3193, %v3189
    %v3278 = vpack.c.b16 %v3198, %v3194
    %v3279 = vpack.c.b16 %v3199, %v3195
    %v3280 = vpack.c.b16 %v3200, %v3196
    %v3281 = vpack.c.b16 %v3201, %v3197
    %v3282 = vpack.c.b16 %v3206, %v3202
    %v3283 = vpack.c.b16 %v3207, %v3203
    %v3284 = vpack.c.b16 %v3208, %v3204
    %v3285 = vpack.c.b16 %v3209, %v3205
    %v3286 = vpack.c.b16 %v3214, %v3210
    %v3287 = vpack.c.b16 %v3215, %v3211
    %v3288 = vpack.c.b16 %v3216, %v3212
    %v3289 = vpack.c.b16 %v3217, %v3213
    %v3290 = vpack.c.b16 %v3222, %v3218
    %v3291 = vpack.c.b16 %v3223, %v3219
    %v3292 = vpack.c.b16 %v3224, %v3220
    %v3293 = vpack.c.b16 %v3225, %v3221
    %v3294 = vpack.c.b16 %v3230, %v3226
    %v3295 = vpack.c.b16 %v3231, %v3227
    %v3296 = vpack.c.b16 %v3232, %v3228
    %v3297 = vpack.c.b16 %v3233, %v3229
    %3362 = vmatprep.subr.bf16.mxu0 %v3263
    %3363 = vmatpush1.bf16.msra.mxu0 %v3262
    %3364 = vmatprep.subr.bf16.mxu0 %v3259
    %3365 = vmatpush1.bf16.msra.mxu0 %v3258
    %3366 = vmatprep.subr.bf16.mxu0 %v3255
    %3367 = vmatpush1.bf16.msra.mxu0 %v3254
    %3368 = vmatprep.subr.bf16.mxu0 %v3251
    %3369 = vmatpush1.bf16.msra.mxu0 %v3250
    %3370 = vmatprep.subr.bf16.mxu0 %v3247
    %3371 = vmatpush1.bf16.msra.mxu0 %v3246
    %3372 = vmatprep.subr.bf16.mxu0 %v3243
    %3373 = vmatpush1.bf16.msra.mxu0 %v3242
    %3374 = vmatprep.subr.bf16.mxu0 %v3239
    %3375 = vmatpush1.bf16.msra.mxu0 %v3238
    %3376 = vmatprep.subr.bf16.mxu0 %v3235
    %3377 = vmatpush1.bf16.msra.mxu0 %v3234
    %3378 = vmatprep.subr.bf16.mxu0 %v3295
    %3379 = vmatpush2.bf16.msra.mxu0 %v3294
    %3380 = vmatprep.subr.bf16.mxu0 %v3291
    %3381 = vmatpush2.bf16.msra.mxu0 %v3290
    %3382 = vmatprep.subr.bf16.mxu0 %v3287
    %3383 = vmatpush2.bf16.msra.mxu0 %v3286
    %3384 = vmatprep.subr.bf16.mxu0 %v3283
    %3385 = vmatpush2.bf16.msra.mxu0 %v3282
    %3386 = vmatprep.subr.bf16.mxu0 %v3279
    %3387 = vmatpush2.bf16.msra.mxu0 %v3278
    %3388 = vmatprep.subr.bf16.mxu0 %v3275
    %3389 = vmatpush2.bf16.msra.mxu0 %v3274
    %3390 = vmatprep.subr.bf16.mxu0 %v3271
    %3391 = vmatpush2.bf16.msra.mxu0 %v3270
    %3392 = vmatprep.subr.bf16.mxu0 %v3267
    %3393 = vmatpush2.bf16.msra.mxu0 %v3266
    %3394 = vmatprep.mubr.bf16.mxu0 %v3041
    %3395 = vmatmul.mubr.bf16.gmra.mxu0 %v3040
    %v3396 = vpop.f32.mrf.mxu0
    %v3397 = vadd.f32 0.0, %v3396
    %v3398 = vpop.f32.mrf.mxu0
    %v3399 = vadd.f32 0.0, %v3398
    %v3400 = vpop.f32.mrf.mxu0
    %v3401 = vpop.f32.mrf.mxu0
    %3402 = vdwg.mxu0
    %3403 = vmatprep.subr.bf16.mxu0 %v3265
    %3404 = vmatpush1.bf16.msra.mxu0 %v3264
    %3405 = vmatprep.subr.bf16.mxu0 %v3261
    %3406 = vmatpush1.bf16.msra.mxu0 %v3260
    %3407 = vmatprep.subr.bf16.mxu0 %v3257
    %3408 = vmatpush1.bf16.msra.mxu0 %v3256
    %3409 = vmatprep.subr.bf16.mxu0 %v3253
    %3410 = vmatpush1.bf16.msra.mxu0 %v3252
    %3411 = vmatprep.subr.bf16.mxu0 %v3249
    %3412 = vmatpush1.bf16.msra.mxu0 %v3248
    %3413 = vmatprep.subr.bf16.mxu0 %v3245
    %3414 = vmatpush1.bf16.msra.mxu0 %v3244
    %3415 = vmatprep.subr.bf16.mxu0 %v3241
    %3416 = vmatpush1.bf16.msra.mxu0 %v3240
    %3417 = vmatprep.subr.bf16.mxu0 %v3237
    %3418 = vmatpush1.bf16.msra.mxu0 %v3236
    %3419 = vmatprep.subr.bf16.mxu0 %v3297
    %3420 = vmatpush2.bf16.msra.mxu0 %v3296
    %3421 = vmatprep.subr.bf16.mxu0 %v3293
    %3422 = vmatpush2.bf16.msra.mxu0 %v3292
    %3423 = vmatprep.subr.bf16.mxu0 %v3289
    %3424 = vmatpush2.bf16.msra.mxu0 %v3288
    %3425 = vmatprep.subr.bf16.mxu0 %v3285
    %3426 = vmatpush2.bf16.msra.mxu0 %v3284
    %3427 = vmatprep.subr.bf16.mxu0 %v3281
    %3428 = vmatpush2.bf16.msra.mxu0 %v3280
    %3429 = vmatprep.subr.bf16.mxu0 %v3277
    %3430 = vmatpush2.bf16.msra.mxu0 %v3276
    %3431 = vmatprep.subr.bf16.mxu0 %v3273
    %3432 = vmatpush2.bf16.msra.mxu0 %v3272
    %3433 = vmatprep.subr.bf16.mxu0 %v3269
    %3434 = vmatpush2.bf16.msra.mxu0 %v3268
    %3435 = vmatprep.mubr.bf16.mxu0 %v3041
    %3436 = vmatmul.mubr.bf16.gmra.mxu0 %v3040
    %v3437 = vpop.f32.mrf.mxu0
    %v3438 = vadd.f32 0.0, %v3437
    %v3439 = vpop.f32.mrf.mxu0
    %v3440 = vadd.f32 0.0, %v3439
    %v3441 = vpop.f32.mrf.mxu0
    %v3442 = vpop.f32.mrf.mxu0
    %3443 = vdwg.mxu0
    %v3444 = vadd.f32 %v3036, %v3397
    %v3445 = vadd.f32 %v3037, %v3399
    %v3446 = vadd.f32 %v3038, %v3438
    %v3447 = vadd.f32 %v3039, %v3440
    %v3448 = vmul.f32 %v3444, 0.5
    %v3449 = vmul.f32 %v3445, 0.5
    %v3450 = vmul.f32 %v3446, 0.5
    %v3451 = vtanh.pop %v3448
    %v3452 = vtanh.pop %v3449
    %v3453 = vtanh.pop %v3450
    %v3454 = vmul.f32 %v3451, 0.5
    %v3455 = vmul.f32 %v3452, 0.5
    %v3456 = vmul.f32 %v3453, 0.5
    %v3457 = vadd.f32 %v3454, 0.5
    %v3458 = vadd.f32 %v3455, 0.5
    %v3459 = vadd.f32 %v3456, 0.5
    %v3460 = vtanh.pop %v3447
    %v3461 = vmul.f32 %v3458, %v3031
    %v3462 = vmul.f32 %v3457, %v3460
    %v3463 = vadd.f32 %v3461, %v3462
    %v3464 = vtanh.pop %v3463
    %v3465 = vmul.f32 %v3459, %v3464
    %v3466 = vsel %vm124, %v3465, 0.0
    %v3467 = vsel %vm124, 0.0, %v3465
    %v3468 = vmax.f32 %v3033, %v3465
    %v3469 = vld [vmem:[#allocation2 + $0x40] sm:$0xff]
    %v3470 = vld [vmem:[#allocation2 + $0x48] sm:$0xff]
    %v3471 = vld [vmem:[#allocation2 + $0x50] sm:$0xff]
    %v3472 = vld [vmem:[#allocation2 + $0x58] sm:$0xff]
    %v3473 = vpack.c.bf16 %v3466, %v3466
    %v3474 = vpack.c.bf16 %v3467, %v3467
    %3475 = vmatprep.subr.bf16.mxu0 %v3263
    %3476 = vmatpush1.bf16.msra.mxu0 %v3262
    %3477 = vmatprep.subr.bf16.mxu0 %v3259
    %3478 = vmatpush1.bf16.msra.mxu0 %v3258
    %3479 = vmatprep.subr.bf16.mxu0 %v3255
    %3480 = vmatpush1.bf16.msra.mxu0 %v3254
    %3481 = vmatprep.subr.bf16.mxu0 %v3251
    %3482 = vmatpush1.bf16.msra.mxu0 %v3250
    %3483 = vmatprep.subr.bf16.mxu0 %v3247
    %3484 = vmatpush1.bf16.msra.mxu0 %v3246
    %3485 = vmatprep.subr.bf16.mxu0 %v3243
    %3486 = vmatpush1.bf16.msra.mxu0 %v3242
    %3487 = vmatprep.subr.bf16.mxu0 %v3239
    %3488 = vmatpush1.bf16.msra.mxu0 %v3238
    %3489 = vmatprep.subr.bf16.mxu0 %v3235
    %3490 = vmatpush1.bf16.msra.mxu0 %v3234
    %3491 = vmatprep.subr.bf16.mxu0 %v3295
    %3492 = vmatpush2.bf16.msra.mxu0 %v3294
    %3493 = vmatprep.subr.bf16.mxu0 %v3291
    %3494 = vmatpush2.bf16.msra.mxu0 %v3290
    %3495 = vmatprep.subr.bf16.mxu0 %v3287
    %3496 = vmatpush2.bf16.msra.mxu0 %v3286
    %3497 = vmatprep.subr.bf16.mxu0 %v3283
    %3498 = vmatpush2.bf16.msra.mxu0 %v3282
    %3499 = vmatprep.subr.bf16.mxu0 %v3279
    %3500 = vmatpush2.bf16.msra.mxu0 %v3278
    %3501 = vmatprep.subr.bf16.mxu0 %v3275
    %3502 = vmatpush2.bf16.msra.mxu0 %v3274
    %3503 = vmatprep.subr.bf16.mxu0 %v3271
    %3504 = vmatpush2.bf16.msra.mxu0 %v3270
    %3505 = vmatprep.subr.bf16.mxu0 %v3267
    %3506 = vmatpush2.bf16.msra.mxu0 %v3266
    %3507 = vmatprep.mubr.bf16.mxu0 %v3474
    %3508 = vmatmul.mubr.bf16.gmra.mxu0 %v3473
    %v3509 = vpop.f32.mrf.mxu0
    %v3510 = vadd.f32 0.0, %v3509
    %v3511 = vpop.f32.mrf.mxu0
    %v3512 = vadd.f32 0.0, %v3511
    %v3513 = vpop.f32.mrf.mxu0
    %v3514 = vpop.f32.mrf.mxu0
    %3515 = vdwg.mxu0
    %3516 = vmatprep.subr.bf16.mxu0 %v3265
    %3517 = vmatpush1.bf16.msra.mxu0 %v3264
    %3518 = vmatprep.subr.bf16.mxu0 %v3261
    %3519 = vmatpush1.bf16.msra.mxu0 %v3260
    %3520 = vmatprep.subr.bf16.mxu0 %v3257
    %3521 = vmatpush1.bf16.msra.mxu0 %v3256
    %3522 = vmatprep.subr.bf16.mxu0 %v3253
    %3523 = vmatpush1.bf16.msra.mxu0 %v3252
    %3524 = vmatprep.subr.bf16.mxu0 %v3249
    %3525 = vmatpush1.bf16.msra.mxu0 %v3248
    %3526 = vmatprep.subr.bf16.mxu0 %v3245
    %3527 = vmatpush1.bf16.msra.mxu0 %v3244
    %3528 = vmatprep.subr.bf16.mxu0 %v3241
    %3529 = vmatpush1.bf16.msra.mxu0 %v3240
    %3530 = vmatprep.subr.bf16.mxu0 %v3237
    %3531 = vmatpush1.bf16.msra.mxu0 %v3236
    %3532 = vmatprep.subr.bf16.mxu0 %v3297
    %3533 = vmatpush2.bf16.msra.mxu0 %v3296
    %3534 = vmatprep.subr.bf16.mxu0 %v3293
    %3535 = vmatpush2.bf16.msra.mxu0 %v3292
    %3536 = vmatprep.subr.bf16.mxu0 %v3289
    %3537 = vmatpush2.bf16.msra.mxu0 %v3288
    %3538 = vmatprep.subr.bf16.mxu0 %v3285
    %3539 = vmatpush2.bf16.msra.mxu0 %v3284
    %3540 = vmatprep.subr.bf16.mxu0 %v3281
    %3541 = vmatpush2.bf16.msra.mxu0 %v3280
    %3542 = vmatprep.subr.bf16.mxu0 %v3277
    %3543 = vmatpush2.bf16.msra.mxu0 %v3276
    %3544 = vmatprep.subr.bf16.mxu0 %v3273
    %3545 = vmatpush2.bf16.msra.mxu0 %v3272
    %3546 = vmatprep.subr.bf16.mxu0 %v3269
    %3547 = vmatpush2.bf16.msra.mxu0 %v3268
    %3548 = vmatprep.mubr.bf16.mxu0 %v3474
    %3549 = vmatmul.mubr.bf16.gmra.mxu0 %v3473
    %v3550 = vpop.f32.mrf.mxu0
    %v3551 = vadd.f32 0.0, %v3550
    %v3552 = vpop.f32.mrf.mxu0
    %v3553 = vadd.f32 0.0, %v3552
    %v3554 = vpop.f32.mrf.mxu0
    %v3555 = vpop.f32.mrf.mxu0
    %3556 = vdwg.mxu0
    %v3557 = vadd.f32 %v3469, %v3510
    %v3558 = vadd.f32 %v3470, %v3512
    %v3559 = vadd.f32 %v3471, %v3551
    %v3560 = vadd.f32 %v3472, %v3553
    %v3561 = vmul.f32 %v3557, 0.5
    %v3562 = vmul.f32 %v3558, 0.5
    %v3563 = vmul.f32 %v3559, 0.5
    %v3564 = vtanh.pop %v3561
    %v3565 = vtanh.pop %v3562
    %v3566 = vtanh.pop %v3563
    %v3567 = vmul.f32 %v3564, 0.5
    %v3568 = vmul.f32 %v3565, 0.5
    %v3569 = vmul.f32 %v3566, 0.5
    %v3570 = vadd.f32 %v3567, 0.5
    %v3571 = vadd.f32 %v3568, 0.5
    %v3572 = vadd.f32 %v3569, 0.5
    %v3573 = vtanh.pop %v3560
    %v3574 = vmul.f32 %v3571, %v3463
    %v3575 = vmul.f32 %v3570, %v3573
    %v3576 = vadd.f32 %v3574, %v3575
    %v3577 = vtanh.pop %v3576
    %v3578 = vmul.f32 %v3572, %v3577
    %v3579 = vsel %vm124, %v3578, 0.0
    %v3580 = vsel %vm124, 0.0, %v3578
    %v3581 = vmax.f32 %v3468, %v3578
    %v3582 = vld [vmem:[#allocation2 + $0x60] sm:$0xff]
    %v3583 = vld [vmem:[#allocation2 + $0x68] sm:$0xff]
    %v3584 = vld [vmem:[#allocation2 + $0x70] sm:$0xff]
    %v3585 = vld [vmem:[#allocation2 + $0x78] sm:$0xff]
    %v3586 = vpack.c.bf16 %v3579, %v3579
    %v3587 = vpack.c.bf16 %v3580, %v3580
    %3588 = vmatprep.subr.bf16.mxu0 %v3263
    %3589 = vmatpush1.bf16.msra.mxu0 %v3262
    %3590 = vmatprep.subr.bf16.mxu0 %v3259
    %3591 = vmatpush1.bf16.msra.mxu0 %v3258
    %3592 = vmatprep.subr.bf16.mxu0 %v3255
    %3593 = vmatpush1.bf16.msra.mxu0 %v3254
    %3594 = vmatprep.subr.bf16.mxu0 %v3251
    %3595 = vmatpush1.bf16.msra.mxu0 %v3250
    %3596 = vmatprep.subr.bf16.mxu0 %v3247
    %3597 = vmatpush1.bf16.msra.mxu0 %v3246
    %3598 = vmatprep.subr.bf16.mxu0 %v3243
    %3599 = vmatpush1.bf16.msra.mxu0 %v3242
    %3600 = vmatprep.subr.bf16.mxu0 %v3239
    %3601 = vmatpush1.bf16.msra.mxu0 %v3238
    %3602 = vmatprep.subr.bf16.mxu0 %v3235
    %3603 = vmatpush1.bf16.msra.mxu0 %v3234
    %3604 = vmatprep.subr.bf16.mxu0 %v3295
    %3605 = vmatpush2.bf16.msra.mxu0 %v3294
    %3606 = vmatprep.subr.bf16.mxu0 %v3291
    %3607 = vmatpush2.bf16.msra.mxu0 %v3290
    %3608 = vmatprep.subr.bf16.mxu0 %v3287
    %3609 = vmatpush2.bf16.msra.mxu0 %v3286
    %3610 = vmatprep.subr.bf16.mxu0 %v3283
    %3611 = vmatpush2.bf16.msra.mxu0 %v3282
    %3612 = vmatprep.subr.bf16.mxu0 %v3279
    %3613 = vmatpush2.bf16.msra.mxu0 %v3278
    %3614 = vmatprep.subr.bf16.mxu0 %v3275
    %3615 = vmatpush2.bf16.msra.mxu0 %v3274
    %3616 = vmatprep.subr.bf16.mxu0 %v3271
    %3617 = vmatpush2.bf16.msra.mxu0 %v3270
    %3618 = vmatprep.subr.bf16.mxu0 %v3267
    %3619 = vmatpush2.bf16.msra.mxu0 %v3266
    %3620 = vmatprep.mubr.bf16.mxu0 %v3587
    %3621 = vmatmul.mubr.bf16.gmra.mxu0 %v3586
    %v3622 = vpop.f32.mrf.mxu0
    %v3623 = vadd.f32 0.0, %v3622
    %v3624 = vpop.f32.mrf.mxu0
    %v3625 = vadd.f32 0.0, %v3624
    %v3626 = vpop.f32.mrf.mxu0
    %v3627 = vpop.f32.mrf.mxu0
    %3628 = vdwg.mxu0
    %3629 = vmatprep.subr.bf16.mxu0 %v3265
    %3630 = vmatpush1.bf16.msra.mxu0 %v3264
    %3631 = vmatprep.subr.bf16.mxu0 %v3261
    %3632 = vmatpush1.bf16.msra.mxu0 %v3260
    %3633 = vmatprep.subr.bf16.mxu0 %v3257
    %3634 = vmatpush1.bf16.msra.mxu0 %v3256
    %3635 = vmatprep.subr.bf16.mxu0 %v3253
    %3636 = vmatpush1.bf16.msra.mxu0 %v3252
    %3637 = vmatprep.subr.bf16.mxu0 %v3249
    %3638 = vmatpush1.bf16.msra.mxu0 %v3248
    %3639 = vmatprep.subr.bf16.mxu0 %v3245
    %3640 = vmatpush1.bf16.msra.mxu0 %v3244
    %3641 = vmatprep.subr.bf16.mxu0 %v3241
    %3642 = vmatpush1.bf16.msra.mxu0 %v3240
    %3643 = vmatprep.subr.bf16.mxu0 %v3237
    %3644 = vmatpush1.bf16.msra.mxu0 %v3236
    %3645 = vmatprep.subr.bf16.mxu0 %v3297
    %3646 = vmatpush2.bf16.msra.mxu0 %v3296
    %3647 = vmatprep.subr.bf16.mxu0 %v3293
    %3648 = vmatpush2.bf16.msra.mxu0 %v3292
    %3649 = vmatprep.subr.bf16.mxu0 %v3289
    %3650 = vmatpush2.bf16.msra.mxu0 %v3288
    %3651 = vmatprep.subr.bf16.mxu0 %v3285
    %3652 = vmatpush2.bf16.msra.mxu0 %v3284
    %3653 = vmatprep.subr.bf16.mxu0 %v3281
    %3654 = vmatpush2.bf16.msra.mxu0 %v3280
    %3655 = vmatprep.subr.bf16.mxu0 %v3277
    %3656 = vmatpush2.bf16.msra.mxu0 %v3276
    %3657 = vmatprep.subr.bf16.mxu0 %v3273
    %3658 = vmatpush2.bf16.msra.mxu0 %v3272
    %3659 = vmatprep.subr.bf16.mxu0 %v3269
    %3660 = vmatpush2.bf16.msra.mxu0 %v3268
    %3661 = vmatprep.mubr.bf16.mxu0 %v3587
    %3662 = vmatmul.mubr.bf16.gmra.mxu0 %v3586
    %v3663 = vpop.f32.mrf.mxu0
    %v3664 = vadd.f32 0.0, %v3663
    %v3665 = vpop.f32.mrf.mxu0
    %v3666 = vadd.f32 0.0, %v3665
    %v3667 = vpop.f32.mrf.mxu0
    %v3668 = vpop.f32.mrf.mxu0
    %3669 = vdwg.mxu0
    %v3670 = vadd.f32 %v3582, %v3623
    %v3671 = vadd.f32 %v3583, %v3625
    %v3672 = vadd.f32 %v3584, %v3664
    %v3673 = vadd.f32 %v3585, %v3666
    %v3674 = vmul.f32 %v3670, 0.5
    %v3675 = vmul.f32 %v3671, 0.5
    %v3676 = vmul.f32 %v3672, 0.5
    %v3677 = vtanh.pop %v3674
    %v3678 = vtanh.pop %v3675
    %v3679 = vtanh.pop %v3676
    %v3680 = vmul.f32 %v3677, 0.5
    %v3681 = vmul.f32 %v3678, 0.5
    %v3682 = vmul.f32 %v3679, 0.5
    %v3683 = vadd.f32 %v3680, 0.5
    %v3684 = vadd.f32 %v3681, 0.5
    %v3685 = vadd.f32 %v3682, 0.5
    %v3686 = vtanh.pop %v3673
    %v3687 = vmul.f32 %v3684, %v3576
    %v3688 = vmul.f32 %v3683, %v3686
    %v3689 = vadd.f32 %v3687, %v3688
    %v3690 = vtanh.pop %v3689
    %v3691 = vmul.f32 %v3685, %v3690
    %v3692 = vsel %vm124, %v3691, 0.0
    %v3693 = vsel %vm124, 0.0, %v3691
    %v3694 = vmax.f32 %v3581, %v3691
    %v3695 = vld [vmem:[#allocation2 + $0x80] sm:$0xff]
    %v3696 = vld [vmem:[#allocation2 + $0x88] sm:$0xff]
    %v3697 = vld [vmem:[#allocation2 + $0x90] sm:$0xff]
    %v3698 = vld [vmem:[#allocation2 + $0x98] sm:$0xff]
    %v3699 = vpack.c.bf16 %v3692, %v3692
    %v3700 = vpack.c.bf16 %v3693, %v3693
    %3701 = vmatprep.subr.bf16.mxu0 %v3263
    %3702 = vmatpush1.bf16.msra.mxu0 %v3262
    %3703 = vmatprep.subr.bf16.mxu0 %v3259
    %3704 = vmatpush1.bf16.msra.mxu0 %v3258
    %3705 = vmatprep.subr.bf16.mxu0 %v3255
    %3706 = vmatpush1.bf16.msra.mxu0 %v3254
    %3707 = vmatprep.subr.bf16.mxu0 %v3251
    %3708 = vmatpush1.bf16.msra.mxu0 %v3250
    %3709 = vmatprep.subr.bf16.mxu0 %v3247
    %3710 = vmatpush1.bf16.msra.mxu0 %v3246
    %3711 = vmatprep.subr.bf16.mxu0 %v3243
    %3712 = vmatpush1.bf16.msra.mxu0 %v3242
    %3713 = vmatprep.subr.bf16.mxu0 %v3239
    %3714 = vmatpush1.bf16.msra.mxu0 %v3238
    %3715 = vmatprep.subr.bf16.mxu0 %v3235
    %3716 = vmatpush1.bf16.msra.mxu0 %v3234
    %3717 = vmatprep.subr.bf16.mxu0 %v3295
    %3718 = vmatpush2.bf16.msra.mxu0 %v3294
    %3719 = vmatprep.subr.bf16.mxu0 %v3291
    %3720 = vmatpush2.bf16.msra.mxu0 %v3290
    %3721 = vmatprep.subr.bf16.mxu0 %v3287
    %3722 = vmatpush2.bf16.msra.mxu0 %v3286
    %3723 = vmatprep.subr.bf16.mxu0 %v3283
    %3724 = vmatpush2.bf16.msra.mxu0 %v3282
    %3725 = vmatprep.subr.bf16.mxu0 %v3279
    %3726 = vmatpush2.bf16.msra.mxu0 %v3278
    %3727 = vmatprep.subr.bf16.mxu0 %v3275
    %3728 = vmatpush2.bf16.msra.mxu0 %v3274
    %3729 = vmatprep.subr.bf16.mxu0 %v3271
    %3730 = vmatpush2.bf16.msra.mxu0 %v3270
    %3731 = vmatprep.subr.bf16.mxu0 %v3267
    %3732 = vmatpush2.bf16.msra.mxu0 %v3266
    %3733 = vmatprep.mubr.bf16.mxu0 %v3700
    %3734 = vmatmul.mubr.bf16.gmra.mxu0 %v3699
    %v3735 = vpop.f32.mrf.mxu0
    %v3736 = vadd.f32 0.0, %v3735
    %v3737 = vpop.f32.mrf.mxu0
    %v3738 = vadd.f32 0.0, %v3737
    %v3739 = vpop.f32.mrf.mxu0
    %v3740 = vpop.f32.mrf.mxu0
    %3741 = vdwg.mxu0
    %3742 = vmatprep.subr.bf16.mxu0 %v3265
    %3743 = vmatpush1.bf16.msra.mxu0 %v3264
    %3744 = vmatprep.subr.bf16.mxu0 %v3261
    %3745 = vmatpush1.bf16.msra.mxu0 %v3260
    %3746 = vmatprep.subr.bf16.mxu0 %v3257
    %3747 = vmatpush1.bf16.msra.mxu0 %v3256
    %3748 = vmatprep.subr.bf16.mxu0 %v3253
    %3749 = vmatpush1.bf16.msra.mxu0 %v3252
    %3750 = vmatprep.subr.bf16.mxu0 %v3249
    %3751 = vmatpush1.bf16.msra.mxu0 %v3248
    %3752 = vmatprep.subr.bf16.mxu0 %v3245
    %3753 = vmatpush1.bf16.msra.mxu0 %v3244
    %3754 = vmatprep.subr.bf16.mxu0 %v3241
    %3755 = vmatpush1.bf16.msra.mxu0 %v3240
    %3756 = vmatprep.subr.bf16.mxu0 %v3237
    %3757 = vmatpush1.bf16.msra.mxu0 %v3236
    %3758 = vmatprep.subr.bf16.mxu0 %v3297
    %3759 = vmatpush2.bf16.msra.mxu0 %v3296
    %3760 = vmatprep.subr.bf16.mxu0 %v3293
    %3761 = vmatpush2.bf16.msra.mxu0 %v3292
    %3762 = vmatprep.subr.bf16.mxu0 %v3289
    %3763 = vmatpush2.bf16.msra.mxu0 %v3288
    %3764 = vmatprep.subr.bf16.mxu0 %v3285
    %3765 = vmatpush2.bf16.msra.mxu0 %v3284
    %3766 = vmatprep.subr.bf16.mxu0 %v3281
    %3767 = vmatpush2.bf16.msra.mxu0 %v3280
    %3768 = vmatprep.subr.bf16.mxu0 %v3277
    %3769 = vmatpush2.bf16.msra.mxu0 %v3276
    %3770 = vmatprep.subr.bf16.mxu0 %v3273
    %3771 = vmatpush2.bf16.msra.mxu0 %v3272
    %3772 = vmatprep.subr.bf16.mxu0 %v3269
    %3773 = vmatpush2.bf16.msra.mxu0 %v3268
    %3774 = vmatprep.mubr.bf16.mxu0 %v3700
    %3775 = vmatmul.mubr.bf16.gmra.mxu0 %v3699
    %v3776 = vpop.f32.mrf.mxu0
    %v3777 = vadd.f32 0.0, %v3776
    %v3778 = vpop.f32.mrf.mxu0
    %v3779 = vadd.f32 0.0, %v3778
    %v3780 = vpop.f32.mrf.mxu0
    %v3781 = vpop.f32.mrf.mxu0
    %3782 = vdwg.mxu0
    %v3783 = vadd.f32 %v3695, %v3736
    %v3784 = vadd.f32 %v3696, %v3738
    %v3785 = vadd.f32 %v3697, %v3777
    %v3786 = vadd.f32 %v3698, %v3779
    %v3787 = vmul.f32 %v3783, 0.5
    %v3788 = vmul.f32 %v3784, 0.5
    %v3789 = vmul.f32 %v3785, 0.5
    %v3790 = vtanh.pop %v3787
    %v3791 = vtanh.pop %v3788
    %v3792 = vtanh.pop %v3789
    %v3793 = vmul.f32 %v3790, 0.5
    %v3794 = vmul.f32 %v3791, 0.5
    %v3795 = vmul.f32 %v3792, 0.5
    %v3796 = vadd.f32 %v3793, 0.5
    %v3797 = vadd.f32 %v3794, 0.5
    %v3798 = vadd.f32 %v3795, 0.5
    %v3799 = vtanh.pop %v3786
    %v3800 = vmul.f32 %v3797, %v3689
    %v3801 = vmul.f32 %v3796, %v3799
    %v3802 = vadd.f32 %v3800, %v3801
    %v3803 = vtanh.pop %v3802
    %v3804 = vmul.f32 %v3798, %v3803
    %v3805 = vsel %vm124, %v3804, 0.0
    %v3806 = vsel %vm124, 0.0, %v3804
    %v3807 = vmax.f32 %v3694, %v3804
    %v3808 = vld [vmem:[#allocation2 + $0xa0] sm:$0xff]
    %v3809 = vld [vmem:[#allocation2 + $0xa8] sm:$0xff]
    %v3810 = vld [vmem:[#allocation2 + $0xb0] sm:$0xff]
    %v3811 = vld [vmem:[#allocation2 + $0xb8] sm:$0xff]
    %v3812 = vpack.c.bf16 %v3805, %v3805
    %v3813 = vpack.c.bf16 %v3806, %v3806
    %3814 = vmatprep.subr.bf16.mxu0 %v3263
    %3815 = vmatpush1.bf16.msra.mxu0 %v3262
    %3816 = vmatprep.subr.bf16.mxu0 %v3259
    %3817 = vmatpush1.bf16.msra.mxu0 %v3258
    %3818 = vmatprep.subr.bf16.mxu0 %v3255
    %3819 = vmatpush1.bf16.msra.mxu0 %v3254
    %3820 = vmatprep.subr.bf16.mxu0 %v3251
    %3821 = vmatpush1.bf16.msra.mxu0 %v3250
    %3822 = vmatprep.subr.bf16.mxu0 %v3247
    %3823 = vmatpush1.bf16.msra.mxu0 %v3246
    %3824 = vmatprep.subr.bf16.mxu0 %v3243
    %3825 = vmatpush1.bf16.msra.mxu0 %v3242
    %3826 = vmatprep.subr.bf16.mxu0 %v3239
    %3827 = vmatpush1.bf16.msra.mxu0 %v3238
    %3828 = vmatprep.subr.bf16.mxu0 %v3235
    %3829 = vmatpush1.bf16.msra.mxu0 %v3234
    %3830 = vmatprep.subr.bf16.mxu0 %v3295
    %3831 = vmatpush2.bf16.msra.mxu0 %v3294
    %3832 = vmatprep.subr.bf16.mxu0 %v3291
    %3833 = vmatpush2.bf16.msra.mxu0 %v3290
    %3834 = vmatprep.subr.bf16.mxu0 %v3287
    %3835 = vmatpush2.bf16.msra.mxu0 %v3286
    %3836 = vmatprep.subr.bf16.mxu0 %v3283
    %3837 = vmatpush2.bf16.msra.mxu0 %v3282
    %3838 = vmatprep.subr.bf16.mxu0 %v3279
    %3839 = vmatpush2.bf16.msra.mxu0 %v3278
    %3840 = vmatprep.subr.bf16.mxu0 %v3275
    %3841 = vmatpush2.bf16.msra.mxu0 %v3274
    %3842 = vmatprep.subr.bf16.mxu0 %v3271
    %3843 = vmatpush2.bf16.msra.mxu0 %v3270
    %3844 = vmatprep.subr.bf16.mxu0 %v3267
    %3845 = vmatpush2.bf16.msra.mxu0 %v3266
    %3846 = vmatprep.mubr.bf16.mxu0 %v3813
    %3847 = vmatmul.mubr.bf16.gmra.mxu0 %v3812
    %v3848 = vpop.f32.mrf.mxu0
    %v3849 = vadd.f32 0.0, %v3848
    %v3850 = vpop.f32.mrf.mxu0
    %v3851 = vadd.f32 0.0, %v3850
    %v3852 = vpop.f32.mrf.mxu0
    %v3853 = vpop.f32.mrf.mxu0
    %3854 = vdwg.mxu0
    %3855 = vmatprep.subr.bf16.mxu0 %v3265
    %3856 = vmatpush1.bf16.msra.mxu0 %v3264
    %3857 = vmatprep.subr.bf16.mxu0 %v3261
    %3858 = vmatpush1.bf16.msra.mxu0 %v3260
    %3859 = vmatprep.subr.bf16.mxu0 %v3257
    %3860 = vmatpush1.bf16.msra.mxu0 %v3256
    %3861 = vmatprep.subr.bf16.mxu0 %v3253
    %3862 = vmatpush1.bf16.msra.mxu0 %v3252
    %3863 = vmatprep.subr.bf16.mxu0 %v3249
    %3864 = vmatpush1.bf16.msra.mxu0 %v3248
    %3865 = vmatprep.subr.bf16.mxu0 %v3245
    %3866 = vmatpush1.bf16.msra.mxu0 %v3244
    %3867 = vmatprep.subr.bf16.mxu0 %v3241
    %3868 = vmatpush1.bf16.msra.mxu0 %v3240
    %3869 = vmatprep.subr.bf16.mxu0 %v3237
    %3870 = vmatpush1.bf16.msra.mxu0 %v3236
    %3871 = vmatprep.subr.bf16.mxu0 %v3297
    %3872 = vmatpush2.bf16.msra.mxu0 %v3296
    %3873 = vmatprep.subr.bf16.mxu0 %v3293
    %3874 = vmatpush2.bf16.msra.mxu0 %v3292
    %3875 = vmatprep.subr.bf16.mxu0 %v3289
    %3876 = vmatpush2.bf16.msra.mxu0 %v3288
    %3877 = vmatprep.subr.bf16.mxu0 %v3285
    %3878 = vmatpush2.bf16.msra.mxu0 %v3284
    %3879 = vmatprep.subr.bf16.mxu0 %v3281
    %3880 = vmatpush2.bf16.msra.mxu0 %v3280
    %3881 = vmatprep.subr.bf16.mxu0 %v3277
    %3882 = vmatpush2.bf16.msra.mxu0 %v3276
    %3883 = vmatprep.subr.bf16.mxu0 %v3273
    %3884 = vmatpush2.bf16.msra.mxu0 %v3272
    %3885 = vmatprep.subr.bf16.mxu0 %v3269
    %3886 = vmatpush2.bf16.msra.mxu0 %v3268
    %3887 = vmatprep.mubr.bf16.mxu0 %v3813
    %3888 = vmatmul.mubr.bf16.gmra.mxu0 %v3812
    %v3889 = vpop.f32.mrf.mxu0
    %v3890 = vadd.f32 0.0, %v3889
    %v3891 = vpop.f32.mrf.mxu0
    %v3892 = vadd.f32 0.0, %v3891
    %v3893 = vpop.f32.mrf.mxu0
    %v3894 = vpop.f32.mrf.mxu0
    %3895 = vdwg.mxu0
    %v3896 = vadd.f32 %v3808, %v3849
    %v3897 = vadd.f32 %v3809, %v3851
    %v3898 = vadd.f32 %v3810, %v3890
    %v3899 = vadd.f32 %v3811, %v3892
    %v3900 = vmul.f32 %v3896, 0.5
    %v3901 = vmul.f32 %v3897, 0.5
    %v3902 = vmul.f32 %v3898, 0.5
    %v3903 = vtanh.pop %v3900
    %v3904 = vtanh.pop %v3901
    %v3905 = vtanh.pop %v3902
    %v3906 = vmul.f32 %v3903, 0.5
    %v3907 = vmul.f32 %v3904, 0.5
    %v3908 = vmul.f32 %v3905, 0.5
    %v3909 = vadd.f32 %v3906, 0.5
    %v3910 = vadd.f32 %v3907, 0.5
    %v3911 = vadd.f32 %v3908, 0.5
    %v3912 = vtanh.pop %v3899
    %v3913 = vmul.f32 %v3910, %v3802
    %v3914 = vmul.f32 %v3909, %v3912
    %v3915 = vadd.f32 %v3913, %v3914
    %v3916 = vtanh.pop %v3915
    %v3917 = vmul.f32 %v3911, %v3916
    %v3918 = vsel %vm124, %v3917, 0.0
    %v3919 = vsel %vm124, 0.0, %v3917
    %v3920 = vmax.f32 %v3807, %v3917
    %v3921 = vld [vmem:[#allocation2 + $0xc0] sm:$0xff]
    %v3922 = vld [vmem:[#allocation2 + $0xc8] sm:$0xff]
    %v3923 = vld [vmem:[#allocation2 + $0xd0] sm:$0xff]
    %v3924 = vld [vmem:[#allocation2 + $0xd8] sm:$0xff]
    %v3925 = vpack.c.bf16 %v3918, %v3918
    %v3926 = vpack.c.bf16 %v3919, %v3919
    %3927 = vmatprep.subr.bf16.mxu0 %v3263
    %3928 = vmatpush1.bf16.msra.mxu0 %v3262
    %3929 = vmatprep.subr.bf16.mxu0 %v3259
    %3930 = vmatpush1.bf16.msra.mxu0 %v3258
    %3931 = vmatprep.subr.bf16.mxu0 %v3255
    %3932 = vmatpush1.bf16.msra.mxu0 %v3254
    %3933 = vmatprep.subr.bf16.mxu0 %v3251
    %3934 = vmatpush1.bf16.msra.mxu0 %v3250
    %3935 = vmatprep.subr.bf16.mxu0 %v3247
    %3936 = vmatpush1.bf16.msra.mxu0 %v3246
    %3937 = vmatprep.subr.bf16.mxu0 %v3243
    %3938 = vmatpush1.bf16.msra.mxu0 %v3242
    %3939 = vmatprep.subr.bf16.mxu0 %v3239
    %3940 = vmatpush1.bf16.msra.mxu0 %v3238
    %3941 = vmatprep.subr.bf16.mxu0 %v3235
    %3942 = vmatpush1.bf16.msra.mxu0 %v3234
    %3943 = vmatprep.subr.bf16.mxu0 %v3295
    %3944 = vmatpush2.bf16.msra.mxu0 %v3294
    %3945 = vmatprep.subr.bf16.mxu0 %v3291
    %3946 = vmatpush2.bf16.msra.mxu0 %v3290
    %3947 = vmatprep.subr.bf16.mxu0 %v3287
    %3948 = vmatpush2.bf16.msra.mxu0 %v3286
    %3949 = vmatprep.subr.bf16.mxu0 %v3283
    %3950 = vmatpush2.bf16.msra.mxu0 %v3282
    %3951 = vmatprep.subr.bf16.mxu0 %v3279
    %3952 = vmatpush2.bf16.msra.mxu0 %v3278
    %3953 = vmatprep.subr.bf16.mxu0 %v3275
    %3954 = vmatpush2.bf16.msra.mxu0 %v3274
    %3955 = vmatprep.subr.bf16.mxu0 %v3271
    %3956 = vmatpush2.bf16.msra.mxu0 %v3270
    %3957 = vmatprep.subr.bf16.mxu0 %v3267
    %3958 = vmatpush2.bf16.msra.mxu0 %v3266
    %3959 = vmatprep.mubr.bf16.mxu0 %v3926
    %3960 = vmatmul.mubr.bf16.gmra.mxu0 %v3925
    %v3961 = vpop.f32.mrf.mxu0
    %v3962 = vadd.f32 0.0, %v3961
    %v3963 = vpop.f32.mrf.mxu0
    %v3964 = vadd.f32 0.0, %v3963
    %v3965 = vpop.f32.mrf.mxu0
    %v3966 = vpop.f32.mrf.mxu0
    %3967 = vdwg.mxu0
    %3968 = vmatprep.subr.bf16.mxu0 %v3265
    %3969 = vmatpush1.bf16.msra.mxu0 %v3264
    %3970 = vmatprep.subr.bf16.mxu0 %v3261
    %3971 = vmatpush1.bf16.msra.mxu0 %v3260
    %3972 = vmatprep.subr.bf16.mxu0 %v3257
    %3973 = vmatpush1.bf16.msra.mxu0 %v3256
    %3974 = vmatprep.subr.bf16.mxu0 %v3253
    %3975 = vmatpush1.bf16.msra.mxu0 %v3252
    %3976 = vmatprep.subr.bf16.mxu0 %v3249
    %3977 = vmatpush1.bf16.msra.mxu0 %v3248
    %3978 = vmatprep.subr.bf16.mxu0 %v3245
    %3979 = vmatpush1.bf16.msra.mxu0 %v3244
    %3980 = vmatprep.subr.bf16.mxu0 %v3241
    %3981 = vmatpush1.bf16.msra.mxu0 %v3240
    %3982 = vmatprep.subr.bf16.mxu0 %v3237
    %3983 = vmatpush1.bf16.msra.mxu0 %v3236
    %3984 = vmatprep.subr.bf16.mxu0 %v3297
    %3985 = vmatpush2.bf16.msra.mxu0 %v3296
    %3986 = vmatprep.subr.bf16.mxu0 %v3293
    %3987 = vmatpush2.bf16.msra.mxu0 %v3292
    %3988 = vmatprep.subr.bf16.mxu0 %v3289
    %3989 = vmatpush2.bf16.msra.mxu0 %v3288
    %3990 = vmatprep.subr.bf16.mxu0 %v3285
    %3991 = vmatpush2.bf16.msra.mxu0 %v3284
    %3992 = vmatprep.subr.bf16.mxu0 %v3281
    %3993 = vmatpush2.bf16.msra.mxu0 %v3280
    %3994 = vmatprep.subr.bf16.mxu0 %v3277
    %3995 = vmatpush2.bf16.msra.mxu0 %v3276
    %3996 = vmatprep.subr.bf16.mxu0 %v3273
    %3997 = vmatpush2.bf16.msra.mxu0 %v3272
    %3998 = vmatprep.subr.bf16.mxu0 %v3269
    %3999 = vmatpush2.bf16.msra.mxu0 %v3268
    %4000 = vmatprep.mubr.bf16.mxu0 %v3926
    %4001 = vmatmul.mubr.bf16.gmra.mxu0 %v3925
    %v4002 = vpop.f32.mrf.mxu0
    %v4003 = vadd.f32 0.0, %v4002
    %v4004 = vpop.f32.mrf.mxu0
    %v4005 = vadd.f32 0.0, %v4004
    %v4006 = vpop.f32.mrf.mxu0
    %v4007 = vpop.f32.mrf.mxu0
    %4008 = vdwg.mxu0
    %v4009 = vadd.f32 %v3921, %v3962
    %v4010 = vadd.f32 %v3922, %v3964
    %v4011 = vadd.f32 %v3923, %v4003
    %v4012 = vadd.f32 %v3924, %v4005
    %v4013 = vmul.f32 %v4009, 0.5
    %v4014 = vmul.f32 %v4010, 0.5
    %v4015 = vmul.f32 %v4011, 0.5
    %v4016 = vtanh.pop %v4013
    %v4017 = vtanh.pop %v4014
    %v4018 = vtanh.pop %v4015
    %v4019 = vmul.f32 %v4016, 0.5
    %v4020 = vmul.f32 %v4017, 0.5
    %v4021 = vmul.f32 %v4018, 0.5
    %v4022 = vadd.f32 %v4019, 0.5
    %v4023 = vadd.f32 %v4020, 0.5
    %v4024 = vadd.f32 %v4021, 0.5
    %v4025 = vtanh.pop %v4012
    %v4026 = vmul.f32 %v4023, %v3915
    %v4027 = vmul.f32 %v4022, %v4025
    %v4028 = vadd.f32 %v4026, %v4027
    %v4029 = vtanh.pop %v4028
    %v4030 = vmul.f32 %v4024, %v4029
    %v4031 = vsel %vm124, %v4030, 0.0
    %v4032 = vsel %vm124, 0.0, %v4030
    %v4033 = vmax.f32 %v3920, %v4030
    %v4034 = vld [vmem:[#allocation2 + $0xe0] sm:$0xff]
    %v4035 = vld [vmem:[#allocation2 + $0xe8] sm:$0xff]
    %v4036 = vld [vmem:[#allocation2 + $0xf0] sm:$0xff]
    %v4037 = vld [vmem:[#allocation2 + $0xf8] sm:$0xff]
    %v4038 = vpack.c.bf16 %v4031, %v4031
    %v4039 = vpack.c.bf16 %v4032, %v4032
    %4040 = vmatprep.subr.bf16.mxu0 %v3263
    %4041 = vmatpush1.bf16.msra.mxu0 %v3262
    %4042 = vmatprep.subr.bf16.mxu0 %v3259
    %4043 = vmatpush1.bf16.msra.mxu0 %v3258
    %4044 = vmatprep.subr.bf16.mxu0 %v3255
    %4045 = vmatpush1.bf16.msra.mxu0 %v3254
    %4046 = vmatprep.subr.bf16.mxu0 %v3251
    %4047 = vmatpush1.bf16.msra.mxu0 %v3250
    %4048 = vmatprep.subr.bf16.mxu0 %v3247
    %4049 = vmatpush1.bf16.msra.mxu0 %v3246
    %4050 = vmatprep.subr.bf16.mxu0 %v3243
    %4051 = vmatpush1.bf16.msra.mxu0 %v3242
    %4052 = vmatprep.subr.bf16.mxu0 %v3239
    %4053 = vmatpush1.bf16.msra.mxu0 %v3238
    %4054 = vmatprep.subr.bf16.mxu0 %v3235
    %4055 = vmatpush1.bf16.msra.mxu0 %v3234
    %4056 = vmatprep.subr.bf16.mxu0 %v3295
    %4057 = vmatpush2.bf16.msra.mxu0 %v3294
    %4058 = vmatprep.subr.bf16.mxu0 %v3291
    %4059 = vmatpush2.bf16.msra.mxu0 %v3290
    %4060 = vmatprep.subr.bf16.mxu0 %v3287
    %4061 = vmatpush2.bf16.msra.mxu0 %v3286
    %4062 = vmatprep.subr.bf16.mxu0 %v3283
    %4063 = vmatpush2.bf16.msra.mxu0 %v3282
    %4064 = vmatprep.subr.bf16.mxu0 %v3279
    %4065 = vmatpush2.bf16.msra.mxu0 %v3278
    %4066 = vmatprep.subr.bf16.mxu0 %v3275
    %4067 = vmatpush2.bf16.msra.mxu0 %v3274
    %4068 = vmatprep.subr.bf16.mxu0 %v3271
    %4069 = vmatpush2.bf16.msra.mxu0 %v3270
    %4070 = vmatprep.subr.bf16.mxu0 %v3267
    %4071 = vmatpush2.bf16.msra.mxu0 %v3266
    %4072 = vmatprep.mubr.bf16.mxu0 %v4039
    %4073 = vmatmul.mubr.bf16.gmra.mxu0 %v4038
    %v4074 = vpop.f32.mrf.mxu0
    %v4075 = vadd.f32 0.0, %v4074
    %v4076 = vpop.f32.mrf.mxu0
    %v4077 = vadd.f32 0.0, %v4076
    %v4078 = vpop.f32.mrf.mxu0
    %v4079 = vpop.f32.mrf.mxu0
    %4080 = vdwg.mxu0
    %4081 = vmatprep.subr.bf16.mxu0 %v3265
    %4082 = vmatpush1.bf16.msra.mxu0 %v3264
    %4083 = vmatprep.subr.bf16.mxu0 %v3261
    %4084 = vmatpush1.bf16.msra.mxu0 %v3260
    %4085 = vmatprep.subr.bf16.mxu0 %v3257
    %4086 = vmatpush1.bf16.msra.mxu0 %v3256
    %4087 = vmatprep.subr.bf16.mxu0 %v3253
    %4088 = vmatpush1.bf16.msra.mxu0 %v3252
    %4089 = vmatprep.subr.bf16.mxu0 %v3249
    %4090 = vmatpush1.bf16.msra.mxu0 %v3248
    %4091 = vmatprep.subr.bf16.mxu0 %v3245
    %4092 = vmatpush1.bf16.msra.mxu0 %v3244
    %4093 = vmatprep.subr.bf16.mxu0 %v3241
    %4094 = vmatpush1.bf16.msra.mxu0 %v3240
    %4095 = vmatprep.subr.bf16.mxu0 %v3237
    %4096 = vmatpush1.bf16.msra.mxu0 %v3236
    %4097 = vmatprep.subr.bf16.mxu0 %v3297
    %4098 = vmatpush2.bf16.msra.mxu0 %v3296
    %4099 = vmatprep.subr.bf16.mxu0 %v3293
    %4100 = vmatpush2.bf16.msra.mxu0 %v3292
    %4101 = vmatprep.subr.bf16.mxu0 %v3289
    %4102 = vmatpush2.bf16.msra.mxu0 %v3288
    %4103 = vmatprep.subr.bf16.mxu0 %v3285
    %4104 = vmatpush2.bf16.msra.mxu0 %v3284
    %4105 = vmatprep.subr.bf16.mxu0 %v3281
    %4106 = vmatpush2.bf16.msra.mxu0 %v3280
    %4107 = vmatprep.subr.bf16.mxu0 %v3277
    %4108 = vmatpush2.bf16.msra.mxu0 %v3276
    %4109 = vmatprep.subr.bf16.mxu0 %v3273
    %4110 = vmatpush2.bf16.msra.mxu0 %v3272
    %4111 = vmatprep.subr.bf16.mxu0 %v3269
    %4112 = vmatpush2.bf16.msra.mxu0 %v3268
    %4113 = vmatprep.mubr.bf16.mxu0 %v4039
    %4114 = vmatmul.mubr.bf16.gmra.mxu0 %v4038
    %v4115 = vpop.f32.mrf.mxu0
    %v4116 = vadd.f32 0.0, %v4115
    %v4117 = vpop.f32.mrf.mxu0
    %v4118 = vadd.f32 0.0, %v4117
    %v4119 = vpop.f32.mrf.mxu0
    %v4120 = vpop.f32.mrf.mxu0
    %4121 = vdwg.mxu0
    %v4122 = vadd.f32 %v4034, %v4075
    %v4123 = vadd.f32 %v4035, %v4077
    %v4124 = vadd.f32 %v4036, %v4116
    %v4125 = vadd.f32 %v4037, %v4118
    %v4126 = vmul.f32 %v4122, 0.5
    %v4127 = vmul.f32 %v4123, 0.5
    %v4128 = vmul.f32 %v4124, 0.5
    %v4129 = vtanh.pop %v4126
    %v4130 = vtanh.pop %v4127
    %v4131 = vtanh.pop %v4128
    %v4132 = vmul.f32 %v4129, 0.5
    %v4133 = vmul.f32 %v4130, 0.5
    %v4134 = vmul.f32 %v4131, 0.5
    %v4135 = vadd.f32 %v4132, 0.5
    %v4136 = vadd.f32 %v4133, 0.5
    %v4137 = vadd.f32 %v4134, 0.5
    %v4138 = vtanh.pop %v4125
    %v4139 = vmul.f32 %v4136, %v4028
    %v4140 = vmul.f32 %v4135, %v4138
    %v4141 = vadd.f32 %v4139, %v4140
    %v4142 = vtanh.pop %v4141
    %v4143 = vmul.f32 %v4137, %v4142
    %v4144 = vmax.f32 %v4033, %v4143
    %v4146 = vrot.slane %v4144, 2
    %v4148 = vpack.c.bf16 %v4144, %v4144
    %v4149 = vpack.c.bf16 %v4146, %v4146
    %v4150 = vld [vmem:[#allocation14] sm:$0xf]
    %v4151 = vld [vmem:[#allocation14 + $0x4] sm:$0xf]
    %v4152 = vld [vmem:[#allocation14 + $0x8] sm:$0xf]
    %v4153 = vld [vmem:[#allocation14 + $0xc] sm:$0xf]
    %v4154 = vld [vmem:[#allocation14 + $0x10] sm:$0xf]
    %v4155 = vld [vmem:[#allocation14 + $0x14] sm:$0xf]
    %v4156 = vld [vmem:[#allocation14 + $0x18] sm:$0xf]
    %v4157 = vld [vmem:[#allocation14 + $0x1c] sm:$0xf]
    %v4158 = vld [vmem:[#allocation14 + $0x20] sm:$0xf]
    %v4159 = vld [vmem:[#allocation14 + $0x24] sm:$0xf]
    %v4160 = vld [vmem:[#allocation14 + $0x28] sm:$0xf]
    %v4161 = vld [vmem:[#allocation14 + $0x2c] sm:$0xf]
    %v4162 = vld [vmem:[#allocation14 + $0x30] sm:$0xf]
    %v4163 = vld [vmem:[#allocation14 + $0x34] sm:$0xf]
    %v4164 = vld [vmem:[#allocation14 + $0x38] sm:$0xf]
    %v4165 = vld [vmem:[#allocation14 + $0x3c] sm:$0xf]
    %v4166 = vld [vmem:[#allocation14 + $0x40] sm:$0xf]
    %v4167 = vld [vmem:[#allocation14 + $0x44] sm:$0xf]
    %v4168 = vld [vmem:[#allocation14 + $0x48] sm:$0xf]
    %v4169 = vld [vmem:[#allocation14 + $0x4c] sm:$0xf]
    %v4170 = vld [vmem:[#allocation14 + $0x50] sm:$0xf]
    %v4171 = vld [vmem:[#allocation14 + $0x54] sm:$0xf]
    %v4172 = vld [vmem:[#allocation14 + $0x58] sm:$0xf]
    %v4173 = vld [vmem:[#allocation14 + $0x5c] sm:$0xf]
    %v4174 = vld [vmem:[#allocation14 + $0x60] sm:$0xf]
    %v4175 = vld [vmem:[#allocation14 + $0x64] sm:$0xf]
    %v4176 = vld [vmem:[#allocation14 + $0x68] sm:$0xf]
    %v4177 = vld [vmem:[#allocation14 + $0x6c] sm:$0xf]
    %v4178 = vld [vmem:[#allocation14 + $0x70] sm:$0xf]
    %v4179 = vld [vmem:[#allocation14 + $0x74] sm:$0xf]
    %v4180 = vld [vmem:[#allocation14 + $0x78] sm:$0xf]
    %v4181 = vld [vmem:[#allocation14 + $0x7c] sm:$0xf]
    %v4182 = vld [vmem:[%s8] sm:$0x1]
    %v4184 = vlaneseq
    %v4185 = vshrl.u32 %v4184, 7
    %v4186 = vsub.s32 0, %v4185
    %v4187 = vrot.slane %v4182, %v4186
    %v4221 = vunpack.c.l.b16 %v4150
    %v4222 = vunpack.c.l.b16 %v4151
    %v4223 = vunpack.c.l.b16 %v4152
    %v4224 = vunpack.c.l.b16 %v4153
    %v4225 = vunpack.c.l.b16 %v4154
    %v4226 = vunpack.c.l.b16 %v4155
    %v4227 = vunpack.c.l.b16 %v4156
    %v4228 = vunpack.c.l.b16 %v4157
    %v4229 = vunpack.c.l.b16 %v4158
    %v4230 = vunpack.c.l.b16 %v4159
    %v4231 = vunpack.c.l.b16 %v4160
    %v4232 = vunpack.c.l.b16 %v4161
    %v4233 = vunpack.c.l.b16 %v4162
    %v4234 = vunpack.c.l.b16 %v4163
    %v4235 = vunpack.c.l.b16 %v4164
    %v4236 = vunpack.c.l.b16 %v4165
    %v4237 = vunpack.c.l.b16 %v4166
    %v4238 = vunpack.c.l.b16 %v4167
    %v4239 = vunpack.c.l.b16 %v4168
    %v4240 = vunpack.c.l.b16 %v4169
    %v4241 = vunpack.c.l.b16 %v4170
    %v4242 = vunpack.c.l.b16 %v4171
    %v4243 = vunpack.c.l.b16 %v4172
    %v4244 = vunpack.c.l.b16 %v4173
    %v4245 = vunpack.c.l.b16 %v4174
    %v4246 = vunpack.c.l.b16 %v4175
    %v4247 = vunpack.c.l.b16 %v4176
    %v4248 = vunpack.c.l.b16 %v4177
    %v4249 = vunpack.c.l.b16 %v4178
    %v4250 = vunpack.c.l.b16 %v4179
    %v4251 = vunpack.c.l.b16 %v4180
    %v4252 = vunpack.c.l.b16 %v4181
    %v4253 = vpack.c.b16 %v4222, %v4221
    %v4254 = vpack.c.b16 %v4224, %v4223
    %v4255 = vpack.c.b16 %v4226, %v4225
    %v4256 = vpack.c.b16 %v4228, %v4227
    %v4257 = vpack.c.b16 %v4230, %v4229
    %v4258 = vpack.c.b16 %v4232, %v4231
    %v4259 = vpack.c.b16 %v4234, %v4233
    %v4260 = vpack.c.b16 %v4236, %v4235
    %v4261 = vpack.c.b16 %v4238, %v4237
    %v4262 = vpack.c.b16 %v4240, %v4239
    %v4263 = vpack.c.b16 %v4242, %v4241
    %v4264 = vpack.c.b16 %v4244, %v4243
    %v4265 = vpack.c.b16 %v4246, %v4245
    %v4266 = vpack.c.b16 %v4248, %v4247
    %v4267 = vpack.c.b16 %v4250, %v4249
    %v4268 = vpack.c.b16 %v4252, %v4251
    %4285 = vmatprep.subr.bf16.mxu0 0
    %4286 = vmatpush1.bf16.msra.mxu0 %v4260
    %4287 = vmatprep.subr.bf16.mxu0 0
    %4288 = vmatpush1.bf16.msra.mxu0 %v4259
    %4289 = vmatprep.subr.bf16.mxu0 0
    %4290 = vmatpush1.bf16.msra.mxu0 %v4258
    %4291 = vmatprep.subr.bf16.mxu0 0
    %4292 = vmatpush1.bf16.msra.mxu0 %v4257
    %4293 = vmatprep.subr.bf16.mxu0 0
    %4294 = vmatpush1.bf16.msra.mxu0 %v4256
    %4295 = vmatprep.subr.bf16.mxu0 0
    %4296 = vmatpush1.bf16.msra.mxu0 %v4255
    %4297 = vmatprep.subr.bf16.mxu0 0
    %4298 = vmatpush1.bf16.msra.mxu0 %v4254
    %4299 = vmatprep.subr.bf16.mxu0 0
    %4300 = vmatpush1.bf16.msra.mxu0 %v4253
    %4301 = vmatprep.subr.bf16.mxu0 0
    %4302 = vmatpush2.bf16.msra.mxu0 %v4268
    %4303 = vmatprep.subr.bf16.mxu0 0
    %4304 = vmatpush2.bf16.msra.mxu0 %v4267
    %4305 = vmatprep.subr.bf16.mxu0 0
    %4306 = vmatpush2.bf16.msra.mxu0 %v4266
    %4307 = vmatprep.subr.bf16.mxu0 0
    %4308 = vmatpush2.bf16.msra.mxu0 %v4265
    %4309 = vmatprep.subr.bf16.mxu0 0
    %4310 = vmatpush2.bf16.msra.mxu0 %v4264
    %4311 = vmatprep.subr.bf16.mxu0 0
    %4312 = vmatpush2.bf16.msra.mxu0 %v4263
    %4313 = vmatprep.subr.bf16.mxu0 0
    %4314 = vmatpush2.bf16.msra.mxu0 %v4262
    %4315 = vmatprep.subr.bf16.mxu0 0
    %4316 = vmatpush2.bf16.msra.mxu0 %v4261
    %4317 = vmatprep.mubr.bf16.mxu0 %v4149
    %4318 = vmatmul.mubr.bf16.gmra.mxu0 %v4148
    %v4319 = vpop.f32.mrf.mxu0
    %v4320 = vadd.f32 %v4187, %v4319
    %v4321 = vpop.f32.mrf.mxu0
    %v4322 = vpop.f32.mrf.mxu0
    %v4323 = vpop.f32.mrf.mxu0
    %4324 = vdwg.mxu0
    %v4325 = vmax.f32 %v4320, 0.0
    %v4326 = vpack.c.bf16 %v4325, %v4325
    %v4327 = vld [vmem:[%s9] sm:$0xf]
    %v4328 = vld [vmem:[%s9 + $0x4] sm:$0xf]
    %v4329 = vld [vmem:[%s9 + $0x8] sm:$0xf]
    %v4330 = vld [vmem:[%s9 + $0xc] sm:$0xf]
    %v4331 = vld [vmem:[%s9 + $0x10] sm:$0xf]
    %v4332 = vld [vmem:[%s9 + $0x14] sm:$0xf]
    %v4333 = vld [vmem:[%s9 + $0x18] sm:$0xf]
    %v4334 = vld [vmem:[%s9 + $0x1c] sm:$0xf]
    %v4335 = vld [vmem:[%s9 + $0x20] sm:$0xf]
    %v4336 = vld [vmem:[%s9 + $0x24] sm:$0xf]
    %v4337 = vld [vmem:[%s9 + $0x28] sm:$0xf]
    %v4338 = vld [vmem:[%s9 + $0x2c] sm:$0xf]
    %v4339 = vld [vmem:[%s9 + $0x30] sm:$0xf]
    %v4340 = vld [vmem:[%s9 + $0x34] sm:$0xf]
    %v4341 = vld [vmem:[%s9 + $0x38] sm:$0xf]
    %v4342 = vld [vmem:[%s9 + $0x3c] sm:$0xf]
    %v4343 = vld [vmem:[%s10] sm:$0x1]
    %v4345 = vlaneseq
    %v4346 = vshrl.u32 %v4345, 7
    %v4347 = vsub.s32 0, %v4346
    %v4348 = vrot.slane %v4343, %v4347
    %v4366 = vunpack.c.l.b16 %v4327
    %v4367 = vunpack.c.l.b16 %v4328
    %v4368 = vunpack.c.l.b16 %v4329
    %v4369 = vunpack.c.l.b16 %v4330
    %v4370 = vunpack.c.l.b16 %v4331
    %v4371 = vunpack.c.l.b16 %v4332
    %v4372 = vunpack.c.l.b16 %v4333
    %v4373 = vunpack.c.l.b16 %v4334
    %v4374 = vunpack.c.l.b16 %v4335
    %v4375 = vunpack.c.l.b16 %v4336
    %v4376 = vunpack.c.l.b16 %v4337
    %v4377 = vunpack.c.l.b16 %v4338
    %v4378 = vunpack.c.l.b16 %v4339
    %v4379 = vunpack.c.l.b16 %v4340
    %v4380 = vunpack.c.l.b16 %v4341
    %v4381 = vunpack.c.l.b16 %v4342
    %v4382 = vpack.c.b16 %v4367, %v4366
    %v4383 = vpack.c.b16 %v4369, %v4368
    %v4384 = vpack.c.b16 %v4371, %v4370
    %v4385 = vpack.c.b16 %v4373, %v4372
    %v4386 = vpack.c.b16 %v4375, %v4374
    %v4387 = vpack.c.b16 %v4377, %v4376
    %v4388 = vpack.c.b16 %v4379, %v4378
    %v4389 = vpack.c.b16 %v4381, %v4380
    %4398 = vmatprep.subr.bf16.mxu0 0
    %4399 = vmatpush1.bf16.msra.mxu0 %v4389
    %4400 = vmatprep.subr.bf16.mxu0 0
    %4401 = vmatpush1.bf16.msra.mxu0 %v4388
    %4402 = vmatprep.subr.bf16.mxu0 0
    %4403 = vmatpush1.bf16.msra.mxu0 %v4387
    %4404 = vmatprep.subr.bf16.mxu0 0
    %4405 = vmatpush1.bf16.msra.mxu0 %v4386
    %4406 = vmatprep.subr.bf16.mxu0 0
    %4407 = vmatpush1.bf16.msra.mxu0 %v4385
    %4408 = vmatprep.subr.bf16.mxu0 0
    %4409 = vmatpush1.bf16.msra.mxu0 %v4384
    %4410 = vmatprep.subr.bf16.mxu0 0
    %4411 = vmatpush1.bf16.msra.mxu0 %v4383
    %4412 = vmatprep.subr.bf16.mxu0 0
    %4413 = vmatpush1.bf16.msra.mxu0 %v4382
    %4414 = vmatprep.subr.bf16.mxu0 0
    %4415 = vmatpush2.bf16.msra.mxu0 0
    %4416 = vmatprep.subr.bf16.mxu0 0
    %4417 = vmatpush2.bf16.msra.mxu0 0
    %4418 = vmatprep.subr.bf16.mxu0 0
    %4419 = vmatpush2.bf16.msra.mxu0 0
    %4420 = vmatprep.subr.bf16.mxu0 0
    %4421 = vmatpush2.bf16.msra.mxu0 0
    %4422 = vmatprep.subr.bf16.mxu0 0
    %4423 = vmatpush2.bf16.msra.mxu0 0
    %4424 = vmatprep.subr.bf16.mxu0 0
    %4425 = vmatpush2.bf16.msra.mxu0 0
    %4426 = vmatprep.subr.bf16.mxu0 0
    %4427 = vmatpush2.bf16.msra.mxu0 0
    %4428 = vmatprep.subr.bf16.mxu0 0
    %4429 = vmatpush2.bf16.msra.mxu0 0
    %4430 = vmatprep.mubr.bf16.mxu0 0
    %4431 = vmatmul.mubr.bf16.gmra.mxu0 %v4326
    %v4432 = vpop.f32.mrf.mxu0
    %v4433 = vadd.f32 %v4348, %v4432
    %v4434 = vpop.f32.mrf.mxu0
    %v4435 = vpop.f32.mrf.mxu0
    %v4436 = vpop.f32.mrf.mxu0
    %4437 = vdwg.mxu0
    %vm4438 = vcmask 25600
    %4439 = vst.msk [vmem:[#allocation16] sm:$0x3] %vm4438, %v4433
    // Predicated region
    $region70: #{lstm_model_forward.1} parent=1 // pred_check
      _
    $region71: #{lstm_model_forward.1} parent=1 // pred_check_branch
      %4441 = sbr.rel (0) target = $region73
    $region72: #{lstm_model_forward.1} parent=1 // pred_region
      %s4443 = ssub.s32 32, 32
      %4444 = vsyncadd [#allocation7], %s4443
      %s4446 = sshll.u32 [#allocation16], 4
      %s4447 = int_to_ptr.vmem [resolvable:$true] %s4446
      %4449 = dma.vmem_to_hbm [thread:$0]  %s4447, 32, %s11, [#allocation7]
    $region73: #{lstm_model_forward.1} parent=1 // pred_fallthru
      _
    // Predicated region
    $region74: #{lstm_model_forward.1} parent=1 // pred_check
      _
    $region75: #{lstm_model_forward.1} parent=1 // pred_check_branch
      %4451 = sbr.rel (0) target = $region77
    $region76: #{lstm_model_forward.1} parent=1 // pred_region
      %4452 = dma.done [#allocation7], 32
    $region77: #{lstm_model_forward.1} parent=1 // pred_fallthru
      _
    %4453 = vsyncpa [#allocation6], 1
    %4454 = vsyncpa [#allocation9], 1
    %4455 = vsyncpa [#allocation12], 1
    %4456 = vsyncpa [#allocation15], 1
    %4457 = vsyncpa [#allocation7], 1

</llo_original>
